<compile_context>
chip_gen: v7x
topology: tpu7x:2x2x1
jax: 0.10.0
libtpu: 0.0.40
codegen_flags: <defaults>
</compile_context>

<pallas_src>
import math
from functools import partial

import jax
import jax.numpy as jnp
from jax import lax
from jax.experimental import pallas as pl
from jax.experimental.pallas import tpu as pltpu

_EPS = 1e-5
_INV_SQRT2 = 1.0 / math.sqrt(2.0)
_TM_TARGET = 1024           # target rows (s2d grid positions) per tile


def _round_up(a, b):
    return -(-a // b) * b


# ---------------------------------------------------------------------------
# In-kernel implicit GEMM for the stride-2 3x3 conv rewritten as a stride-1
# 2x2 conv on the space-to-depth input:
#     y[r] = sum_t  a[r + off_t] @ W_t,   off_t in {0, 1, ws, ws+1}.
# The row shift is applied to the f32 dot *outputs* with pltpu.roll; wrapped
# rows only hit positions that are masked (pass 1) / sliced away (pass 2).
# ---------------------------------------------------------------------------
def _conv_taps(a_ref, w_ref, offs):
    a = a_ref[...]                                  # (TM, K) bf16
    tm = a_ref.shape[0]
    cout = w_ref.shape[-1]
    acc = jnp.zeros((tm, cout), jnp.float32)
    for t, off in enumerate(offs):                  # 4 taps, statically unrolled
        yt = jnp.dot(a, w_ref[t], preferred_element_type=jnp.float32)
        if off:
            # result[i] = yt[i + off] for i < tm - off (wrap rows are invalid)
            yt = pltpu.roll(yt, shift=tm - off, axis=0)
        acc = acc + yt
    return acc


def _stats_kernel(a_ref, w_ref, mask_ref, sum_ref, sq_ref, *, offs):
    """Pass 1: per-tile partial per-channel sum / sum-of-squares of the conv
    output (no resident accumulator -> 'parallel' grid, megacore on v7x)."""
    y = _conv_taps(a_ref, w_ref, offs)              # (TM, Cout) f32
    ym = y * mask_ref[...]                          # zero halo / padded rows
    cout = y.shape[-1]
    s = jnp.sum(ym, axis=0, keepdims=True)          # (1, Cout)
    q = jnp.sum(ym * y, axis=0, keepdims=True)      # (1, Cout)
    z = jnp.zeros((7, cout), jnp.float32)
    sum_ref[...] = jnp.concatenate([s, z], axis=0)  # (8, Cout) partial block
    sq_ref[...] = jnp.concatenate([q, z], axis=0)


def _apply_kernel(a_ref, w_ref, scale_ref, shift_ref, o_ref, *, offs):
    """Pass 2: recompute the conv tile, apply folded BN + exact-erf GELU."""
    y = _conv_taps(a_ref, w_ref, offs)              # (TM, Cout) f32
    y = y * scale_ref[...] + shift_ref[...]         # folded BatchNorm
    # TODO(synk): tanh-approx GELU (EUP) would shed the erf VALU polynomial.
    o_ref[...] = (0.5 * y * (1.0 + lax.erf(y * _INV_SQRT2))).astype(o_ref.dtype)


# ---------------------------------------------------------------------------
# Host-side (trace-time) layout helpers.
# ---------------------------------------------------------------------------
def _space_to_depth(x, hs, ws, channels_last):
    """Pad (stride-2/pad-1 conv) and fold 2x2 spatial phases into channels ->
    (N, hs, ws, 4*C), channel order (py, px, c).  For NCHW input the
    NCHW->NHWC change is fused into this single transpose."""
    if channels_last:
        n, h, w, c = x.shape
        xp = jnp.pad(x, ((0, 0), (1, 2 * hs - 1 - h), (1, 2 * ws - 1 - w), (0, 0)))
        xp = xp.reshape(n, hs, 2, ws, 2, c).transpose(0, 1, 3, 2, 4, 5)
    else:
        n, c, h, w = x.shape
        xp = jnp.pad(x, ((0, 0), (0, 0), (1, 2 * hs - 1 - h), (1, 2 * ws - 1 - w)))
        xp = xp.reshape(n, c, hs, 2, ws, 2).transpose(0, 2, 4, 3, 5, 1)
    return xp.reshape(n, hs, ws, -1)


def _tap_weights(w):
    """(Cout, Cin, 3, 3) -> (4, 4*Cin, Cout): tap matrices of the equivalent
    stride-1 2x2 conv on the space-to-depth input (tap t = dy*2 + dx)."""
    cout, cin = w.shape[0], w.shape[1]
    wt = jnp.zeros((2, 2, 2, 2, cin, cout), w.dtype)   # (dy, dx, py, px, ci, co)
    for dy in range(2):
        for dx in range(2):
            for py in range(2):
                for px in range(2):
                    kh, kw = 2 * dy + py, 2 * dx + px
                    if kh <= 2 and kw <= 2:
                        wt = wt.at[dy, dx, py, px].set(w[:, :, kh, kw].T)
    return wt.reshape(4, 4 * cin, cout)


def _conv_bn_gelu_stage(x, w, gamma, beta, *, channels_last, out_dtype):
    """Conv3x3(s2,p1) (bias cancelled by BN) + BatchNorm2d(batch stats) + GELU."""
    if channels_last:
        n, h, w_sp = x.shape[0], x.shape[1], x.shape[2]
    else:
        n, h, w_sp = x.shape[0], x.shape[2], x.shape[3]
    cout, cin = w.shape[0], w.shape[1]
    ho, wo = (h - 1) // 2 + 1, (w_sp - 1) // 2 + 1
    hs, ws = ho + 1, wo + 1
    k = 4 * cin
    rows_img = hs * ws                      # s2d rows per image (incl. halo)
    ms = n * rows_img

    # ---- tiling: whole s2d image grids per tile (mask is tile-invariant) ----
    q8 = 8 // math.gcd(rows_img, 8)                       # keep tm % 8 == 0
    p = max(q8, ((_TM_TARGET // rows_img) // q8) * q8)    # images per tile
    if p >= n:
        nt, tm = 1, _round_up(ms, 8)        # single tile, row-pad to x8
    else:
        nt, tm = _round_up(n, p) // p, p * rows_img
    mg = nt * tm
    assert tm % 8 == 0

    # space-to-depth layout + flatten rows (no 9x im2col in HBM)
    xf = _space_to_depth(x, hs, ws, channels_last).reshape(ms, k)
    xf = jnp.pad(xf, ((0, mg - ms), (0, 0))).astype(jnp.bfloat16)
    w_taps = _tap_weights(w).astype(jnp.bfloat16)         # (4, K, Cout)
    offs = (0, 1, ws, ws + 1)                             # tap row offsets

    # Tile-resident BN validity mask (identical pattern for every tile);
    # constant index_map -> DMA'd once, never re-streamed.  Padded images are
    # all-zero inputs (no bias) and contribute exactly 0 anyway.
    r = jnp.arange(tm)
    rem = r % rows_img
    lim = ms if nt == 1 else tm
    mask = ((r < lim) & (rem // ws < ho) & (rem % ws < wo))
    mask = mask.astype(jnp.float32)[:, None]              # (TM, 1)

    a_spec = pl.BlockSpec((tm, k), lambda i: (i, 0))
    w_spec = pl.BlockSpec((4, k, cout), lambda i: (0, 0, 0))
    m_spec = pl.BlockSpec((tm, 1), lambda i: (0, 0))
    v_spec = pl.BlockSpec((1, cout), lambda i: (0, 0))
    cparams = pltpu.CompilerParams(
        dimension_semantics=("parallel",),
        vmem_limit_bytes=32 * 1024 * 1024,
    )

    # ---- pass 1: BN batch statistics (per-tile partials, megacore-parallel)
    psum, psq = pl.pallas_call(
        partial(_stats_kernel, offs=offs),
        grid=(nt,),
        in_specs=[a_spec, w_spec, m_spec],
        out_specs=[pl.BlockSpec((8, cout), lambda i: (i, 0)),
                   pl.BlockSpec((8, cout), lambda i: (i, 0))],
        out_shape=(jax.ShapeDtypeStruct((nt * 8, cout), jnp.float32),
                   jax.ShapeDtypeStruct((nt * 8, cout), jnp.float32)),
        compiler_params=cparams,
    )(xf, w_taps, mask)

    cnt = jnp.float32(n * ho * wo)
    mean = jnp.sum(psum, axis=0) / cnt
    var = jnp.sum(psq, axis=0) / cnt - mean * mean        # biased (train-mode BN)
    scale = gamma * lax.rsqrt(var + _EPS)                 # conv bias cancels
    shift = beta - mean * scale
    scale = scale.reshape(1, cout).astype(jnp.float32)
    shift = shift.reshape(1, cout).astype(jnp.float32)

    # ---- pass 2: conv + folded BN + GELU (recompute; pipelined, parallel)
    y = pl.pallas_call(
        partial(_apply_kernel, offs=offs),
        grid=(nt,),
        in_specs=[a_spec, w_spec, v_spec, v_spec],
        out_specs=pl.BlockSpec((tm, cout), lambda i: (i, 0)),
        out_shape=jax.ShapeDtypeStruct((mg, cout), out_dtype),
        compiler_params=cparams,
    )(xf, w_taps, scale, shift)

    # drop the halo row/col and padding -> NHWC stage output
    return y[:ms].reshape(n, hs, ws, cout)[:, :ho, :wo, :]


def patch_embed_forward(x_nchw, params):
    """PatchEmbed.forward: stem(x).permute(0, 2, 3, 1) -- returns NHWC."""
    h1 = _conv_bn_gelu_stage(x_nchw, params["w1"], params["g1"], params["bt1"],
                             channels_last=False, out_dtype=jnp.bfloat16)
    h2 = _conv_bn_gelu_stage(h1, params["w2"], params["g2"], params["bt2"],
                             channels_last=True, out_dtype=jnp.float32)
    return h2   # already NHWC == x.permute(0, 2, 3, 1)


# ---------------- pure-JAX reference (for self-check only) ----------------
def _ref_block(x, w, b, g, bt):
    y = lax.conv_general_dilated(
        x, w, window_strides=(2, 2), padding=((1, 1), (1, 1)),
        dimension_numbers=("NCHW", "OIHW", "NCHW"),
    ) + b.reshape(1, -1, 1, 1)
    mean = jnp.mean(y, axis=(0, 2, 3), keepdims=True)
    var = jnp.mean((y - mean) ** 2, axis=(0, 2, 3), keepdims=True)
    y = (y - mean) * lax.rsqrt(var + _EPS)
    y = y * g.reshape(1, -1, 1, 1) + bt.reshape(1, -1, 1, 1)
    return 0.5 * y * (1.0 + lax.erf(y / math.sqrt(2.0)))


def _ref_forward(x, p):
    h = _ref_block(x, p["w1"], p["b1"], p["g1"], p["bt1"])
    h = _ref_block(h, p["w2"], p["b2"], p["g2"], p["bt2"])
    return h.transpose(0, 2, 3, 1)


if __name__ == "__main__":
    in_channels, out_channel = 3, 32          # out_channel // 2 = 16 hidden
    N, H, W = 2, 16, 16

    key = jax.random.PRNGKey(0)
    ks = jax.random.split(key, 9)
    x = jax.random.normal(ks[0], (N, in_channels, H, W), jnp.float32)

    c_mid, c_out = out_channel // 2, out_channel
    params = {
        "w1": jax.random.normal(ks[1], (c_mid, in_channels, 3, 3), jnp.float32)
              * (1.0 / math.sqrt(in_channels * 9)),
        "b1": jax.random.normal(ks[2], (c_mid,), jnp.float32) * 0.1,   # cancelled by BN
        "g1": 1.0 + 0.1 * jax.random.normal(ks[3], (c_mid,), jnp.float32),
        "bt1": 0.1 * jax.random.normal(ks[4], (c_mid,), jnp.float32),
        "w2": jax.random.normal(ks[5], (c_out, c_mid, 3, 3), jnp.float32)
              * (1.0 / math.sqrt(c_mid * 9)),
        "b2": jax.random.normal(ks[6], (c_out,), jnp.float32) * 0.1,   # cancelled by BN
        "g2": 1.0 + 0.1 * jax.random.normal(ks[7], (c_out,), jnp.float32),
        "bt2": 0.1 * jax.random.normal(ks[8], (c_out,), jnp.float32),
    }

    fwd = jax.jit(patch_embed_forward)
    out = jax.block_until_ready(fwd(x, params))
    assert out.shape == (N, H // 4, W // 4, c_out), out.shape

    ref = jax.block_until_ready(_ref_forward(x, params))
    # bf16 MXU inputs + bf16 inter-stage activation -> compare against the
    # f32 reference at a bf16-appropriate tolerance.
    assert jnp.allclose(out, ref, rtol=5e-2, atol=5e-2), float(
        jnp.max(jnp.abs(out - ref))
    )

    print("KERNEL_OK")
</pallas_src>

<mosaic_0001>
module attributes {stable_mosaic.version = 11 : i64} {
  func.func @_apply_kernel(%arg0: i32, %arg1: memref<168x12xbf16, #tpu.memory_space<vmem>>, %arg2: memref<4x12x16xbf16, #tpu.memory_space<vmem>>, %arg3: memref<1x16xf32, #tpu.memory_space<vmem>>, %arg4: memref<1x16xf32, #tpu.memory_space<vmem>>, %arg5: memref<168x16xbf16, #tpu.memory_space<vmem>>) attributes {dimension_semantics = [#tpu.dimension_semantics<parallel>], iteration_bounds = array<i64: 1>, scalar_prefetch = 0 : i64, scratch_operands = 0 : i64, tpu.core_type = #tpu.core_type<tc>, window_params = [{transform_indices = @transform_0, window_bounds = array<i64: 168, 12>}, {pipeline_mode = #tpu.pipeline_mode<synchronous>, transform_indices = @transform_1, window_bounds = array<i64: 4, 12, 16>}, {pipeline_mode = #tpu.pipeline_mode<synchronous>, transform_indices = @transform_2, window_bounds = array<i64: 1, 16>}, {pipeline_mode = #tpu.pipeline_mode<synchronous>, transform_indices = @transform_3, window_bounds = array<i64: 1, 16>}, {transform_indices = @transform_4, window_bounds = array<i64: 168, 16>}]} {
    %c0 = arith.constant 0 : index
    %c0_0 = arith.constant 0 : index
    %0 = vector.load %arg1[%c0, %c0_0] : memref<168x12xbf16, #tpu.memory_space<vmem>>, vector<168x12xbf16>
    %cst = arith.constant 0.000000e+00 : f32
    %1 = vector.broadcast %cst : f32 to vector<168x16xf32>
    %c0_1 = arith.constant 0 : index
    %c0_2 = arith.constant 0 : index
    %c0_3 = arith.constant 0 : index
    %2 = vector.load %arg2[%c0_1, %c0_2, %c0_3] : memref<4x12x16xbf16, #tpu.memory_space<vmem>>, vector<1x12x16xbf16>
    %3 = vector.shape_cast %2 : vector<1x12x16xbf16> to vector<12x16xbf16>
    %cst_4 = arith.constant dense<0.000000e+00> : vector<168x16xf32>
    %4 = tpu.matmul %0, %3, %cst_4 {dimension_numbers = #tpu.dot_dimension_numbers<[1], [0], [0], [1], [0, 0, 1, 1], [], []>} : vector<168x12xbf16>, vector<12x16xbf16>, vector<168x16xf32> -> vector<168x16xf32>
    %5 = arith.addf %1, %4 : vector<168x16xf32>
    %c1 = arith.constant 1 : index
    %c0_5 = arith.constant 0 : index
    %c0_6 = arith.constant 0 : index
    %6 = vector.load %arg2[%c1, %c0_5, %c0_6] : memref<4x12x16xbf16, #tpu.memory_space<vmem>>, vector<1x12x16xbf16>
    %7 = vector.shape_cast %6 : vector<1x12x16xbf16> to vector<12x16xbf16>
    %cst_7 = arith.constant dense<0.000000e+00> : vector<168x16xf32>
    %8 = tpu.matmul %0, %7, %cst_7 {dimension_numbers = #tpu.dot_dimension_numbers<[1], [0], [0], [1], [0, 0, 1, 1], [], []>} : vector<168x12xbf16>, vector<12x16xbf16>, vector<168x16xf32> -> vector<168x16xf32>
    %c167_i32 = arith.constant 167 : i32
    %9 = tpu.dynamic_rotate %8 by %c167_i32 dim 0 : vector<168x16xf32>, i32 -> vector<168x16xf32>
    %10 = arith.addf %5, %9 : vector<168x16xf32>
    %c2 = arith.constant 2 : index
    %c0_8 = arith.constant 0 : index
    %c0_9 = arith.constant 0 : index
    %11 = vector.load %arg2[%c2, %c0_8, %c0_9] : memref<4x12x16xbf16, #tpu.memory_space<vmem>>, vector<1x12x16xbf16>
    %12 = vector.shape_cast %11 : vector<1x12x16xbf16> to vector<12x16xbf16>
    %cst_10 = arith.constant dense<0.000000e+00> : vector<168x16xf32>
    %13 = tpu.matmul %0, %12, %cst_10 {dimension_numbers = #tpu.dot_dimension_numbers<[1], [0], [0], [1], [0, 0, 1, 1], [], []>} : vector<168x12xbf16>, vector<12x16xbf16>, vector<168x16xf32> -> vector<168x16xf32>
    %c159_i32 = arith.constant 159 : i32
    %14 = tpu.dynamic_rotate %13 by %c159_i32 dim 0 : vector<168x16xf32>, i32 -> vector<168x16xf32>
    %15 = arith.addf %10, %14 : vector<168x16xf32>
    %c3 = arith.constant 3 : index
    %c0_11 = arith.constant 0 : index
    %c0_12 = arith.constant 0 : index
    %16 = vector.load %arg2[%c3, %c0_11, %c0_12] : memref<4x12x16xbf16, #tpu.memory_space<vmem>>, vector<1x12x16xbf16>
    %17 = vector.shape_cast %16 : vector<1x12x16xbf16> to vector<12x16xbf16>
    %cst_13 = arith.constant dense<0.000000e+00> : vector<168x16xf32>
    %18 = tpu.matmul %0, %17, %cst_13 {dimension_numbers = #tpu.dot_dimension_numbers<[1], [0], [0], [1], [0, 0, 1, 1], [], []>} : vector<168x12xbf16>, vector<12x16xbf16>, vector<168x16xf32> -> vector<168x16xf32>
    %c158_i32 = arith.constant 158 : i32
    %19 = tpu.dynamic_rotate %18 by %c158_i32 dim 0 : vector<168x16xf32>, i32 -> vector<168x16xf32>
    %20 = arith.addf %15, %19 : vector<168x16xf32>
    %c0_14 = arith.constant 0 : index
    %c0_15 = arith.constant 0 : index
    %21 = vector.load %arg3[%c0_14, %c0_15] : memref<1x16xf32, #tpu.memory_space<vmem>>, vector<1x16xf32>
    %22 = vector.broadcast %21 : vector<1x16xf32> to vector<168x16xf32>
    %23 = arith.mulf %20, %22 : vector<168x16xf32>
    %c0_16 = arith.constant 0 : index
    %c0_17 = arith.constant 0 : index
    %24 = vector.load %arg4[%c0_16, %c0_17] : memref<1x16xf32, #tpu.memory_space<vmem>>, vector<1x16xf32>
    %25 = vector.broadcast %24 : vector<1x16xf32> to vector<168x16xf32>
    %26 = arith.addf %23, %25 : vector<168x16xf32>
    %cst_18 = arith.constant 5.000000e-01 : f32
    %27 = vector.broadcast %cst_18 : f32 to vector<168x16xf32>
    %28 = arith.mulf %27, %26 : vector<168x16xf32>
    %cst_19 = arith.constant 0.707106769 : f32
    %29 = vector.broadcast %cst_19 : f32 to vector<168x16xf32>
    %30 = arith.mulf %26, %29 : vector<168x16xf32>
    %31 = math.erf %30 : vector<168x16xf32>
    %cst_20 = arith.constant 1.000000e+00 : f32
    %32 = vector.broadcast %cst_20 : f32 to vector<168x16xf32>
    %33 = arith.addf %32, %31 : vector<168x16xf32>
    %34 = arith.mulf %28, %33 : vector<168x16xf32>
    %35 = arith.truncf %34 : vector<168x16xf32> to vector<168x16xbf16>
    %c0_21 = arith.constant 0 : index
    %c0_22 = arith.constant 0 : index
    %36 = vector.load %arg5[%c0_21, %c0_22] : memref<168x16xbf16, #tpu.memory_space<vmem>>, vector<168x16xbf16>
    tpu.vector_store %arg5[%c0_21, %c0_22], %35 {strides = array<i32>} : memref<168x16xbf16, #tpu.memory_space<vmem>>, vector<168x16xbf16>,
    return
  }
  func.func @transform_0(%arg0: i32) -> (i32, i32) {
    %c0_i32 = arith.constant 0 : i32
    %c0_i32_0 = arith.constant 0 : i32
    return %arg0, %c0_i32 : i32, i32
  }
  func.func @transform_1(%arg0: i32) -> (i32, i32, i32) {
    %c0_i32 = arith.constant 0 : i32
    %c0_i32_0 = arith.constant 0 : i32
    %c0_i32_1 = arith.constant 0 : i32
    %c0_i32_2 = arith.constant 0 : i32
    return %c0_i32, %c0_i32_0, %c0_i32_1 : i32, i32, i32
  }
  func.func @transform_2(%arg0: i32) -> (i32, i32) {
    %c0_i32 = arith.constant 0 : i32
    %c0_i32_0 = arith.constant 0 : i32
    %c0_i32_1 = arith.constant 0 : i32
    return %c0_i32, %c0_i32_0 : i32, i32
  }
  func.func @transform_3(%arg0: i32) -> (i32, i32) {
    %c0_i32 = arith.constant 0 : i32
    %c0_i32_0 = arith.constant 0 : i32
    %c0_i32_1 = arith.constant 0 : i32
    return %c0_i32, %c0_i32_0 : i32, i32
  }
  func.func @transform_4(%arg0: i32) -> (i32, i32) {
    %c0_i32 = arith.constant 0 : i32
    %c0_i32_0 = arith.constant 0 : i32
    return %arg0, %c0_i32 : i32, i32
  }
}

module attributes {stable_mosaic.version = 11 : i64} {
  func.func @_stats_kernel(%arg0: i32, %arg1: memref<168x12xbf16, #tpu.memory_space<vmem>>, %arg2: memref<4x12x16xbf16, #tpu.memory_space<vmem>>, %arg3: memref<168x1xf32, #tpu.memory_space<vmem>>, %arg4: memref<8x16xf32, #tpu.memory_space<vmem>>, %arg5: memref<8x16xf32, #tpu.memory_space<vmem>>) attributes {dimension_semantics = [#tpu.dimension_semantics<parallel>], iteration_bounds = array<i64: 1>, scalar_prefetch = 0 : i64, scratch_operands = 0 : i64, tpu.core_type = #tpu.core_type<tc>, window_params = [{transform_indices = @transform_0, window_bounds = array<i64: 168, 12>}, {pipeline_mode = #tpu.pipeline_mode<synchronous>, transform_indices = @transform_1, window_bounds = array<i64: 4, 12, 16>}, {pipeline_mode = #tpu.pipeline_mode<synchronous>, transform_indices = @transform_2, window_bounds = array<i64: 168, 1>}, {transform_indices = @transform_3, window_bounds = array<i64: 8, 16>}, {transform_indices = @transform_4, window_bounds = array<i64: 8, 16>}]} {
    %c0 = arith.constant 0 : index
    %c0_0 = arith.constant 0 : index
    %0 = vector.load %arg1[%c0, %c0_0] : memref<168x12xbf16, #tpu.memory_space<vmem>>, vector<168x12xbf16>
    %cst = arith.constant 0.000000e+00 : f32
    %1 = vector.broadcast %cst : f32 to vector<168x16xf32>
    %c0_1 = arith.constant 0 : index
    %c0_2 = arith.constant 0 : index
    %c0_3 = arith.constant 0 : index
    %2 = vector.load %arg2[%c0_1, %c0_2, %c0_3] : memref<4x12x16xbf16, #tpu.memory_space<vmem>>, vector<1x12x16xbf16>
    %3 = vector.shape_cast %2 : vector<1x12x16xbf16> to vector<12x16xbf16>
    %cst_4 = arith.constant dense<0.000000e+00> : vector<168x16xf32>
    %4 = tpu.matmul %0, %3, %cst_4 {dimension_numbers = #tpu.dot_dimension_numbers<[1], [0], [0], [1], [0, 0, 1, 1], [], []>} : vector<168x12xbf16>, vector<12x16xbf16>, vector<168x16xf32> -> vector<168x16xf32>
    %5 = arith.addf %1, %4 : vector<168x16xf32>
    %c1 = arith.constant 1 : index
    %c0_5 = arith.constant 0 : index
    %c0_6 = arith.constant 0 : index
    %6 = vector.load %arg2[%c1, %c0_5, %c0_6] : memref<4x12x16xbf16, #tpu.memory_space<vmem>>, vector<1x12x16xbf16>
    %7 = vector.shape_cast %6 : vector<1x12x16xbf16> to vector<12x16xbf16>
    %cst_7 = arith.constant dense<0.000000e+00> : vector<168x16xf32>
    %8 = tpu.matmul %0, %7, %cst_7 {dimension_numbers = #tpu.dot_dimension_numbers<[1], [0], [0], [1], [0, 0, 1, 1], [], []>} : vector<168x12xbf16>, vector<12x16xbf16>, vector<168x16xf32> -> vector<168x16xf32>
    %c167_i32 = arith.constant 167 : i32
    %9 = tpu.dynamic_rotate %8 by %c167_i32 dim 0 : vector<168x16xf32>, i32 -> vector<168x16xf32>
    %10 = arith.addf %5, %9 : vector<168x16xf32>
    %c2 = arith.constant 2 : index
    %c0_8 = arith.constant 0 : index
    %c0_9 = arith.constant 0 : index
    %11 = vector.load %arg2[%c2, %c0_8, %c0_9] : memref<4x12x16xbf16, #tpu.memory_space<vmem>>, vector<1x12x16xbf16>
    %12 = vector.shape_cast %11 : vector<1x12x16xbf16> to vector<12x16xbf16>
    %cst_10 = arith.constant dense<0.000000e+00> : vector<168x16xf32>
    %13 = tpu.matmul %0, %12, %cst_10 {dimension_numbers = #tpu.dot_dimension_numbers<[1], [0], [0], [1], [0, 0, 1, 1], [], []>} : vector<168x12xbf16>, vector<12x16xbf16>, vector<168x16xf32> -> vector<168x16xf32>
    %c159_i32 = arith.constant 159 : i32
    %14 = tpu.dynamic_rotate %13 by %c159_i32 dim 0 : vector<168x16xf32>, i32 -> vector<168x16xf32>
    %15 = arith.addf %10, %14 : vector<168x16xf32>
    %c3 = arith.constant 3 : index
    %c0_11 = arith.constant 0 : index
    %c0_12 = arith.constant 0 : index
    %16 = vector.load %arg2[%c3, %c0_11, %c0_12] : memref<4x12x16xbf16, #tpu.memory_space<vmem>>, vector<1x12x16xbf16>
    %17 = vector.shape_cast %16 : vector<1x12x16xbf16> to vector<12x16xbf16>
    %cst_13 = arith.constant dense<0.000000e+00> : vector<168x16xf32>
    %18 = tpu.matmul %0, %17, %cst_13 {dimension_numbers = #tpu.dot_dimension_numbers<[1], [0], [0], [1], [0, 0, 1, 1], [], []>} : vector<168x12xbf16>, vector<12x16xbf16>, vector<168x16xf32> -> vector<168x16xf32>
    %c158_i32 = arith.constant 158 : i32
    %19 = tpu.dynamic_rotate %18 by %c158_i32 dim 0 : vector<168x16xf32>, i32 -> vector<168x16xf32>
    %20 = arith.addf %15, %19 : vector<168x16xf32>
    %c0_14 = arith.constant 0 : index
    %c0_15 = arith.constant 0 : index
    %21 = vector.load %arg3[%c0_14, %c0_15] : memref<168x1xf32, #tpu.memory_space<vmem>>, vector<168x1xf32>
    %22 = vector.broadcast %21 : vector<168x1xf32> to vector<168x16xf32>
    %23 = arith.mulf %20, %22 : vector<168x16xf32>
    %cst_16 = arith.constant dense<0.000000e+00> : vector<16xf32>
    %24 = vector.multi_reduction <add>, %23, %cst_16 [0] : vector<168x16xf32> to vector<16xf32>
    %25 = vector.shape_cast %24 : vector<16xf32> to vector<1x16xf32>
    %26 = arith.mulf %23, %20 : vector<168x16xf32>
    %cst_17 = arith.constant dense<0.000000e+00> : vector<16xf32>
    %27 = vector.multi_reduction <add>, %26, %cst_17 [0] : vector<168x16xf32> to vector<16xf32>
    %28 = vector.shape_cast %27 : vector<16xf32> to vector<1x16xf32>
    %cst_18 = arith.constant 0.000000e+00 : f32
    %29 = vector.broadcast %cst_18 : f32 to vector<7x16xf32>
    %30 = tpu.concatenate %25, %29 in 0 : vector<1x16xf32>, vector<7x16xf32> -> vector<8x16xf32>
    %c0_19 = arith.constant 0 : index
    %c0_20 = arith.constant 0 : index
    %31 = vector.load %arg4[%c0_19, %c0_20] : memref<8x16xf32, #tpu.memory_space<vmem>>, vector<8x16xf32>
    tpu.vector_store %arg4[%c0_19, %c0_20], %30 {strides = array<i32>} : memref<8x16xf32, #tpu.memory_space<vmem>>, vector<8x16xf32>,
    %32 = tpu.concatenate %28, %29 in 0 : vector<1x16xf32>, vector<7x16xf32> -> vector<8x16xf32>
    %c0_21 = arith.constant 0 : index
    %c0_22 = arith.constant 0 : index
    %33 = vector.load %arg5[%c0_21, %c0_22] : memref<8x16xf32, #tpu.memory_space<vmem>>, vector<8x16xf32>
    tpu.vector_store %arg5[%c0_21, %c0_22], %32 {strides = array<i32>} : memref<8x16xf32, #tpu.memory_space<vmem>>, vector<8x16xf32>,
    return
  }
  func.func @transform_0(%arg0: i32) -> (i32, i32) {
    %c0_i32 = arith.constant 0 : i32
    %c0_i32_0 = arith.constant 0 : i32
    return %arg0, %c0_i32 : i32, i32
  }
  func.func @transform_1(%arg0: i32) -> (i32, i32, i32) {
    %c0_i32 = arith.constant 0 : i32
    %c0_i32_0 = arith.constant 0 : i32
    %c0_i32_1 = arith.constant 0 : i32
    %c0_i32_2 = arith.constant 0 : i32
    return %c0_i32, %c0_i32_0, %c0_i32_1 : i32, i32, i32
  }
  func.func @transform_2(%arg0: i32) -> (i32, i32) {
    %c0_i32 = arith.constant 0 : i32
    %c0_i32_0 = arith.constant 0 : i32
    %c0_i32_1 = arith.constant 0 : i32
    return %c0_i32, %c0_i32_0 : i32, i32
  }
  func.func @transform_3(%arg0: i32) -> (i32, i32) {
    %c0_i32 = arith.constant 0 : i32
    %c0_i32_0 = arith.constant 0 : i32
    return %arg0, %c0_i32 : i32, i32
  }
  func.func @transform_4(%arg0: i32) -> (i32, i32) {
    %c0_i32 = arith.constant 0 : i32
    %c0_i32_0 = arith.constant 0 : i32
    return %arg0, %c0_i32 : i32, i32
  }
}

module attributes {stable_mosaic.version = 11 : i64} {
  func.func @_stats_kernel(%arg0: i32, %arg1: memref<56x64xbf16, #tpu.memory_space<vmem>>, %arg2: memref<4x64x32xbf16, #tpu.memory_space<vmem>>, %arg3: memref<56x1xf32, #tpu.memory_space<vmem>>, %arg4: memref<8x32xf32, #tpu.memory_space<vmem>>, %arg5: memref<8x32xf32, #tpu.memory_space<vmem>>) attributes {dimension_semantics = [#tpu.dimension_semantics<parallel>], iteration_bounds = array<i64: 1>, scalar_prefetch = 0 : i64, scratch_operands = 0 : i64, tpu.core_type = #tpu.core_type<tc>, window_params = [{transform_indices = @transform_0, window_bounds = array<i64: 56, 64>}, {pipeline_mode = #tpu.pipeline_mode<synchronous>, transform_indices = @transform_1, window_bounds = array<i64: 4, 64, 32>}, {pipeline_mode = #tpu.pipeline_mode<synchronous>, transform_indices = @transform_2, window_bounds = array<i64: 56, 1>}, {transform_indices = @transform_3, window_bounds = array<i64: 8, 32>}, {transform_indices = @transform_4, window_bounds = array<i64: 8, 32>}]} {
    %c0 = arith.constant 0 : index
    %c0_0 = arith.constant 0 : index
    %0 = vector.load %arg1[%c0, %c0_0] : memref<56x64xbf16, #tpu.memory_space<vmem>>, vector<56x64xbf16>
    %cst = arith.constant 0.000000e+00 : f32
    %1 = vector.broadcast %cst : f32 to vector<56x32xf32>
    %c0_1 = arith.constant 0 : index
    %c0_2 = arith.constant 0 : index
    %c0_3 = arith.constant 0 : index
    %2 = vector.load %arg2[%c0_1, %c0_2, %c0_3] : memref<4x64x32xbf16, #tpu.memory_space<vmem>>, vector<1x64x32xbf16>
    %3 = vector.shape_cast %2 : vector<1x64x32xbf16> to vector<64x32xbf16>
    %cst_4 = arith.constant dense<0.000000e+00> : vector<56x32xf32>
    %4 = tpu.matmul %0, %3, %cst_4 {dimension_numbers = #tpu.dot_dimension_numbers<[1], [0], [0], [1], [0, 0, 1, 1], [], []>} : vector<56x64xbf16>, vector<64x32xbf16>, vector<56x32xf32> -> vector<56x32xf32>
    %5 = arith.addf %1, %4 : vector<56x32xf32>
    %c1 = arith.constant 1 : index
    %c0_5 = arith.constant 0 : index
    %c0_6 = arith.constant 0 : index
    %6 = vector.load %arg2[%c1, %c0_5, %c0_6] : memref<4x64x32xbf16, #tpu.memory_space<vmem>>, vector<1x64x32xbf16>
    %7 = vector.shape_cast %6 : vector<1x64x32xbf16> to vector<64x32xbf16>
    %cst_7 = arith.constant dense<0.000000e+00> : vector<56x32xf32>
    %8 = tpu.matmul %0, %7, %cst_7 {dimension_numbers = #tpu.dot_dimension_numbers<[1], [0], [0], [1], [0, 0, 1, 1], [], []>} : vector<56x64xbf16>, vector<64x32xbf16>, vector<56x32xf32> -> vector<56x32xf32>
    %c55_i32 = arith.constant 55 : i32
    %9 = tpu.dynamic_rotate %8 by %c55_i32 dim 0 : vector<56x32xf32>, i32 -> vector<56x32xf32>
    %10 = arith.addf %5, %9 : vector<56x32xf32>
    %c2 = arith.constant 2 : index
    %c0_8 = arith.constant 0 : index
    %c0_9 = arith.constant 0 : index
    %11 = vector.load %arg2[%c2, %c0_8, %c0_9] : memref<4x64x32xbf16, #tpu.memory_space<vmem>>, vector<1x64x32xbf16>
    %12 = vector.shape_cast %11 : vector<1x64x32xbf16> to vector<64x32xbf16>
    %cst_10 = arith.constant dense<0.000000e+00> : vector<56x32xf32>
    %13 = tpu.matmul %0, %12, %cst_10 {dimension_numbers = #tpu.dot_dimension_numbers<[1], [0], [0], [1], [0, 0, 1, 1], [], []>} : vector<56x64xbf16>, vector<64x32xbf16>, vector<56x32xf32> -> vector<56x32xf32>
    %c51_i32 = arith.constant 51 : i32
    %14 = tpu.dynamic_rotate %13 by %c51_i32 dim 0 : vector<56x32xf32>, i32 -> vector<56x32xf32>
    %15 = arith.addf %10, %14 : vector<56x32xf32>
    %c3 = arith.constant 3 : index
    %c0_11 = arith.constant 0 : index
    %c0_12 = arith.constant 0 : index
    %16 = vector.load %arg2[%c3, %c0_11, %c0_12] : memref<4x64x32xbf16, #tpu.memory_space<vmem>>, vector<1x64x32xbf16>
    %17 = vector.shape_cast %16 : vector<1x64x32xbf16> to vector<64x32xbf16>
    %cst_13 = arith.constant dense<0.000000e+00> : vector<56x32xf32>
    %18 = tpu.matmul %0, %17, %cst_13 {dimension_numbers = #tpu.dot_dimension_numbers<[1], [0], [0], [1], [0, 0, 1, 1], [], []>} : vector<56x64xbf16>, vector<64x32xbf16>, vector<56x32xf32> -> vector<56x32xf32>
    %c50_i32 = arith.constant 50 : i32
    %19 = tpu.dynamic_rotate %18 by %c50_i32 dim 0 : vector<56x32xf32>, i32 -> vector<56x32xf32>
    %20 = arith.addf %15, %19 : vector<56x32xf32>
    %c0_14 = arith.constant 0 : index
    %c0_15 = arith.constant 0 : index
    %21 = vector.load %arg3[%c0_14, %c0_15] : memref<56x1xf32, #tpu.memory_space<vmem>>, vector<56x1xf32>
    %22 = vector.broadcast %21 : vector<56x1xf32> to vector<56x32xf32>
    %23 = arith.mulf %20, %22 : vector<56x32xf32>
    %cst_16 = arith.constant dense<0.000000e+00> : vector<32xf32>
    %24 = vector.multi_reduction <add>, %23, %cst_16 [0] : vector<56x32xf32> to vector<32xf32>
    %25 = vector.shape_cast %24 : vector<32xf32> to vector<1x32xf32>
    %26 = arith.mulf %23, %20 : vector<56x32xf32>
    %cst_17 = arith.constant dense<0.000000e+00> : vector<32xf32>
    %27 = vector.multi_reduction <add>, %26, %cst_17 [0] : vector<56x32xf32> to vector<32xf32>
    %28 = vector.shape_cast %27 : vector<32xf32> to vector<1x32xf32>
    %cst_18 = arith.constant 0.000000e+00 : f32
    %29 = vector.broadcast %cst_18 : f32 to vector<7x32xf32>
    %30 = tpu.concatenate %25, %29 in 0 : vector<1x32xf32>, vector<7x32xf32> -> vector<8x32xf32>
    %c0_19 = arith.constant 0 : index
    %c0_20 = arith.constant 0 : index
    %31 = vector.load %arg4[%c0_19, %c0_20] : memref<8x32xf32, #tpu.memory_space<vmem>>, vector<8x32xf32>
    tpu.vector_store %arg4[%c0_19, %c0_20], %30 {strides = array<i32>} : memref<8x32xf32, #tpu.memory_space<vmem>>, vector<8x32xf32>,
    %32 = tpu.concatenate %28, %29 in 0 : vector<1x32xf32>, vector<7x32xf32> -> vector<8x32xf32>
    %c0_21 = arith.constant 0 : index
    %c0_22 = arith.constant 0 : index
    %33 = vector.load %arg5[%c0_21, %c0_22] : memref<8x32xf32, #tpu.memory_space<vmem>>, vector<8x32xf32>
    tpu.vector_store %arg5[%c0_21, %c0_22], %32 {strides = array<i32>} : memref<8x32xf32, #tpu.memory_space<vmem>>, vector<8x32xf32>,
    return
  }
  func.func @transform_0(%arg0: i32) -> (i32, i32) {
    %c0_i32 = arith.constant 0 : i32
    %c0_i32_0 = arith.constant 0 : i32
    return %arg0, %c0_i32 : i32, i32
  }
  func.func @transform_1(%arg0: i32) -> (i32, i32, i32) {
    %c0_i32 = arith.constant 0 : i32
    %c0_i32_0 = arith.constant 0 : i32
    %c0_i32_1 = arith.constant 0 : i32
    %c0_i32_2 = arith.constant 0 : i32
    return %c0_i32, %c0_i32_0, %c0_i32_1 : i32, i32, i32
  }
  func.func @transform_2(%arg0: i32) -> (i32, i32) {
    %c0_i32 = arith.constant 0 : i32
    %c0_i32_0 = arith.constant 0 : i32
    %c0_i32_1 = arith.constant 0 : i32
    return %c0_i32, %c0_i32_0 : i32, i32
  }
  func.func @transform_3(%arg0: i32) -> (i32, i32) {
    %c0_i32 = arith.constant 0 : i32
    %c0_i32_0 = arith.constant 0 : i32
    return %arg0, %c0_i32 : i32, i32
  }
  func.func @transform_4(%arg0: i32) -> (i32, i32) {
    %c0_i32 = arith.constant 0 : i32
    %c0_i32_0 = arith.constant 0 : i32
    return %arg0, %c0_i32 : i32, i32
  }
}

module attributes {stable_mosaic.version = 11 : i64} {
  func.func @_apply_kernel(%arg0: i32, %arg1: memref<56x64xbf16, #tpu.memory_space<vmem>>, %arg2: memref<4x64x32xbf16, #tpu.memory_space<vmem>>, %arg3: memref<1x32xf32, #tpu.memory_space<vmem>>, %arg4: memref<1x32xf32, #tpu.memory_space<vmem>>, %arg5: memref<56x32xf32, #tpu.memory_space<vmem>>) attributes {dimension_semantics = [#tpu.dimension_semantics<parallel>], iteration_bounds = array<i64: 1>, scalar_prefetch = 0 : i64, scratch_operands = 0 : i64, tpu.core_type = #tpu.core_type<tc>, window_params = [{transform_indices = @transform_0, window_bounds = array<i64: 56, 64>}, {pipeline_mode = #tpu.pipeline_mode<synchronous>, transform_indices = @transform_1, window_bounds = array<i64: 4, 64, 32>}, {pipeline_mode = #tpu.pipeline_mode<synchronous>, transform_indices = @transform_2, window_bounds = array<i64: 1, 32>}, {pipeline_mode = #tpu.pipeline_mode<synchronous>, transform_indices = @transform_3, window_bounds = array<i64: 1, 32>}, {transform_indices = @transform_4, window_bounds = array<i64: 56, 32>}]} {
    %c0 = arith.constant 0 : index
    %c0_0 = arith.constant 0 : index
    %0 = vector.load %arg1[%c0, %c0_0] : memref<56x64xbf16, #tpu.memory_space<vmem>>, vector<56x64xbf16>
    %cst = arith.constant 0.000000e+00 : f32
    %1 = vector.broadcast %cst : f32 to vector<56x32xf32>
    %c0_1 = arith.constant 0 : index
    %c0_2 = arith.constant 0 : index
    %c0_3 = arith.constant 0 : index
    %2 = vector.load %arg2[%c0_1, %c0_2, %c0_3] : memref<4x64x32xbf16, #tpu.memory_space<vmem>>, vector<1x64x32xbf16>
    %3 = vector.shape_cast %2 : vector<1x64x32xbf16> to vector<64x32xbf16>
    %cst_4 = arith.constant dense<0.000000e+00> : vector<56x32xf32>
    %4 = tpu.matmul %0, %3, %cst_4 {dimension_numbers = #tpu.dot_dimension_numbers<[1], [0], [0], [1], [0, 0, 1, 1], [], []>} : vector<56x64xbf16>, vector<64x32xbf16>, vector<56x32xf32> -> vector<56x32xf32>
    %5 = arith.addf %1, %4 : vector<56x32xf32>
    %c1 = arith.constant 1 : index
    %c0_5 = arith.constant 0 : index
    %c0_6 = arith.constant 0 : index
    %6 = vector.load %arg2[%c1, %c0_5, %c0_6] : memref<4x64x32xbf16, #tpu.memory_space<vmem>>, vector<1x64x32xbf16>
    %7 = vector.shape_cast %6 : vector<1x64x32xbf16> to vector<64x32xbf16>
    %cst_7 = arith.constant dense<0.000000e+00> : vector<56x32xf32>
    %8 = tpu.matmul %0, %7, %cst_7 {dimension_numbers = #tpu.dot_dimension_numbers<[1], [0], [0], [1], [0, 0, 1, 1], [], []>} : vector<56x64xbf16>, vector<64x32xbf16>, vector<56x32xf32> -> vector<56x32xf32>
    %c55_i32 = arith.constant 55 : i32
    %9 = tpu.dynamic_rotate %8 by %c55_i32 dim 0 : vector<56x32xf32>, i32 -> vector<56x32xf32>
    %10 = arith.addf %5, %9 : vector<56x32xf32>
    %c2 = arith.constant 2 : index
    %c0_8 = arith.constant 0 : index
    %c0_9 = arith.constant 0 : index
    %11 = vector.load %arg2[%c2, %c0_8, %c0_9] : memref<4x64x32xbf16, #tpu.memory_space<vmem>>, vector<1x64x32xbf16>
    %12 = vector.shape_cast %11 : vector<1x64x32xbf16> to vector<64x32xbf16>
    %cst_10 = arith.constant dense<0.000000e+00> : vector<56x32xf32>
    %13 = tpu.matmul %0, %12, %cst_10 {dimension_numbers = #tpu.dot_dimension_numbers<[1], [0], [0], [1], [0, 0, 1, 1], [], []>} : vector<56x64xbf16>, vector<64x32xbf16>, vector<56x32xf32> -> vector<56x32xf32>
    %c51_i32 = arith.constant 51 : i32
    %14 = tpu.dynamic_rotate %13 by %c51_i32 dim 0 : vector<56x32xf32>, i32 -> vector<56x32xf32>
    %15 = arith.addf %10, %14 : vector<56x32xf32>
    %c3 = arith.constant 3 : index
    %c0_11 = arith.constant 0 : index
    %c0_12 = arith.constant 0 : index
    %16 = vector.load %arg2[%c3, %c0_11, %c0_12] : memref<4x64x32xbf16, #tpu.memory_space<vmem>>, vector<1x64x32xbf16>
    %17 = vector.shape_cast %16 : vector<1x64x32xbf16> to vector<64x32xbf16>
    %cst_13 = arith.constant dense<0.000000e+00> : vector<56x32xf32>
    %18 = tpu.matmul %0, %17, %cst_13 {dimension_numbers = #tpu.dot_dimension_numbers<[1], [0], [0], [1], [0, 0, 1, 1], [], []>} : vector<56x64xbf16>, vector<64x32xbf16>, vector<56x32xf32> -> vector<56x32xf32>
    %c50_i32 = arith.constant 50 : i32
    %19 = tpu.dynamic_rotate %18 by %c50_i32 dim 0 : vector<56x32xf32>, i32 -> vector<56x32xf32>
    %20 = arith.addf %15, %19 : vector<56x32xf32>
    %c0_14 = arith.constant 0 : index
    %c0_15 = arith.constant 0 : index
    %21 = vector.load %arg3[%c0_14, %c0_15] : memref<1x32xf32, #tpu.memory_space<vmem>>, vector<1x32xf32>
    %22 = vector.broadcast %21 : vector<1x32xf32> to vector<56x32xf32>
    %23 = arith.mulf %20, %22 : vector<56x32xf32>
    %c0_16 = arith.constant 0 : index
    %c0_17 = arith.constant 0 : index
    %24 = vector.load %arg4[%c0_16, %c0_17] : memref<1x32xf32, #tpu.memory_space<vmem>>, vector<1x32xf32>
    %25 = vector.broadcast %24 : vector<1x32xf32> to vector<56x32xf32>
    %26 = arith.addf %23, %25 : vector<56x32xf32>
    %cst_18 = arith.constant 5.000000e-01 : f32
    %27 = vector.broadcast %cst_18 : f32 to vector<56x32xf32>
    %28 = arith.mulf %27, %26 : vector<56x32xf32>
    %cst_19 = arith.constant 0.707106769 : f32
    %29 = vector.broadcast %cst_19 : f32 to vector<56x32xf32>
    %30 = arith.mulf %26, %29 : vector<56x32xf32>
    %31 = math.erf %30 : vector<56x32xf32>
    %cst_20 = arith.constant 1.000000e+00 : f32
    %32 = vector.broadcast %cst_20 : f32 to vector<56x32xf32>
    %33 = arith.addf %32, %31 : vector<56x32xf32>
    %34 = arith.mulf %28, %33 : vector<56x32xf32>
    %c0_21 = arith.constant 0 : index
    %c0_22 = arith.constant 0 : index
    %35 = vector.load %arg5[%c0_21, %c0_22] : memref<56x32xf32, #tpu.memory_space<vmem>>, vector<56x32xf32>
    tpu.vector_store %arg5[%c0_21, %c0_22], %34 {strides = array<i32>} : memref<56x32xf32, #tpu.memory_space<vmem>>, vector<56x32xf32>,
    return
  }
  func.func @transform_0(%arg0: i32) -> (i32, i32) {
    %c0_i32 = arith.constant 0 : i32
    %c0_i32_0 = arith.constant 0 : i32
    return %arg0, %c0_i32 : i32, i32
  }
  func.func @transform_1(%arg0: i32) -> (i32, i32, i32) {
    %c0_i32 = arith.constant 0 : i32
    %c0_i32_0 = arith.constant 0 : i32
    %c0_i32_1 = arith.constant 0 : i32
    %c0_i32_2 = arith.constant 0 : i32
    return %c0_i32, %c0_i32_0, %c0_i32_1 : i32, i32, i32
  }
  func.func @transform_2(%arg0: i32) -> (i32, i32) {
    %c0_i32 = arith.constant 0 : i32
    %c0_i32_0 = arith.constant 0 : i32
    %c0_i32_1 = arith.constant 0 : i32
    return %c0_i32, %c0_i32_0 : i32, i32
  }
  func.func @transform_3(%arg0: i32) -> (i32, i32) {
    %c0_i32 = arith.constant 0 : i32
    %c0_i32_0 = arith.constant 0 : i32
    %c0_i32_1 = arith.constant 0 : i32
    return %c0_i32, %c0_i32_0 : i32, i32
  }
  func.func @transform_4(%arg0: i32) -> (i32, i32) {
    %c0_i32 = arith.constant 0 : i32
    %c0_i32_0 = arith.constant 0 : i32
    return %arg0, %c0_i32 : i32, i32
  }
}

</mosaic_0001>

<llo_original>
// kernel: patch_embed_forward.5
$region0: #{patch_embed_forward.5}
  #allocation0 [shape = 'u32[]', space=smem, size = 0x4, offset = 0x4, fixed_abs, tag = 'smem constant byte address 0x4 - core index']
  #allocation1 [shape = 'u32[144,128]{1,0:T(1,128)}', space=vmem, size = 0x12000, scoped, tag = 'internal scratch']
  %s0 = inlined_call_operand.vmem [shape: bf16[168,12], index: 0, kind: input, shape index: {}]
  %s1 = inlined_call_operand.vmem [shape: bf16[4,12,16], index: 1, kind: input, shape index: {}]
  %s2 = inlined_call_operand.vmem [shape: f32[1,16], index: 2, kind: input, shape index: {}]
  %s3 = inlined_call_operand.vmem [shape: f32[1,16], index: 3, kind: input, shape index: {}]
  %s4 = inlined_call_operand.vmem [shape: bf16[168,16], index: 4, kind: output, shape index: {}]
  %s5 = sld [smem:[#allocation0]]
  $region26: #{patch_embed_forward.5} parent=0
    _
  %s7 = ssub.s32 1, %s5
  %s8 = scalar_select 0, %s7, %s5
  // Predicated region
  $region2: #{patch_embed_forward.5} parent=0 // pred_check
    _
  $region3: #{patch_embed_forward.5} parent=0 // pred_check_branch
    %10 = sbr.rel (0) target = $region5
  $region4: #{patch_embed_forward.5} parent=0 // pred_region
    _
  $region5: #{patch_embed_forward.5} parent=0 // pred_fallthru
    _
  // Predicated region
  $region6: #{patch_embed_forward.5} parent=0 // pred_check
    _
  $region7: #{patch_embed_forward.5} parent=0 // pred_check_branch
    %12 = sbr.rel (0) target = $region9
  $region8: #{patch_embed_forward.5} parent=0 // pred_region
    _
  $region9: #{patch_embed_forward.5} parent=0 // pred_fallthru
    _
  // Predicated region
  $region10: #{patch_embed_forward.5} parent=0 // pred_check
    _
  $region11: #{patch_embed_forward.5} parent=0 // pred_check_branch
    %14 = sbr.rel (0) target = $region13
  $region12: #{patch_embed_forward.5} parent=0 // pred_region
    _
  $region13: #{patch_embed_forward.5} parent=0 // pred_fallthru
    _
  // Predicated region
  $region14: #{patch_embed_forward.5} parent=0 // pred_check
    _
  $region15: #{patch_embed_forward.5} parent=0 // pred_check_branch
    %16 = sbr.rel (0) target = $region17
  $region16: #{patch_embed_forward.5} parent=0 // pred_region
    _
  $region17: #{patch_embed_forward.5} parent=0 // pred_fallthru
    _
  %v18 = vld [vmem:[%s0] sm:$0xf]
  %v19 = vld [vmem:[%s0 + $0x4] sm:$0xf]
  %v20 = vld [vmem:[%s0 + $0x8] sm:$0xf]
  %v21 = vld [vmem:[%s0 + $0xc] sm:$0xf]
  %v22 = vld [vmem:[%s0 + $0x10] sm:$0xf]
  %v23 = vld [vmem:[%s0 + $0x14] sm:$0xf]
  %v24 = vld [vmem:[%s0 + $0x18] sm:$0xf]
  %v25 = vld [vmem:[%s0 + $0x1c] sm:$0xf]
  %v26 = vld [vmem:[%s0 + $0x20] sm:$0xf]
  %v27 = vld [vmem:[%s0 + $0x24] sm:$0xf]
  %v28 = vld [vmem:[%s0 + $0x28] sm:$0xf]
  %v29 = vld [vmem:[%s0 + $0x2c] sm:$0xf]
  %v30 = vld [vmem:[%s0 + $0x30] sm:$0xf]
  %v31 = vld [vmem:[%s0 + $0x34] sm:$0xf]
  %v32 = vld [vmem:[%s0 + $0x38] sm:$0xf]
  %v33 = vld [vmem:[%s0 + $0x3c] sm:$0xf]
  %v34 = vld [vmem:[%s0 + $0x40] sm:$0xf]
  %v35 = vld [vmem:[%s0 + $0x44] sm:$0xf]
  %v36 = vld [vmem:[%s0 + $0x48] sm:$0xf]
  %v37 = vld [vmem:[%s0 + $0x4c] sm:$0xf]
  %v38 = vld [vmem:[%s0 + $0x50] sm:$0xf]
  %v39 = vld [vmem:[%s1] sm:$0xf]
  %v40 = vld [vmem:[%s1 + $0x4] sm:$0x3]
  %s41 = scalar_lea.vmem %s1, 8
  %v42 = vld [vmem:[%s41] sm:$0xf]
  %v43 = vld [vmem:[%s41 + $0x4] sm:$0x3]
  %v65 = vunpack.c.l.b16 %v18
  %v66 = vunpack.c.l.b16 %v19
  %v67 = vunpack.c.l.b16 %v20
  %v68 = vunpack.c.l.b16 %v21
  %v69 = vunpack.c.l.b16 %v22
  %v70 = vunpack.c.l.b16 %v23
  %v71 = vunpack.c.l.b16 %v24
  %v72 = vunpack.c.l.b16 %v25
  %v73 = vunpack.c.l.b16 %v26
  %v74 = vunpack.c.l.b16 %v27
  %v75 = vunpack.c.l.b16 %v28
  %v76 = vunpack.c.l.b16 %v29
  %v77 = vunpack.c.l.b16 %v30
  %v78 = vunpack.c.l.b16 %v31
  %v79 = vunpack.c.l.b16 %v32
  %v80 = vunpack.c.l.b16 %v33
  %v81 = vunpack.c.l.b16 %v34
  %v82 = vunpack.c.l.b16 %v35
  %v83 = vunpack.c.l.b16 %v36
  %v84 = vunpack.c.l.b16 %v37
  %v85 = vunpack.c.l.b16 %v38
  %v86 = vpack.c.b16 %v66, %v65
  %v87 = vpack.c.b16 %v68, %v67
  %v88 = vpack.c.b16 %v70, %v69
  %v89 = vpack.c.b16 %v72, %v71
  %v90 = vpack.c.b16 %v74, %v73
  %v91 = vpack.c.b16 %v76, %v75
  %v92 = vpack.c.b16 %v78, %v77
  %v93 = vpack.c.b16 %v80, %v79
  %v94 = vpack.c.b16 %v82, %v81
  %v95 = vpack.c.b16 %v84, %v83
  %v96 = vpack.c.b16 %v85, %v85
  %v99 = vunpack.c.l.b16 %v42
  %v100 = vunpack.c.l.b16 %v43
  %v101 = vpack.c.b16 %v100, %v99
  %vm102 = vcmask 97280
  %v104 = vsel %vm102, %v86, 0
  %v107 = vsel %vm102, %v87, 0
  %v110 = vsel %vm102, %v88, 0
  %v113 = vsel %vm102, %v89, 0
  %v116 = vsel %vm102, %v90, 0
  %v119 = vsel %vm102, %v91, 0
  %v122 = vsel %vm102, %v92, 0
  %v125 = vsel %vm102, %v93, 0
  %v128 = vsel %vm102, %v94, 0
  %v131 = vsel %vm102, %v95, 0
  %v134 = vsel %vm102, %v96, 0
  %vm136 = vcmask 1045504
  %v138 = vsel %vm136, %v101, 0
  %140 = vmatprep.subr.bf16.mxu0 0
  %141 = vmatpush1.bf16.msra.mxu0 %v138
  %142 = vmatprep.subr.bf16.mxu0 0
  %143 = vmatpush1.bf16.msra.mxu0 0
  %144 = vmatprep.subr.bf16.mxu0 0
  %145 = vmatpush1.bf16.msra.mxu0 0
  %146 = vmatprep.subr.bf16.mxu0 0
  %147 = vmatpush1.bf16.msra.mxu0 0
  %148 = vmatprep.subr.bf16.mxu0 0
  %149 = vmatpush1.bf16.msra.mxu0 0
  %150 = vmatprep.subr.bf16.mxu0 0
  %151 = vmatpush1.bf16.msra.mxu0 0
  %152 = vmatprep.subr.bf16.mxu0 0
  %153 = vmatpush1.bf16.msra.mxu0 0
  %154 = vmatprep.subr.bf16.mxu0 0
  %155 = vmatpush1.bf16.msra.mxu0 0
  %156 = vmatprep.subr.bf16.mxu0 0
  %157 = vmatpush1.bf16.msra.mxu0 0
  %158 = vmatprep.subr.bf16.mxu0 0
  %159 = vmatpush1.bf16.msra.mxu0 0
  %160 = vmatprep.subr.bf16.mxu0 0
  %161 = vmatpush1.bf16.msra.mxu0 0
  %162 = vmatprep.subr.bf16.mxu0 0
  %163 = vmatpush1.bf16.msra.mxu0 0
  %164 = vmatprep.subr.bf16.mxu0 0
  %165 = vmatpush1.bf16.msra.mxu0 0
  %166 = vmatprep.subr.bf16.mxu0 0
  %167 = vmatpush1.bf16.msra.mxu0 0
  %168 = vmatprep.subr.bf16.mxu0 0
  %169 = vmatpush1.bf16.msra.mxu0 0
  %170 = vmatprep.subr.bf16.mxu0 0
  %171 = vmatpush1.bf16.msra.mxu0 0
  %172 = vmatprep.mubr.bf16.mxu0 0
  %173 = vmatmul.mubr.bf16.gmra.mrb[0].mxu0 %v104
  %v174 = vpop.f32.mrb[0].mxu0
  %v175 = vadd.f32 0.0, %v174
  %v176 = vpop.f32.mrb[0].mxu0
  %v177 = vpop.f32.mrb[0].mxu0
  %v178 = vadd.f32 0.0, %v177
  %v179 = vpop.f32.mrb[0].mxu0
  %180 = vmatprep.mubr.bf16.mxu0 0
  %181 = vmatmul.mubr.bf16.gmra.mrb[0].mxu0 %v107
  %v182 = vpop.f32.mrb[0].mxu0
  %v183 = vadd.f32 0.0, %v182
  %v184 = vpop.f32.mrb[0].mxu0
  %v185 = vpop.f32.mrb[0].mxu0
  %v186 = vadd.f32 0.0, %v185
  %v187 = vpop.f32.mrb[0].mxu0
  %188 = vmatprep.mubr.bf16.mxu0 0
  %189 = vmatmul.mubr.bf16.gmra.mrb[0].mxu0 %v110
  %v190 = vpop.f32.mrb[0].mxu0
  %v191 = vadd.f32 0.0, %v190
  %v192 = vpop.f32.mrb[0].mxu0
  %v193 = vpop.f32.mrb[0].mxu0
  %v194 = vadd.f32 0.0, %v193
  %v195 = vpop.f32.mrb[0].mxu0
  %196 = vmatprep.mubr.bf16.mxu0 0
  %197 = vmatmul.mubr.bf16.gmra.mrb[0].mxu0 %v113
  %v198 = vpop.f32.mrb[0].mxu0
  %v199 = vadd.f32 0.0, %v198
  %v200 = vpop.f32.mrb[0].mxu0
  %v201 = vpop.f32.mrb[0].mxu0
  %v202 = vadd.f32 0.0, %v201
  %v203 = vpop.f32.mrb[0].mxu0
  %204 = vmatprep.mubr.bf16.mxu0 0
  %205 = vmatmul.mubr.bf16.gmra.mrb[0].mxu0 %v116
  %v206 = vpop.f32.mrb[0].mxu0
  %v207 = vadd.f32 0.0, %v206
  %v208 = vpop.f32.mrb[0].mxu0
  %v209 = vpop.f32.mrb[0].mxu0
  %v210 = vadd.f32 0.0, %v209
  %v211 = vpop.f32.mrb[0].mxu0
  %212 = vmatprep.mubr.bf16.mxu0 0
  %213 = vmatmul.mubr.bf16.gmra.mrb[0].mxu0 %v119
  %v214 = vpop.f32.mrb[0].mxu0
  %v215 = vadd.f32 0.0, %v214
  %v216 = vpop.f32.mrb[0].mxu0
  %v217 = vpop.f32.mrb[0].mxu0
  %v218 = vadd.f32 0.0, %v217
  %v219 = vpop.f32.mrb[0].mxu0
  %220 = vmatprep.mubr.bf16.mxu0 0
  %221 = vmatmul.mubr.bf16.gmra.mrb[0].mxu0 %v122
  %v222 = vpop.f32.mrb[0].mxu0
  %v223 = vadd.f32 0.0, %v222
  %v224 = vpop.f32.mrb[0].mxu0
  %v225 = vpop.f32.mrb[0].mxu0
  %v226 = vadd.f32 0.0, %v225
  %v227 = vpop.f32.mrb[0].mxu0
  %228 = vmatprep.mubr.bf16.mxu0 0
  %229 = vmatmul.mubr.bf16.gmra.mrb[0].mxu0 %v125
  %v230 = vpop.f32.mrb[0].mxu0
  %v231 = vadd.f32 0.0, %v230
  %v232 = vpop.f32.mrb[0].mxu0
  %v233 = vpop.f32.mrb[0].mxu0
  %v234 = vadd.f32 0.0, %v233
  %v235 = vpop.f32.mrb[0].mxu0
  %236 = vmatprep.mubr.bf16.mxu0 0
  %237 = vmatmul.mubr.bf16.gmra.mrb[0].mxu0 %v128
  %v238 = vpop.f32.mrb[0].mxu0
  %v239 = vadd.f32 0.0, %v238
  %v240 = vpop.f32.mrb[0].mxu0
  %v241 = vpop.f32.mrb[0].mxu0
  %v242 = vadd.f32 0.0, %v241
  %v243 = vpop.f32.mrb[0].mxu0
  %244 = vmatprep.mubr.bf16.mxu0 0
  %245 = vmatmul.mubr.bf16.gmra.mrb[0].mxu0 %v131
  %v246 = vpop.f32.mrb[0].mxu0
  %v247 = vadd.f32 0.0, %v246
  %v248 = vpop.f32.mrb[0].mxu0
  %v249 = vpop.f32.mrb[0].mxu0
  %v250 = vadd.f32 0.0, %v249
  %v251 = vpop.f32.mrb[0].mxu0
  %252 = vmatprep.mubr.bf16.mxu0 0
  %253 = vmatmul.mubr.bf16.gmra.mrb[0].mxu0 %v134
  %v254 = vpop.f32.mrb[0].mxu0
  %v255 = vadd.f32 0.0, %v254
  %v256 = vpop.f32.mrb[0].mxu0
  %v257 = vpop.f32.mrb[0].mxu0
  %v258 = vpop.f32.mrb[0].mxu0
  %259 = vdwg.mxu0
  %v260 = vrot.slane %v175, 1
  %v261 = vrot.slane %v178, 1
  %v262 = vrot.slane %v183, 1
  %v263 = vrot.slane %v186, 1
  %v264 = vrot.slane %v191, 1
  %v265 = vrot.slane %v194, 1
  %v266 = vrot.slane %v199, 1
  %v267 = vrot.slane %v202, 1
  %v268 = vrot.slane %v207, 1
  %v269 = vrot.slane %v210, 1
  %v270 = vrot.slane %v215, 1
  %v271 = vrot.slane %v218, 1
  %v272 = vrot.slane %v223, 1
  %v273 = vrot.slane %v226, 1
  %v274 = vrot.slane %v231, 1
  %v275 = vrot.slane %v234, 1
  %v276 = vrot.slane %v239, 1
  %v277 = vrot.slane %v242, 1
  %v278 = vrot.slane %v247, 1
  %v279 = vrot.slane %v250, 1
  %v280 = vrot.slane %v255, 1
  %v281 = vlaneseq
  %v282 = vshrl.u32 %v281, 7
  %vm283 = vcmp.lt.s32.totalorder %v282, 7
  %v284 = vsel %vm283, %v279, %v280
  %v285 = vsel %vm283, %v278, %v279
  %v286 = vsel %vm283, %v277, %v278
  %v287 = vsel %vm283, %v276, %v277
  %v288 = vsel %vm283, %v275, %v276
  %v289 = vsel %vm283, %v274, %v275
  %v290 = vsel %vm283, %v273, %v274
  %v291 = vsel %vm283, %v272, %v273
  %v292 = vsel %vm283, %v271, %v272
  %v293 = vsel %vm283, %v270, %v271
  %v294 = vsel %vm283, %v269, %v270
  %v295 = vsel %vm283, %v268, %v269
  %v296 = vsel %vm283, %v267, %v268
  %v297 = vsel %vm283, %v266, %v267
  %v298 = vsel %vm283, %v265, %v266
  %v299 = vsel %vm283, %v264, %v265
  %v300 = vsel %vm283, %v263, %v264
  %v301 = vsel %vm283, %v262, %v263
  %v302 = vsel %vm283, %v261, %v262
  %v303 = vsel %vm283, %v260, %v261
  %v304 = vsel %vm283, %v280, %v260
  %v307 = vunpack.c.l.b16 %v39
  %v308 = vunpack.c.l.b16 %v40
  %v309 = vpack.c.b16 %v308, %v307
  %v311 = vsel %vm136, %v309, 0
  %313 = vmatprep.subr.bf16.mxu0 0
  %314 = vmatpush1.bf16.msra.mxu0 %v311
  %315 = vmatprep.subr.bf16.mxu0 0
  %316 = vmatpush1.bf16.msra.mxu0 0
  %317 = vmatprep.subr.bf16.mxu0 0
  %318 = vmatpush1.bf16.msra.mxu0 0
  %319 = vmatprep.subr.bf16.mxu0 0
  %320 = vmatpush1.bf16.msra.mxu0 0
  %321 = vmatprep.subr.bf16.mxu0 0
  %322 = vmatpush1.bf16.msra.mxu0 0
  %323 = vmatprep.subr.bf16.mxu0 0
  %324 = vmatpush1.bf16.msra.mxu0 0
  %325 = vmatprep.subr.bf16.mxu0 0
  %326 = vmatpush1.bf16.msra.mxu0 0
  %327 = vmatprep.subr.bf16.mxu0 0
  %328 = vmatpush1.bf16.msra.mxu0 0
  %329 = vmatprep.subr.bf16.mxu0 0
  %330 = vmatpush1.bf16.msra.mxu0 0
  %331 = vmatprep.subr.bf16.mxu0 0
  %332 = vmatpush1.bf16.msra.mxu0 0
  %333 = vmatprep.subr.bf16.mxu0 0
  %334 = vmatpush1.bf16.msra.mxu0 0
  %335 = vmatprep.subr.bf16.mxu0 0
  %336 = vmatpush1.bf16.msra.mxu0 0
  %337 = vmatprep.subr.bf16.mxu0 0
  %338 = vmatpush1.bf16.msra.mxu0 0
  %339 = vmatprep.subr.bf16.mxu0 0
  %340 = vmatpush1.bf16.msra.mxu0 0
  %341 = vmatprep.subr.bf16.mxu0 0
  %342 = vmatpush1.bf16.msra.mxu0 0
  %343 = vmatprep.subr.bf16.mxu0 0
  %344 = vmatpush1.bf16.msra.mxu0 0
  %345 = vmatprep.mubr.bf16.mxu0 0
  %346 = vmatmul.mubr.bf16.gmra.mrb[0].mxu0 %v104
  %v347 = vpop.f32.mrb[0].mxu0
  %v348 = vadd.f32 %v303, %v347
  %v349 = vpop.f32.mrb[0].mxu0
  %v350 = vpop.f32.mrb[0].mxu0
  %v351 = vadd.f32 %v302, %v350
  %v352 = vpop.f32.mrb[0].mxu0
  %353 = vmatprep.mubr.bf16.mxu0 0
  %354 = vmatmul.mubr.bf16.gmra.mrb[0].mxu0 %v107
  %v355 = vpop.f32.mrb[0].mxu0
  %v356 = vadd.f32 %v301, %v355
  %v357 = vpop.f32.mrb[0].mxu0
  %v358 = vpop.f32.mrb[0].mxu0
  %v359 = vadd.f32 %v300, %v358
  %v360 = vpop.f32.mrb[0].mxu0
  %361 = vmatprep.mubr.bf16.mxu0 0
  %362 = vmatmul.mubr.bf16.gmra.mrb[0].mxu0 %v110
  %v363 = vpop.f32.mrb[0].mxu0
  %v364 = vadd.f32 %v299, %v363
  %v365 = vpop.f32.mrb[0].mxu0
  %v366 = vpop.f32.mrb[0].mxu0
  %v367 = vadd.f32 %v298, %v366
  %v368 = vpop.f32.mrb[0].mxu0
  %369 = vmatprep.mubr.bf16.mxu0 0
  %370 = vmatmul.mubr.bf16.gmra.mrb[0].mxu0 %v113
  %v371 = vpop.f32.mrb[0].mxu0
  %v372 = vadd.f32 %v297, %v371
  %v373 = vpop.f32.mrb[0].mxu0
  %v374 = vpop.f32.mrb[0].mxu0
  %v375 = vadd.f32 %v296, %v374
  %v376 = vpop.f32.mrb[0].mxu0
  %377 = vmatprep.mubr.bf16.mxu0 0
  %378 = vmatmul.mubr.bf16.gmra.mrb[0].mxu0 %v116
  %v379 = vpop.f32.mrb[0].mxu0
  %v380 = vadd.f32 %v295, %v379
  %v381 = vpop.f32.mrb[0].mxu0
  %v382 = vpop.f32.mrb[0].mxu0
  %v383 = vadd.f32 %v294, %v382
  %v384 = vpop.f32.mrb[0].mxu0
  %385 = vmatprep.mubr.bf16.mxu0 0
  %386 = vmatmul.mubr.bf16.gmra.mrb[0].mxu0 %v119
  %v387 = vpop.f32.mrb[0].mxu0
  %v388 = vadd.f32 %v293, %v387
  %v389 = vpop.f32.mrb[0].mxu0
  %v390 = vpop.f32.mrb[0].mxu0
  %v391 = vadd.f32 %v292, %v390
  %v392 = vpop.f32.mrb[0].mxu0
  %393 = vmatprep.mubr.bf16.mxu0 0
  %394 = vmatmul.mubr.bf16.gmra.mrb[0].mxu0 %v122
  %v395 = vpop.f32.mrb[0].mxu0
  %v396 = vadd.f32 %v291, %v395
  %v397 = vpop.f32.mrb[0].mxu0
  %v398 = vpop.f32.mrb[0].mxu0
  %v399 = vadd.f32 %v290, %v398
  %v400 = vpop.f32.mrb[0].mxu0
  %401 = vmatprep.mubr.bf16.mxu0 0
  %402 = vmatmul.mubr.bf16.gmra.mrb[0].mxu0 %v125
  %v403 = vpop.f32.mrb[0].mxu0
  %v404 = vadd.f32 %v289, %v403
  %v405 = vpop.f32.mrb[0].mxu0
  %v406 = vpop.f32.mrb[0].mxu0
  %v407 = vadd.f32 %v288, %v406
  %v408 = vpop.f32.mrb[0].mxu0
  %409 = vmatprep.mubr.bf16.mxu0 0
  %410 = vmatmul.mubr.bf16.gmra.mrb[0].mxu0 %v128
  %v411 = vpop.f32.mrb[0].mxu0
  %v412 = vadd.f32 %v287, %v411
  %v413 = vpop.f32.mrb[0].mxu0
  %v414 = vpop.f32.mrb[0].mxu0
  %v415 = vadd.f32 %v286, %v414
  %v416 = vpop.f32.mrb[0].mxu0
  %417 = vmatprep.mubr.bf16.mxu0 0
  %418 = vmatmul.mubr.bf16.gmra.mrb[0].mxu0 %v131
  %v419 = vpop.f32.mrb[0].mxu0
  %v420 = vadd.f32 %v285, %v419
  %v421 = vpop.f32.mrb[0].mxu0
  %v422 = vpop.f32.mrb[0].mxu0
  %v423 = vadd.f32 %v284, %v422
  %v424 = vpop.f32.mrb[0].mxu0
  %425 = vmatprep.mubr.bf16.mxu0 0
  %426 = vmatmul.mubr.bf16.gmra.mrb[0].mxu0 %v134
  %v427 = vpop.f32.mrb[0].mxu0
  %v428 = vadd.f32 %v304, %v427
  %v429 = vpop.f32.mrb[0].mxu0
  %v430 = vpop.f32.mrb[0].mxu0
  %v431 = vpop.f32.mrb[0].mxu0
  %432 = vdwg.mxu0
  %s433 = scalar_lea.vmem %s1, 16
  %v434 = vld [vmem:[%s433] sm:$0xf]
  %v435 = vld [vmem:[%s433 + $0x4] sm:$0x3]
  %v438 = vunpack.c.l.b16 %v434
  %v439 = vunpack.c.l.b16 %v435
  %v440 = vpack.c.b16 %v439, %v438
  %v442 = vsel %vm136, %v440, 0
  %444 = vmatprep.subr.bf16.mxu0 0
  %445 = vmatpush1.bf16.msra.mxu0 %v442
  %446 = vmatprep.subr.bf16.mxu0 0
  %447 = vmatpush1.bf16.msra.mxu0 0
  %448 = vmatprep.subr.bf16.mxu0 0
  %449 = vmatpush1.bf16.msra.mxu0 0
  %450 = vmatprep.subr.bf16.mxu0 0
  %451 = vmatpush1.bf16.msra.mxu0 0
  %452 = vmatprep.subr.bf16.mxu0 0
  %453 = vmatpush1.bf16.msra.mxu0 0
  %454 = vmatprep.subr.bf16.mxu0 0
  %455 = vmatpush1.bf16.msra.mxu0 0
  %456 = vmatprep.subr.bf16.mxu0 0
  %457 = vmatpush1.bf16.msra.mxu0 0
  %458 = vmatprep.subr.bf16.mxu0 0
  %459 = vmatpush1.bf16.msra.mxu0 0
  %460 = vmatprep.subr.bf16.mxu0 0
  %461 = vmatpush1.bf16.msra.mxu0 0
  %462 = vmatprep.subr.bf16.mxu0 0
  %463 = vmatpush1.bf16.msra.mxu0 0
  %464 = vmatprep.subr.bf16.mxu0 0
  %465 = vmatpush1.bf16.msra.mxu0 0
  %466 = vmatprep.subr.bf16.mxu0 0
  %467 = vmatpush1.bf16.msra.mxu0 0
  %468 = vmatprep.subr.bf16.mxu0 0
  %469 = vmatpush1.bf16.msra.mxu0 0
  %470 = vmatprep.subr.bf16.mxu0 0
  %471 = vmatpush1.bf16.msra.mxu0 0
  %472 = vmatprep.subr.bf16.mxu0 0
  %473 = vmatpush1.bf16.msra.mxu0 0
  %474 = vmatprep.subr.bf16.mxu0 0
  %475 = vmatpush1.bf16.msra.mxu0 0
  %476 = vmatprep.mubr.bf16.mxu0 0
  %477 = vmatmul.mubr.bf16.gmra.mrb[0].mxu0 %v104
  %v478 = vpop.f32.mrb[0].mxu0
  %v479 = vadd.f32 0.0, %v478
  %v480 = vpop.f32.mrb[0].mxu0
  %v481 = vpop.f32.mrb[0].mxu0
  %v482 = vadd.f32 0.0, %v481
  %v483 = vpop.f32.mrb[0].mxu0
  %484 = vmatprep.mubr.bf16.mxu0 0
  %485 = vmatmul.mubr.bf16.gmra.mrb[0].mxu0 %v107
  %v486 = vpop.f32.mrb[0].mxu0
  %v487 = vadd.f32 0.0, %v486
  %v488 = vpop.f32.mrb[0].mxu0
  %v489 = vpop.f32.mrb[0].mxu0
  %v490 = vadd.f32 0.0, %v489
  %v491 = vpop.f32.mrb[0].mxu0
  %492 = vmatprep.mubr.bf16.mxu0 0
  %493 = vmatmul.mubr.bf16.gmra.mrb[0].mxu0 %v110
  %v494 = vpop.f32.mrb[0].mxu0
  %v495 = vadd.f32 0.0, %v494
  %v496 = vpop.f32.mrb[0].mxu0
  %v497 = vpop.f32.mrb[0].mxu0
  %v498 = vadd.f32 0.0, %v497
  %v499 = vpop.f32.mrb[0].mxu0
  %500 = vmatprep.mubr.bf16.mxu0 0
  %501 = vmatmul.mubr.bf16.gmra.mrb[0].mxu0 %v113
  %v502 = vpop.f32.mrb[0].mxu0
  %v503 = vadd.f32 0.0, %v502
  %v504 = vpop.f32.mrb[0].mxu0
  %v505 = vpop.f32.mrb[0].mxu0
  %v506 = vadd.f32 0.0, %v505
  %v507 = vpop.f32.mrb[0].mxu0
  %508 = vmatprep.mubr.bf16.mxu0 0
  %509 = vmatmul.mubr.bf16.gmra.mrb[0].mxu0 %v116
  %v510 = vpop.f32.mrb[0].mxu0
  %v511 = vadd.f32 0.0, %v510
  %v512 = vpop.f32.mrb[0].mxu0
  %v513 = vpop.f32.mrb[0].mxu0
  %v514 = vadd.f32 0.0, %v513
  %v515 = vpop.f32.mrb[0].mxu0
  %516 = vmatprep.mubr.bf16.mxu0 0
  %517 = vmatmul.mubr.bf16.gmra.mrb[0].mxu0 %v119
  %v518 = vpop.f32.mrb[0].mxu0
  %v519 = vadd.f32 0.0, %v518
  %v520 = vpop.f32.mrb[0].mxu0
  %v521 = vpop.f32.mrb[0].mxu0
  %v522 = vadd.f32 0.0, %v521
  %v523 = vpop.f32.mrb[0].mxu0
  %524 = vmatprep.mubr.bf16.mxu0 0
  %525 = vmatmul.mubr.bf16.gmra.mrb[0].mxu0 %v122
  %v526 = vpop.f32.mrb[0].mxu0
  %v527 = vadd.f32 0.0, %v526
  %v528 = vpop.f32.mrb[0].mxu0
  %v529 = vpop.f32.mrb[0].mxu0
  %v530 = vadd.f32 0.0, %v529
  %v531 = vpop.f32.mrb[0].mxu0
  %532 = vmatprep.mubr.bf16.mxu0 0
  %533 = vmatmul.mubr.bf16.gmra.mrb[0].mxu0 %v125
  %v534 = vpop.f32.mrb[0].mxu0
  %v535 = vadd.f32 0.0, %v534
  %v536 = vpop.f32.mrb[0].mxu0
  %v537 = vpop.f32.mrb[0].mxu0
  %v538 = vadd.f32 0.0, %v537
  %v539 = vpop.f32.mrb[0].mxu0
  %540 = vmatprep.mubr.bf16.mxu0 0
  %541 = vmatmul.mubr.bf16.gmra.mrb[0].mxu0 %v128
  %v542 = vpop.f32.mrb[0].mxu0
  %v543 = vadd.f32 0.0, %v542
  %v544 = vpop.f32.mrb[0].mxu0
  %v545 = vpop.f32.mrb[0].mxu0
  %v546 = vadd.f32 0.0, %v545
  %v547 = vpop.f32.mrb[0].mxu0
  %548 = vmatprep.mubr.bf16.mxu0 0
  %549 = vmatmul.mubr.bf16.gmra.mrb[0].mxu0 %v131
  %v550 = vpop.f32.mrb[0].mxu0
  %v551 = vadd.f32 0.0, %v550
  %v552 = vpop.f32.mrb[0].mxu0
  %v553 = vpop.f32.mrb[0].mxu0
  %v554 = vadd.f32 0.0, %v553
  %v555 = vpop.f32.mrb[0].mxu0
  %556 = vmatprep.mubr.bf16.mxu0 0
  %557 = vmatmul.mubr.bf16.gmra.mrb[0].mxu0 %v134
  %v558 = vpop.f32.mrb[0].mxu0
  %v559 = vadd.f32 0.0, %v558
  %v560 = vpop.f32.mrb[0].mxu0
  %v561 = vpop.f32.mrb[0].mxu0
  %v562 = vpop.f32.mrb[0].mxu0
  %563 = vdwg.mxu0
  %v564 = vrot.slane %v479, 1
  %v565 = vrot.slane %v482, 1
  %v566 = vrot.slane %v487, 1
  %v567 = vrot.slane %v490, 1
  %v568 = vrot.slane %v495, 1
  %v569 = vrot.slane %v498, 1
  %v570 = vrot.slane %v503, 1
  %v571 = vrot.slane %v506, 1
  %v572 = vrot.slane %v511, 1
  %v573 = vrot.slane %v514, 1
  %v574 = vrot.slane %v519, 1
  %v575 = vrot.slane %v522, 1
  %v576 = vrot.slane %v527, 1
  %v577 = vrot.slane %v530, 1
  %v578 = vrot.slane %v535, 1
  %v579 = vrot.slane %v538, 1
  %v580 = vrot.slane %v543, 1
  %v581 = vrot.slane %v546, 1
  %v582 = vrot.slane %v551, 1
  %v583 = vrot.slane %v554, 1
  %v584 = vrot.slane %v559, 1
  %v585 = vsel %vm283, %v583, %v584
  %v586 = vsel %vm283, %v582, %v583
  %v587 = vsel %vm283, %v581, %v582
  %v588 = vsel %vm283, %v580, %v581
  %v589 = vsel %vm283, %v579, %v580
  %v590 = vsel %vm283, %v578, %v579
  %v591 = vsel %vm283, %v577, %v578
  %v592 = vsel %vm283, %v576, %v577
  %v593 = vsel %vm283, %v575, %v576
  %v594 = vsel %vm283, %v574, %v575
  %v595 = vsel %vm283, %v573, %v574
  %v596 = vsel %vm283, %v572, %v573
  %v597 = vsel %vm283, %v571, %v572
  %v598 = vsel %vm283, %v570, %v571
  %v599 = vsel %vm283, %v569, %v570
  %v600 = vsel %vm283, %v568, %v569
  %v601 = vsel %vm283, %v567, %v568
  %v602 = vsel %vm283, %v566, %v567
  %v603 = vsel %vm283, %v565, %v566
  %v604 = vsel %vm283, %v564, %v565
  %v605 = vsel %vm283, %v584, %v564
  %v606 = vadd.f32 %v348, %v603
  %v607 = vadd.f32 %v351, %v602
  %v608 = vadd.f32 %v356, %v601
  %v609 = vadd.f32 %v359, %v600
  %v610 = vadd.f32 %v364, %v599
  %v611 = vadd.f32 %v367, %v598
  %v612 = vadd.f32 %v372, %v597
  %v613 = vadd.f32 %v375, %v596
  %v614 = vadd.f32 %v380, %v595
  %v615 = vadd.f32 %v383, %v594
  %v616 = vadd.f32 %v388, %v593
  %v617 = vadd.f32 %v391, %v592
  %v618 = vadd.f32 %v396, %v591
  %v619 = vadd.f32 %v399, %v590
  %v620 = vadd.f32 %v404, %v589
  %v621 = vadd.f32 %v407, %v588
  %v622 = vadd.f32 %v412, %v587
  %v623 = vadd.f32 %v415, %v586
  %v624 = vadd.f32 %v420, %v585
  %v625 = vadd.f32 %v423, %v605
  %v626 = vadd.f32 %v428, %v604
  %s627 = scalar_lea.vmem %s1, 24
  %v628 = vld [vmem:[%s627] sm:$0xf]
  %v629 = vld [vmem:[%s627 + $0x4] sm:$0x3]
  %v632 = vunpack.c.l.b16 %v628
  %v633 = vunpack.c.l.b16 %v629
  %v634 = vpack.c.b16 %v633, %v632
  %v636 = vsel %vm136, %v634, 0
  %638 = vmatprep.subr.bf16.mxu0 0
  %639 = vmatpush1.bf16.msra.mxu0 %v636
  %640 = vmatprep.subr.bf16.mxu0 0
  %641 = vmatpush1.bf16.msra.mxu0 0
  %642 = vmatprep.subr.bf16.mxu0 0
  %643 = vmatpush1.bf16.msra.mxu0 0
  %644 = vmatprep.subr.bf16.mxu0 0
  %645 = vmatpush1.bf16.msra.mxu0 0
  %646 = vmatprep.subr.bf16.mxu0 0
  %647 = vmatpush1.bf16.msra.mxu0 0
  %648 = vmatprep.subr.bf16.mxu0 0
  %649 = vmatpush1.bf16.msra.mxu0 0
  %650 = vmatprep.subr.bf16.mxu0 0
  %651 = vmatpush1.bf16.msra.mxu0 0
  %652 = vmatprep.subr.bf16.mxu0 0
  %653 = vmatpush1.bf16.msra.mxu0 0
  %654 = vmatprep.subr.bf16.mxu0 0
  %655 = vmatpush1.bf16.msra.mxu0 0
  %656 = vmatprep.subr.bf16.mxu0 0
  %657 = vmatpush1.bf16.msra.mxu0 0
  %658 = vmatprep.subr.bf16.mxu0 0
  %659 = vmatpush1.bf16.msra.mxu0 0
  %660 = vmatprep.subr.bf16.mxu0 0
  %661 = vmatpush1.bf16.msra.mxu0 0
  %662 = vmatprep.subr.bf16.mxu0 0
  %663 = vmatpush1.bf16.msra.mxu0 0
  %664 = vmatprep.subr.bf16.mxu0 0
  %665 = vmatpush1.bf16.msra.mxu0 0
  %666 = vmatprep.subr.bf16.mxu0 0
  %667 = vmatpush1.bf16.msra.mxu0 0
  %668 = vmatprep.subr.bf16.mxu0 0
  %669 = vmatpush1.bf16.msra.mxu0 0
  %670 = vmatprep.mubr.bf16.mxu0 0
  %671 = vmatmul.mubr.bf16.gmra.mrb[0].mxu0 %v104
  %v672 = vpop.f32.mrb[0].mxu0
  %v673 = vadd.f32 0.0, %v672
  %v674 = vpop.f32.mrb[0].mxu0
  %v675 = vpop.f32.mrb[0].mxu0
  %v676 = vadd.f32 0.0, %v675
  %v677 = vpop.f32.mrb[0].mxu0
  %678 = vmatprep.mubr.bf16.mxu0 0
  %679 = vmatmul.mubr.bf16.gmra.mrb[0].mxu0 %v107
  %v680 = vpop.f32.mrb[0].mxu0
  %v681 = vadd.f32 0.0, %v680
  %v682 = vpop.f32.mrb[0].mxu0
  %v683 = vpop.f32.mrb[0].mxu0
  %v684 = vadd.f32 0.0, %v683
  %v685 = vpop.f32.mrb[0].mxu0
  %686 = vmatprep.mubr.bf16.mxu0 0
  %687 = vmatmul.mubr.bf16.gmra.mrb[0].mxu0 %v110
  %v688 = vpop.f32.mrb[0].mxu0
  %v689 = vadd.f32 0.0, %v688
  %v690 = vpop.f32.mrb[0].mxu0
  %v691 = vpop.f32.mrb[0].mxu0
  %v692 = vadd.f32 0.0, %v691
  %v693 = vpop.f32.mrb[0].mxu0
  %694 = vmatprep.mubr.bf16.mxu0 0
  %695 = vmatmul.mubr.bf16.gmra.mrb[0].mxu0 %v113
  %v696 = vpop.f32.mrb[0].mxu0
  %v697 = vadd.f32 0.0, %v696
  %v698 = vpop.f32.mrb[0].mxu0
  %v699 = vpop.f32.mrb[0].mxu0
  %v700 = vadd.f32 0.0, %v699
  %v701 = vpop.f32.mrb[0].mxu0
  %702 = vmatprep.mubr.bf16.mxu0 0
  %703 = vmatmul.mubr.bf16.gmra.mrb[0].mxu0 %v116
  %v704 = vpop.f32.mrb[0].mxu0
  %v705 = vadd.f32 0.0, %v704
  %v706 = vpop.f32.mrb[0].mxu0
  %v707 = vpop.f32.mrb[0].mxu0
  %v708 = vadd.f32 0.0, %v707
  %v709 = vpop.f32.mrb[0].mxu0
  %710 = vmatprep.mubr.bf16.mxu0 0
  %711 = vmatmul.mubr.bf16.gmra.mrb[0].mxu0 %v119
  %v712 = vpop.f32.mrb[0].mxu0
  %v713 = vadd.f32 0.0, %v712
  %v714 = vpop.f32.mrb[0].mxu0
  %v715 = vpop.f32.mrb[0].mxu0
  %v716 = vadd.f32 0.0, %v715
  %v717 = vpop.f32.mrb[0].mxu0
  %718 = vmatprep.mubr.bf16.mxu0 0
  %719 = vmatmul.mubr.bf16.gmra.mrb[0].mxu0 %v122
  %v720 = vpop.f32.mrb[0].mxu0
  %v721 = vadd.f32 0.0, %v720
  %v722 = vpop.f32.mrb[0].mxu0
  %v723 = vpop.f32.mrb[0].mxu0
  %v724 = vadd.f32 0.0, %v723
  %v725 = vpop.f32.mrb[0].mxu0
  %726 = vmatprep.mubr.bf16.mxu0 0
  %727 = vmatmul.mubr.bf16.gmra.mrb[0].mxu0 %v125
  %v728 = vpop.f32.mrb[0].mxu0
  %v729 = vadd.f32 0.0, %v728
  %v730 = vpop.f32.mrb[0].mxu0
  %v731 = vpop.f32.mrb[0].mxu0
  %v732 = vadd.f32 0.0, %v731
  %v733 = vpop.f32.mrb[0].mxu0
  %734 = vmatprep.mubr.bf16.mxu0 0
  %735 = vmatmul.mubr.bf16.gmra.mrb[0].mxu0 %v128
  %v736 = vpop.f32.mrb[0].mxu0
  %v737 = vadd.f32 0.0, %v736
  %v738 = vpop.f32.mrb[0].mxu0
  %v739 = vpop.f32.mrb[0].mxu0
  %v740 = vadd.f32 0.0, %v739
  %v741 = vpop.f32.mrb[0].mxu0
  %742 = vmatprep.mubr.bf16.mxu0 0
  %743 = vmatmul.mubr.bf16.gmra.mrb[0].mxu0 %v131
  %v744 = vpop.f32.mrb[0].mxu0
  %v745 = vadd.f32 0.0, %v744
  %v746 = vpop.f32.mrb[0].mxu0
  %v747 = vpop.f32.mrb[0].mxu0
  %v748 = vadd.f32 0.0, %v747
  %v749 = vpop.f32.mrb[0].mxu0
  %750 = vmatprep.mubr.bf16.mxu0 0
  %751 = vmatmul.mubr.bf16.gmra.mrb[0].mxu0 %v134
  %v752 = vpop.f32.mrb[0].mxu0
  %v753 = vadd.f32 0.0, %v752
  %v754 = vpop.f32.mrb[0].mxu0
  %v755 = vpop.f32.mrb[0].mxu0
  %v756 = vpop.f32.mrb[0].mxu0
  %757 = vdwg.mxu0
  %v758 = vrot.slane %v673, 2
  %v759 = vrot.slane %v676, 2
  %v760 = vrot.slane %v681, 2
  %v761 = vrot.slane %v684, 2
  %v762 = vrot.slane %v689, 2
  %v763 = vrot.slane %v692, 2
  %v764 = vrot.slane %v697, 2
  %v765 = vrot.slane %v700, 2
  %v766 = vrot.slane %v705, 2
  %v767 = vrot.slane %v708, 2
  %v768 = vrot.slane %v713, 2
  %v769 = vrot.slane %v716, 2
  %v770 = vrot.slane %v721, 2
  %v771 = vrot.slane %v724, 2
  %v772 = vrot.slane %v729, 2
  %v773 = vrot.slane %v732, 2
  %v774 = vrot.slane %v737, 2
  %v775 = vrot.slane %v740, 2
  %v776 = vrot.slane %v745, 2
  %v777 = vrot.slane %v748, 2
  %v778 = vrot.slane %v753, 2
  %vm779 = vcmp.lt.s32.totalorder %v282, 6
  %v780 = vsel %vm779, %v777, %v778
  %v781 = vsel %vm779, %v776, %v777
  %v782 = vsel %vm779, %v775, %v776
  %v783 = vsel %vm779, %v774, %v775
  %v784 = vsel %vm779, %v773, %v774
  %v785 = vsel %vm779, %v772, %v773
  %v786 = vsel %vm779, %v771, %v772
  %v787 = vsel %vm779, %v770, %v771
  %v788 = vsel %vm779, %v769, %v770
  %v789 = vsel %vm779, %v768, %v769
  %v790 = vsel %vm779, %v767, %v768
  %v791 = vsel %vm779, %v766, %v767
  %v792 = vsel %vm779, %v765, %v766
  %v793 = vsel %vm779, %v764, %v765
  %v794 = vsel %vm779, %v763, %v764
  %v795 = vsel %vm779, %v762, %v763
  %v796 = vsel %vm779, %v761, %v762
  %v797 = vsel %vm779, %v760, %v761
  %v798 = vsel %vm779, %v759, %v760
  %v799 = vsel %vm779, %v758, %v759
  %v800 = vsel %vm779, %v778, %v758
  %v801 = vadd.f32 %v606, %v798
  %v802 = vadd.f32 %v607, %v797
  %v803 = vadd.f32 %v608, %v796
  %v804 = vadd.f32 %v609, %v795
  %v805 = vadd.f32 %v610, %v794
  %v806 = vadd.f32 %v611, %v793
  %v807 = vadd.f32 %v612, %v792
  %v808 = vadd.f32 %v613, %v791
  %v809 = vadd.f32 %v614, %v790
  %v810 = vadd.f32 %v615, %v789
  %v811 = vadd.f32 %v616, %v788
  %v812 = vadd.f32 %v617, %v787
  %v813 = vadd.f32 %v618, %v786
  %v814 = vadd.f32 %v619, %v785
  %v815 = vadd.f32 %v620, %v784
  %v816 = vadd.f32 %v621, %v783
  %v817 = vadd.f32 %v622, %v782
  %v818 = vadd.f32 %v623, %v781
  %v819 = vadd.f32 %v624, %v780
  %v820 = vadd.f32 %v625, %v800
  %v821 = vadd.f32 %v626, %v799
  %v822 = vld [vmem:[%s2] sm:$0x1]
  %v824 = vlaneseq
  %v825 = vshrl.u32 %v824, 7
  %v826 = vsub.s32 0, %v825
  %v827 = vrot.slane %v822, %v826
  %v829 = vmul.f32 %v801, %v827
  %v830 = vmul.f32 %v802, %v827
  %v831 = vmul.f32 %v803, %v827
  %v832 = vmul.f32 %v804, %v827
  %v833 = vmul.f32 %v805, %v827
  %v834 = vmul.f32 %v806, %v827
  %v835 = vmul.f32 %v807, %v827
  %v836 = vmul.f32 %v808, %v827
  %v837 = vmul.f32 %v809, %v827
  %v838 = vmul.f32 %v810, %v827
  %v839 = vmul.f32 %v811, %v827
  %v840 = vmul.f32 %v812, %v827
  %v841 = vmul.f32 %v813, %v827
  %v842 = vmul.f32 %v814, %v827
  %v843 = vmul.f32 %v815, %v827
  %v844 = vmul.f32 %v816, %v827
  %v845 = vmul.f32 %v817, %v827
  %v846 = vmul.f32 %v818, %v827
  %v847 = vmul.f32 %v819, %v827
  %v848 = vmul.f32 %v820, %v827
  %v849 = vmul.f32 %v821, %v827
  %v850 = vld [vmem:[%s3] sm:$0x1]
  %v852 = vlaneseq
  %v853 = vshrl.u32 %v852, 7
  %v854 = vsub.s32 0, %v853
  %v855 = vrot.slane %v850, %v854
  %v857 = vadd.f32 %v829, %v855
  %v858 = vadd.f32 %v830, %v855
  %v859 = vadd.f32 %v831, %v855
  %v860 = vadd.f32 %v832, %v855
  %v861 = vadd.f32 %v833, %v855
  %v862 = vadd.f32 %v834, %v855
  %v863 = vadd.f32 %v835, %v855
  %v864 = vadd.f32 %v836, %v855
  %v865 = vadd.f32 %v837, %v855
  %v866 = vadd.f32 %v838, %v855
  %v867 = vadd.f32 %v839, %v855
  %v868 = vadd.f32 %v840, %v855
  %v869 = vadd.f32 %v841, %v855
  %v870 = vadd.f32 %v842, %v855
  %v871 = vadd.f32 %v843, %v855
  %v872 = vadd.f32 %v844, %v855
  %v873 = vadd.f32 %v845, %v855
  %v874 = vadd.f32 %v846, %v855
  %v875 = vadd.f32 %v847, %v855
  %v876 = vadd.f32 %v848, %v855
  %v877 = vadd.f32 %v849, %v855
  %v878 = vmul.f32 %v857, 0.5
  %v879 = vmul.f32 %v858, 0.5
  %v880 = vmul.f32 %v859, 0.5
  %v881 = vmul.f32 %v860, 0.5
  %v882 = vmul.f32 %v861, 0.5
  %v883 = vmul.f32 %v862, 0.5
  %v884 = vmul.f32 %v863, 0.5
  %v885 = vmul.f32 %v864, 0.5
  %v886 = vmul.f32 %v865, 0.5
  %v887 = vmul.f32 %v866, 0.5
  %v888 = vmul.f32 %v867, 0.5
  %v889 = vmul.f32 %v868, 0.5
  %v890 = vmul.f32 %v869, 0.5
  %v891 = vmul.f32 %v870, 0.5
  %v892 = vmul.f32 %v871, 0.5
  %v893 = vmul.f32 %v872, 0.5
  %v894 = vmul.f32 %v873, 0.5
  %v895 = vmul.f32 %v874, 0.5
  %v896 = vmul.f32 %v875, 0.5
  %v897 = vmul.f32 %v876, 0.5
  %v898 = vmul.f32 %v877, 0.5
  %v899 = vmul.f32 %v857, 0.70710677
  %v900 = vmul.f32 %v858, 0.70710677
  %v901 = vmul.f32 %v859, 0.70710677
  %v902 = vmul.f32 %v860, 0.70710677
  %v903 = vmul.f32 %v861, 0.70710677
  %v904 = vmul.f32 %v862, 0.70710677
  %v905 = vmul.f32 %v863, 0.70710677
  %v906 = vmul.f32 %v864, 0.70710677
  %v907 = vmul.f32 %v865, 0.70710677
  %v908 = vmul.f32 %v866, 0.70710677
  %v909 = vmul.f32 %v867, 0.70710677
  %v910 = vmul.f32 %v868, 0.70710677
  %v911 = vmul.f32 %v869, 0.70710677
  %v912 = vmul.f32 %v870, 0.70710677
  %v913 = vmul.f32 %v871, 0.70710677
  %v914 = vmul.f32 %v872, 0.70710677
  %v915 = vmul.f32 %v873, 0.70710677
  %v916 = vmul.f32 %v874, 0.70710677
  %v917 = vmul.f32 %v875, 0.70710677
  %v918 = vmul.f32 %v876, 0.70710677
  %v919 = vmul.f32 %v877, 0.70710677
  %v920 = verf.f32.pop %v899
  %v921 = verf.f32.pop %v900
  %v922 = verf.f32.pop %v901
  %v923 = verf.f32.pop %v902
  %v924 = verf.f32.pop %v903
  %v925 = verf.f32.pop %v904
  %v926 = verf.f32.pop %v905
  %v927 = verf.f32.pop %v906
  %v928 = verf.f32.pop %v907
  %v929 = verf.f32.pop %v908
  %v930 = verf.f32.pop %v909
  %v931 = verf.f32.pop %v910
  %v932 = verf.f32.pop %v911
  %v933 = verf.f32.pop %v912
  %v934 = verf.f32.pop %v913
  %v935 = verf.f32.pop %v914
  %v936 = verf.f32.pop %v915
  %v937 = verf.f32.pop %v916
  %v938 = verf.f32.pop %v917
  %v939 = verf.f32.pop %v918
  %v940 = verf.f32.pop %v919
  %v941 = vadd.f32 %v920, 1.0
  %v942 = vadd.f32 %v921, 1.0
  %v943 = vadd.f32 %v922, 1.0
  %v944 = vadd.f32 %v923, 1.0
  %v945 = vadd.f32 %v924, 1.0
  %v946 = vadd.f32 %v925, 1.0
  %v947 = vadd.f32 %v926, 1.0
  %v948 = vadd.f32 %v927, 1.0
  %v949 = vadd.f32 %v928, 1.0
  %v950 = vadd.f32 %v929, 1.0
  %v951 = vadd.f32 %v930, 1.0
  %v952 = vadd.f32 %v931, 1.0
  %v953 = vadd.f32 %v932, 1.0
  %v954 = vadd.f32 %v933, 1.0
  %v955 = vadd.f32 %v934, 1.0
  %v956 = vadd.f32 %v935, 1.0
  %v957 = vadd.f32 %v936, 1.0
  %v958 = vadd.f32 %v937, 1.0
  %v959 = vadd.f32 %v938, 1.0
  %v960 = vadd.f32 %v939, 1.0
  %v961 = vadd.f32 %v940, 1.0
  %v962 = vmul.f32 %v878, %v941
  %v963 = vmul.f32 %v879, %v942
  %v964 = vmul.f32 %v880, %v943
  %v965 = vmul.f32 %v881, %v944
  %v966 = vmul.f32 %v882, %v945
  %v967 = vmul.f32 %v883, %v946
  %v968 = vmul.f32 %v884, %v947
  %v969 = vmul.f32 %v885, %v948
  %v970 = vmul.f32 %v886, %v949
  %v971 = vmul.f32 %v887, %v950
  %v972 = vmul.f32 %v888, %v951
  %v973 = vmul.f32 %v889, %v952
  %v974 = vmul.f32 %v890, %v953
  %v975 = vmul.f32 %v891, %v954
  %v976 = vmul.f32 %v892, %v955
  %v977 = vmul.f32 %v893, %v956
  %v978 = vmul.f32 %v894, %v957
  %v979 = vmul.f32 %v895, %v958
  %v980 = vmul.f32 %v896, %v959
  %v981 = vmul.f32 %v897, %v960
  %v982 = vmul.f32 %v898, %v961
  %v983 = vpack.c.bf16 %v963, %v962
  %v984 = vpack.c.bf16 %v965, %v964
  %v985 = vpack.c.bf16 %v967, %v966
  %v986 = vpack.c.bf16 %v969, %v968
  %v987 = vpack.c.bf16 %v971, %v970
  %v988 = vpack.c.bf16 %v973, %v972
  %v989 = vpack.c.bf16 %v975, %v974
  %v990 = vpack.c.bf16 %v977, %v976
  %v991 = vpack.c.bf16 %v979, %v978
  %v992 = vpack.c.bf16 %v981, %v980
  %v993 = vpack.c.bf16 %v982, %v982
  %v1005 = vunpack.c.l.b16 %v983
  %v1006 = vunpack.c.h.b16 %v983
  %v1007 = vunpack.c.l.b16 %v984
  %v1008 = vunpack.c.h.b16 %v984
  %v1009 = vunpack.c.l.b16 %v985
  %v1010 = vunpack.c.h.b16 %v985
  %v1011 = vunpack.c.l.b16 %v986
  %v1012 = vunpack.c.h.b16 %v986
  %v1013 = vunpack.c.l.b16 %v987
  %v1014 = vunpack.c.h.b16 %v987
  %v1015 = vunpack.c.l.b16 %v988
  %v1016 = vunpack.c.h.b16 %v988
  %v1017 = vunpack.c.l.b16 %v989
  %v1018 = vunpack.c.h.b16 %v989
  %v1019 = vunpack.c.l.b16 %v990
  %v1020 = vunpack.c.h.b16 %v990
  %v1021 = vunpack.c.l.b16 %v991
  %v1022 = vunpack.c.h.b16 %v991
  %v1023 = vunpack.c.l.b16 %v992
  %v1024 = vunpack.c.h.b16 %v992
  %v1025 = vunpack.c.l.b16 %v993
  %v1026 = vpack.c.b16 %v1005, %v1005
  %v1027 = vpack.c.b16 %v1006, %v1006
  %v1028 = vpack.c.b16 %v1007, %v1007
  %v1029 = vpack.c.b16 %v1008, %v1008
  %v1030 = vpack.c.b16 %v1009, %v1009
  %v1031 = vpack.c.b16 %v1010, %v1010
  %v1032 = vpack.c.b16 %v1011, %v1011
  %v1033 = vpack.c.b16 %v1012, %v1012
  %v1034 = vpack.c.b16 %v1013, %v1013
  %v1035 = vpack.c.b16 %v1014, %v1014
  %v1036 = vpack.c.b16 %v1015, %v1015
  %v1037 = vpack.c.b16 %v1016, %v1016
  %v1038 = vpack.c.b16 %v1017, %v1017
  %v1039 = vpack.c.b16 %v1018, %v1018
  %v1040 = vpack.c.b16 %v1019, %v1019
  %v1041 = vpack.c.b16 %v1020, %v1020
  %v1042 = vpack.c.b16 %v1021, %v1021
  %v1043 = vpack.c.b16 %v1022, %v1022
  %v1044 = vpack.c.b16 %v1023, %v1023
  %v1045 = vpack.c.b16 %v1024, %v1024
  %v1046 = vpack.c.b16 %v1025, %v1025
  %vm1068 = vcmask 125952
  %1069 = vst.msk [vmem:[%s4] sm:$0xf] %vm1068, %v1026
  %1070 = vst.msk [vmem:[%s4 + $0x4] sm:$0xf] %vm1068, %v1027
  %1071 = vst.msk [vmem:[%s4 + $0x8] sm:$0xf] %vm1068, %v1028
  %1072 = vst.msk [vmem:[%s4 + $0xc] sm:$0xf] %vm1068, %v1029
  %1073 = vst.msk [vmem:[%s4 + $0x10] sm:$0xf] %vm1068, %v1030
  %1074 = vst.msk [vmem:[%s4 + $0x14] sm:$0xf] %vm1068, %v1031
  %1075 = vst.msk [vmem:[%s4 + $0x18] sm:$0xf] %vm1068, %v1032
  %1076 = vst.msk [vmem:[%s4 + $0x1c] sm:$0xf] %vm1068, %v1033
  %1077 = vst.msk [vmem:[%s4 + $0x20] sm:$0xf] %vm1068, %v1034
  %1078 = vst.msk [vmem:[%s4 + $0x24] sm:$0xf] %vm1068, %v1035
  %1079 = vst.msk [vmem:[%s4 + $0x28] sm:$0xf] %vm1068, %v1036
  %1080 = vst.msk [vmem:[%s4 + $0x2c] sm:$0xf] %vm1068, %v1037
  %1081 = vst.msk [vmem:[%s4 + $0x30] sm:$0xf] %vm1068, %v1038
  %1082 = vst.msk [vmem:[%s4 + $0x34] sm:$0xf] %vm1068, %v1039
  %1083 = vst.msk [vmem:[%s4 + $0x38] sm:$0xf] %vm1068, %v1040
  %1084 = vst.msk [vmem:[%s4 + $0x3c] sm:$0xf] %vm1068, %v1041
  %1085 = vst.msk [vmem:[%s4 + $0x40] sm:$0xf] %vm1068, %v1042
  %1086 = vst.msk [vmem:[%s4 + $0x44] sm:$0xf] %vm1068, %v1043
  %1087 = vst.msk [vmem:[%s4 + $0x48] sm:$0xf] %vm1068, %v1044
  %1088 = vst.msk [vmem:[%s4 + $0x4c] sm:$0xf] %vm1068, %v1045
  %1089 = vst.msk [vmem:[%s4 + $0x50] sm:$0xf] %vm1068, %v1046
  // Predicated region
  $region18: #{patch_embed_forward.5} parent=0 // pred_check
    _
  $region19: #{patch_embed_forward.5} parent=0 // pred_check_branch
    %1091 = sbr.rel (0) target = $region21
  $region20: #{patch_embed_forward.5} parent=0 // pred_region
    _
  $region21: #{patch_embed_forward.5} parent=0 // pred_fallthru
    _
  // Predicated region
  $region22: #{patch_embed_forward.5} parent=0 // pred_check
    _
  $region23: #{patch_embed_forward.5} parent=0 // pred_check_branch
    %1093 = sbr.rel (0) target = $region25
  $region24: #{patch_embed_forward.5} parent=0 // pred_region
    _
  $region25: #{patch_embed_forward.5} parent=0 // pred_fallthru
    _

// kernel: patch_embed_forward.4
$region0: #{patch_embed_forward.4}
  #allocation0 [shape = 'u32[]', space=smem, size = 0x4, offset = 0x4, fixed_abs, tag = 'smem constant byte address 0x4 - core index']
  #allocation1 [shape = 'u32[144,128]{1,0:T(1,128)}', space=vmem, size = 0x12000, scoped, tag = 'internal scratch']
  %s0 = inlined_call_operand.vmem [shape: bf16[168,12], index: 0, kind: input, shape index: {}]
  %s1 = inlined_call_operand.vmem [shape: bf16[4,12,16], index: 1, kind: input, shape index: {}]
  %s2 = inlined_call_operand.vmem [shape: f32[168,1], index: 2, kind: input, shape index: {}]
  %s3 = inlined_call_operand.vmem [shape: f32[8,16], index: 3, kind: output, shape index: {0}]
  %s4 = inlined_call_operand.vmem [shape: f32[8,16], index: 4, kind: output, shape index: {1}]
  %5 = xla_tuple %s3, %s4
  %s6 = sld [smem:[#allocation0]]
  $region30: #{patch_embed_forward.4} parent=0
    _
  %s8 = ssub.s32 1, %s6
  %s9 = scalar_select 0, %s8, %s6
  // Predicated region
  $region2: #{patch_embed_forward.4} parent=0 // pred_check
    _
  $region3: #{patch_embed_forward.4} parent=0 // pred_check_branch
    %11 = sbr.rel (0) target = $region5
  $region4: #{patch_embed_forward.4} parent=0 // pred_region
    _
  $region5: #{patch_embed_forward.4} parent=0 // pred_fallthru
    _
  // Predicated region
  $region6: #{patch_embed_forward.4} parent=0 // pred_check
    _
  $region7: #{patch_embed_forward.4} parent=0 // pred_check_branch
    %13 = sbr.rel (0) target = $region9
  $region8: #{patch_embed_forward.4} parent=0 // pred_region
    _
  $region9: #{patch_embed_forward.4} parent=0 // pred_fallthru
    _
  // Predicated region
  $region10: #{patch_embed_forward.4} parent=0 // pred_check
    _
  $region11: #{patch_embed_forward.4} parent=0 // pred_check_branch
    %15 = sbr.rel (0) target = $region13
  $region12: #{patch_embed_forward.4} parent=0 // pred_region
    _
  $region13: #{patch_embed_forward.4} parent=0 // pred_fallthru
    _
  %v17 = vld [vmem:[%s0] sm:$0xf]
  %v18 = vld [vmem:[%s0 + $0x4] sm:$0xf]
  %v19 = vld [vmem:[%s0 + $0x8] sm:$0xf]
  %v20 = vld [vmem:[%s0 + $0xc] sm:$0xf]
  %v21 = vld [vmem:[%s0 + $0x10] sm:$0xf]
  %v22 = vld [vmem:[%s0 + $0x14] sm:$0xf]
  %v23 = vld [vmem:[%s0 + $0x18] sm:$0xf]
  %v24 = vld [vmem:[%s0 + $0x1c] sm:$0xf]
  %v25 = vld [vmem:[%s0 + $0x20] sm:$0xf]
  %v26 = vld [vmem:[%s0 + $0x24] sm:$0xf]
  %v27 = vld [vmem:[%s0 + $0x28] sm:$0xf]
  %v28 = vld [vmem:[%s0 + $0x2c] sm:$0xf]
  %v29 = vld [vmem:[%s0 + $0x30] sm:$0xf]
  %v30 = vld [vmem:[%s0 + $0x34] sm:$0xf]
  %v31 = vld [vmem:[%s0 + $0x38] sm:$0xf]
  %v32 = vld [vmem:[%s0 + $0x3c] sm:$0xf]
  %v33 = vld [vmem:[%s0 + $0x40] sm:$0xf]
  %v34 = vld [vmem:[%s0 + $0x44] sm:$0xf]
  %v35 = vld [vmem:[%s0 + $0x48] sm:$0xf]
  %v36 = vld [vmem:[%s0 + $0x4c] sm:$0xf]
  %v37 = vld [vmem:[%s0 + $0x50] sm:$0xf]
  %v38 = vld [vmem:[%s1] sm:$0xf]
  %v39 = vld [vmem:[%s1 + $0x4] sm:$0x3]
  %s40 = scalar_lea.vmem %s1, 8
  %v41 = vld [vmem:[%s40] sm:$0xf]
  %v42 = vld [vmem:[%s40 + $0x4] sm:$0x3]
  %v64 = vunpack.c.l.b16 %v17
  %v65 = vunpack.c.l.b16 %v18
  %v66 = vunpack.c.l.b16 %v19
  %v67 = vunpack.c.l.b16 %v20
  %v68 = vunpack.c.l.b16 %v21
  %v69 = vunpack.c.l.b16 %v22
  %v70 = vunpack.c.l.b16 %v23
  %v71 = vunpack.c.l.b16 %v24
  %v72 = vunpack.c.l.b16 %v25
  %v73 = vunpack.c.l.b16 %v26
  %v74 = vunpack.c.l.b16 %v27
  %v75 = vunpack.c.l.b16 %v28
  %v76 = vunpack.c.l.b16 %v29
  %v77 = vunpack.c.l.b16 %v30
  %v78 = vunpack.c.l.b16 %v31
  %v79 = vunpack.c.l.b16 %v32
  %v80 = vunpack.c.l.b16 %v33
  %v81 = vunpack.c.l.b16 %v34
  %v82 = vunpack.c.l.b16 %v35
  %v83 = vunpack.c.l.b16 %v36
  %v84 = vunpack.c.l.b16 %v37
  %v85 = vpack.c.b16 %v65, %v64
  %v86 = vpack.c.b16 %v67, %v66
  %v87 = vpack.c.b16 %v69, %v68
  %v88 = vpack.c.b16 %v71, %v70
  %v89 = vpack.c.b16 %v73, %v72
  %v90 = vpack.c.b16 %v75, %v74
  %v91 = vpack.c.b16 %v77, %v76
  %v92 = vpack.c.b16 %v79, %v78
  %v93 = vpack.c.b16 %v81, %v80
  %v94 = vpack.c.b16 %v83, %v82
  %v95 = vpack.c.b16 %v84, %v84
  %v98 = vunpack.c.l.b16 %v41
  %v99 = vunpack.c.l.b16 %v42
  %v100 = vpack.c.b16 %v99, %v98
  %vm101 = vcmask 97280
  %v103 = vsel %vm101, %v85, 0
  %v106 = vsel %vm101, %v86, 0
  %v109 = vsel %vm101, %v87, 0
  %v112 = vsel %vm101, %v88, 0
  %v115 = vsel %vm101, %v89, 0
  %v118 = vsel %vm101, %v90, 0
  %v121 = vsel %vm101, %v91, 0
  %v124 = vsel %vm101, %v92, 0
  %v127 = vsel %vm101, %v93, 0
  %v130 = vsel %vm101, %v94, 0
  %v133 = vsel %vm101, %v95, 0
  %vm135 = vcmask 1045504
  %v137 = vsel %vm135, %v100, 0
  %139 = vmatprep.subr.bf16.mxu0 0
  %140 = vmatpush1.bf16.msra.mxu0 %v137
  %141 = vmatprep.subr.bf16.mxu0 0
  %142 = vmatpush1.bf16.msra.mxu0 0
  %143 = vmatprep.subr.bf16.mxu0 0
  %144 = vmatpush1.bf16.msra.mxu0 0
  %145 = vmatprep.subr.bf16.mxu0 0
  %146 = vmatpush1.bf16.msra.mxu0 0
  %147 = vmatprep.subr.bf16.mxu0 0
  %148 = vmatpush1.bf16.msra.mxu0 0
  %149 = vmatprep.subr.bf16.mxu0 0
  %150 = vmatpush1.bf16.msra.mxu0 0
  %151 = vmatprep.subr.bf16.mxu0 0
  %152 = vmatpush1.bf16.msra.mxu0 0
  %153 = vmatprep.subr.bf16.mxu0 0
  %154 = vmatpush1.bf16.msra.mxu0 0
  %155 = vmatprep.subr.bf16.mxu0 0
  %156 = vmatpush1.bf16.msra.mxu0 0
  %157 = vmatprep.subr.bf16.mxu0 0
  %158 = vmatpush1.bf16.msra.mxu0 0
  %159 = vmatprep.subr.bf16.mxu0 0
  %160 = vmatpush1.bf16.msra.mxu0 0
  %161 = vmatprep.subr.bf16.mxu0 0
  %162 = vmatpush1.bf16.msra.mxu0 0
  %163 = vmatprep.subr.bf16.mxu0 0
  %164 = vmatpush1.bf16.msra.mxu0 0
  %165 = vmatprep.subr.bf16.mxu0 0
  %166 = vmatpush1.bf16.msra.mxu0 0
  %167 = vmatprep.subr.bf16.mxu0 0
  %168 = vmatpush1.bf16.msra.mxu0 0
  %169 = vmatprep.subr.bf16.mxu0 0
  %170 = vmatpush1.bf16.msra.mxu0 0
  %171 = vmatprep.mubr.bf16.mxu0 0
  %172 = vmatmul.mubr.bf16.gmra.mrb[0].mxu0 %v103
  %v173 = vpop.f32.mrb[0].mxu0
  %v174 = vadd.f32 0.0, %v173
  %v175 = vpop.f32.mrb[0].mxu0
  %v176 = vpop.f32.mrb[0].mxu0
  %v177 = vadd.f32 0.0, %v176
  %v178 = vpop.f32.mrb[0].mxu0
  %179 = vmatprep.mubr.bf16.mxu0 0
  %180 = vmatmul.mubr.bf16.gmra.mrb[0].mxu0 %v106
  %v181 = vpop.f32.mrb[0].mxu0
  %v182 = vadd.f32 0.0, %v181
  %v183 = vpop.f32.mrb[0].mxu0
  %v184 = vpop.f32.mrb[0].mxu0
  %v185 = vadd.f32 0.0, %v184
  %v186 = vpop.f32.mrb[0].mxu0
  %187 = vmatprep.mubr.bf16.mxu0 0
  %188 = vmatmul.mubr.bf16.gmra.mrb[0].mxu0 %v109
  %v189 = vpop.f32.mrb[0].mxu0
  %v190 = vadd.f32 0.0, %v189
  %v191 = vpop.f32.mrb[0].mxu0
  %v192 = vpop.f32.mrb[0].mxu0
  %v193 = vadd.f32 0.0, %v192
  %v194 = vpop.f32.mrb[0].mxu0
  %195 = vmatprep.mubr.bf16.mxu0 0
  %196 = vmatmul.mubr.bf16.gmra.mrb[0].mxu0 %v112
  %v197 = vpop.f32.mrb[0].mxu0
  %v198 = vadd.f32 0.0, %v197
  %v199 = vpop.f32.mrb[0].mxu0
  %v200 = vpop.f32.mrb[0].mxu0
  %v201 = vadd.f32 0.0, %v200
  %v202 = vpop.f32.mrb[0].mxu0
  %203 = vmatprep.mubr.bf16.mxu0 0
  %204 = vmatmul.mubr.bf16.gmra.mrb[0].mxu0 %v115
  %v205 = vpop.f32.mrb[0].mxu0
  %v206 = vadd.f32 0.0, %v205
  %v207 = vpop.f32.mrb[0].mxu0
  %v208 = vpop.f32.mrb[0].mxu0
  %v209 = vadd.f32 0.0, %v208
  %v210 = vpop.f32.mrb[0].mxu0
  %211 = vmatprep.mubr.bf16.mxu0 0
  %212 = vmatmul.mubr.bf16.gmra.mrb[0].mxu0 %v118
  %v213 = vpop.f32.mrb[0].mxu0
  %v214 = vadd.f32 0.0, %v213
  %v215 = vpop.f32.mrb[0].mxu0
  %v216 = vpop.f32.mrb[0].mxu0
  %v217 = vadd.f32 0.0, %v216
  %v218 = vpop.f32.mrb[0].mxu0
  %219 = vmatprep.mubr.bf16.mxu0 0
  %220 = vmatmul.mubr.bf16.gmra.mrb[0].mxu0 %v121
  %v221 = vpop.f32.mrb[0].mxu0
  %v222 = vadd.f32 0.0, %v221
  %v223 = vpop.f32.mrb[0].mxu0
  %v224 = vpop.f32.mrb[0].mxu0
  %v225 = vadd.f32 0.0, %v224
  %v226 = vpop.f32.mrb[0].mxu0
  %227 = vmatprep.mubr.bf16.mxu0 0
  %228 = vmatmul.mubr.bf16.gmra.mrb[0].mxu0 %v124
  %v229 = vpop.f32.mrb[0].mxu0
  %v230 = vadd.f32 0.0, %v229
  %v231 = vpop.f32.mrb[0].mxu0
  %v232 = vpop.f32.mrb[0].mxu0
  %v233 = vadd.f32 0.0, %v232
  %v234 = vpop.f32.mrb[0].mxu0
  %235 = vmatprep.mubr.bf16.mxu0 0
  %236 = vmatmul.mubr.bf16.gmra.mrb[0].mxu0 %v127
  %v237 = vpop.f32.mrb[0].mxu0
  %v238 = vadd.f32 0.0, %v237
  %v239 = vpop.f32.mrb[0].mxu0
  %v240 = vpop.f32.mrb[0].mxu0
  %v241 = vadd.f32 0.0, %v240
  %v242 = vpop.f32.mrb[0].mxu0
  %243 = vmatprep.mubr.bf16.mxu0 0
  %244 = vmatmul.mubr.bf16.gmra.mrb[0].mxu0 %v130
  %v245 = vpop.f32.mrb[0].mxu0
  %v246 = vadd.f32 0.0, %v245
  %v247 = vpop.f32.mrb[0].mxu0
  %v248 = vpop.f32.mrb[0].mxu0
  %v249 = vadd.f32 0.0, %v248
  %v250 = vpop.f32.mrb[0].mxu0
  %251 = vmatprep.mubr.bf16.mxu0 0
  %252 = vmatmul.mubr.bf16.gmra.mrb[0].mxu0 %v133
  %v253 = vpop.f32.mrb[0].mxu0
  %v254 = vadd.f32 0.0, %v253
  %v255 = vpop.f32.mrb[0].mxu0
  %v256 = vpop.f32.mrb[0].mxu0
  %v257 = vpop.f32.mrb[0].mxu0
  %258 = vdwg.mxu0
  %v259 = vrot.slane %v174, 1
  %v260 = vrot.slane %v177, 1
  %v261 = vrot.slane %v182, 1
  %v262 = vrot.slane %v185, 1
  %v263 = vrot.slane %v190, 1
  %v264 = vrot.slane %v193, 1
  %v265 = vrot.slane %v198, 1
  %v266 = vrot.slane %v201, 1
  %v267 = vrot.slane %v206, 1
  %v268 = vrot.slane %v209, 1
  %v269 = vrot.slane %v214, 1
  %v270 = vrot.slane %v217, 1
  %v271 = vrot.slane %v222, 1
  %v272 = vrot.slane %v225, 1
  %v273 = vrot.slane %v230, 1
  %v274 = vrot.slane %v233, 1
  %v275 = vrot.slane %v238, 1
  %v276 = vrot.slane %v241, 1
  %v277 = vrot.slane %v246, 1
  %v278 = vrot.slane %v249, 1
  %v279 = vrot.slane %v254, 1
  %v280 = vlaneseq
  %v281 = vshrl.u32 %v280, 7
  %vm282 = vcmp.lt.s32.totalorder %v281, 7
  %v283 = vsel %vm282, %v278, %v279
  %v284 = vsel %vm282, %v277, %v278
  %v285 = vsel %vm282, %v276, %v277
  %v286 = vsel %vm282, %v275, %v276
  %v287 = vsel %vm282, %v274, %v275
  %v288 = vsel %vm282, %v273, %v274
  %v289 = vsel %vm282, %v272, %v273
  %v290 = vsel %vm282, %v271, %v272
  %v291 = vsel %vm282, %v270, %v271
  %v292 = vsel %vm282, %v269, %v270
  %v293 = vsel %vm282, %v268, %v269
  %v294 = vsel %vm282, %v267, %v268
  %v295 = vsel %vm282, %v266, %v267
  %v296 = vsel %vm282, %v265, %v266
  %v297 = vsel %vm282, %v264, %v265
  %v298 = vsel %vm282, %v263, %v264
  %v299 = vsel %vm282, %v262, %v263
  %v300 = vsel %vm282, %v261, %v262
  %v301 = vsel %vm282, %v260, %v261
  %v302 = vsel %vm282, %v259, %v260
  %v303 = vsel %vm282, %v279, %v259
  %v306 = vunpack.c.l.b16 %v38
  %v307 = vunpack.c.l.b16 %v39
  %v308 = vpack.c.b16 %v307, %v306
  %v310 = vsel %vm135, %v308, 0
  %312 = vmatprep.subr.bf16.mxu0 0
  %313 = vmatpush1.bf16.msra.mxu0 %v310
  %314 = vmatprep.subr.bf16.mxu0 0
  %315 = vmatpush1.bf16.msra.mxu0 0
  %316 = vmatprep.subr.bf16.mxu0 0
  %317 = vmatpush1.bf16.msra.mxu0 0
  %318 = vmatprep.subr.bf16.mxu0 0
  %319 = vmatpush1.bf16.msra.mxu0 0
  %320 = vmatprep.subr.bf16.mxu0 0
  %321 = vmatpush1.bf16.msra.mxu0 0
  %322 = vmatprep.subr.bf16.mxu0 0
  %323 = vmatpush1.bf16.msra.mxu0 0
  %324 = vmatprep.subr.bf16.mxu0 0
  %325 = vmatpush1.bf16.msra.mxu0 0
  %326 = vmatprep.subr.bf16.mxu0 0
  %327 = vmatpush1.bf16.msra.mxu0 0
  %328 = vmatprep.subr.bf16.mxu0 0
  %329 = vmatpush1.bf16.msra.mxu0 0
  %330 = vmatprep.subr.bf16.mxu0 0
  %331 = vmatpush1.bf16.msra.mxu0 0
  %332 = vmatprep.subr.bf16.mxu0 0
  %333 = vmatpush1.bf16.msra.mxu0 0
  %334 = vmatprep.subr.bf16.mxu0 0
  %335 = vmatpush1.bf16.msra.mxu0 0
  %336 = vmatprep.subr.bf16.mxu0 0
  %337 = vmatpush1.bf16.msra.mxu0 0
  %338 = vmatprep.subr.bf16.mxu0 0
  %339 = vmatpush1.bf16.msra.mxu0 0
  %340 = vmatprep.subr.bf16.mxu0 0
  %341 = vmatpush1.bf16.msra.mxu0 0
  %342 = vmatprep.subr.bf16.mxu0 0
  %343 = vmatpush1.bf16.msra.mxu0 0
  %344 = vmatprep.mubr.bf16.mxu0 0
  %345 = vmatmul.mubr.bf16.gmra.mrb[0].mxu0 %v103
  %v346 = vpop.f32.mrb[0].mxu0
  %v347 = vadd.f32 %v302, %v346
  %v348 = vpop.f32.mrb[0].mxu0
  %v349 = vpop.f32.mrb[0].mxu0
  %v350 = vadd.f32 %v301, %v349
  %v351 = vpop.f32.mrb[0].mxu0
  %352 = vmatprep.mubr.bf16.mxu0 0
  %353 = vmatmul.mubr.bf16.gmra.mrb[0].mxu0 %v106
  %v354 = vpop.f32.mrb[0].mxu0
  %v355 = vadd.f32 %v300, %v354
  %v356 = vpop.f32.mrb[0].mxu0
  %v357 = vpop.f32.mrb[0].mxu0
  %v358 = vadd.f32 %v299, %v357
  %v359 = vpop.f32.mrb[0].mxu0
  %360 = vmatprep.mubr.bf16.mxu0 0
  %361 = vmatmul.mubr.bf16.gmra.mrb[0].mxu0 %v109
  %v362 = vpop.f32.mrb[0].mxu0
  %v363 = vadd.f32 %v298, %v362
  %v364 = vpop.f32.mrb[0].mxu0
  %v365 = vpop.f32.mrb[0].mxu0
  %v366 = vadd.f32 %v297, %v365
  %v367 = vpop.f32.mrb[0].mxu0
  %368 = vmatprep.mubr.bf16.mxu0 0
  %369 = vmatmul.mubr.bf16.gmra.mrb[0].mxu0 %v112
  %v370 = vpop.f32.mrb[0].mxu0
  %v371 = vadd.f32 %v296, %v370
  %v372 = vpop.f32.mrb[0].mxu0
  %v373 = vpop.f32.mrb[0].mxu0
  %v374 = vadd.f32 %v295, %v373
  %v375 = vpop.f32.mrb[0].mxu0
  %376 = vmatprep.mubr.bf16.mxu0 0
  %377 = vmatmul.mubr.bf16.gmra.mrb[0].mxu0 %v115
  %v378 = vpop.f32.mrb[0].mxu0
  %v379 = vadd.f32 %v294, %v378
  %v380 = vpop.f32.mrb[0].mxu0
  %v381 = vpop.f32.mrb[0].mxu0
  %v382 = vadd.f32 %v293, %v381
  %v383 = vpop.f32.mrb[0].mxu0
  %384 = vmatprep.mubr.bf16.mxu0 0
  %385 = vmatmul.mubr.bf16.gmra.mrb[0].mxu0 %v118
  %v386 = vpop.f32.mrb[0].mxu0
  %v387 = vadd.f32 %v292, %v386
  %v388 = vpop.f32.mrb[0].mxu0
  %v389 = vpop.f32.mrb[0].mxu0
  %v390 = vadd.f32 %v291, %v389
  %v391 = vpop.f32.mrb[0].mxu0
  %392 = vmatprep.mubr.bf16.mxu0 0
  %393 = vmatmul.mubr.bf16.gmra.mrb[0].mxu0 %v121
  %v394 = vpop.f32.mrb[0].mxu0
  %v395 = vadd.f32 %v290, %v394
  %v396 = vpop.f32.mrb[0].mxu0
  %v397 = vpop.f32.mrb[0].mxu0
  %v398 = vadd.f32 %v289, %v397
  %v399 = vpop.f32.mrb[0].mxu0
  %400 = vmatprep.mubr.bf16.mxu0 0
  %401 = vmatmul.mubr.bf16.gmra.mrb[0].mxu0 %v124
  %v402 = vpop.f32.mrb[0].mxu0
  %v403 = vadd.f32 %v288, %v402
  %v404 = vpop.f32.mrb[0].mxu0
  %v405 = vpop.f32.mrb[0].mxu0
  %v406 = vadd.f32 %v287, %v405
  %v407 = vpop.f32.mrb[0].mxu0
  %408 = vmatprep.mubr.bf16.mxu0 0
  %409 = vmatmul.mubr.bf16.gmra.mrb[0].mxu0 %v127
  %v410 = vpop.f32.mrb[0].mxu0
  %v411 = vadd.f32 %v286, %v410
  %v412 = vpop.f32.mrb[0].mxu0
  %v413 = vpop.f32.mrb[0].mxu0
  %v414 = vadd.f32 %v285, %v413
  %v415 = vpop.f32.mrb[0].mxu0
  %416 = vmatprep.mubr.bf16.mxu0 0
  %417 = vmatmul.mubr.bf16.gmra.mrb[0].mxu0 %v130
  %v418 = vpop.f32.mrb[0].mxu0
  %v419 = vadd.f32 %v284, %v418
  %v420 = vpop.f32.mrb[0].mxu0
  %v421 = vpop.f32.mrb[0].mxu0
  %v422 = vadd.f32 %v283, %v421
  %v423 = vpop.f32.mrb[0].mxu0
  %424 = vmatprep.mubr.bf16.mxu0 0
  %425 = vmatmul.mubr.bf16.gmra.mrb[0].mxu0 %v133
  %v426 = vpop.f32.mrb[0].mxu0
  %v427 = vadd.f32 %v303, %v426
  %v428 = vpop.f32.mrb[0].mxu0
  %v429 = vpop.f32.mrb[0].mxu0
  %v430 = vpop.f32.mrb[0].mxu0
  %431 = vdwg.mxu0
  %s432 = scalar_lea.vmem %s1, 16
  %v433 = vld [vmem:[%s432] sm:$0xf]
  %v434 = vld [vmem:[%s432 + $0x4] sm:$0x3]
  %v437 = vunpack.c.l.b16 %v433
  %v438 = vunpack.c.l.b16 %v434
  %v439 = vpack.c.b16 %v438, %v437
  %v441 = vsel %vm135, %v439, 0
  %443 = vmatprep.subr.bf16.mxu0 0
  %444 = vmatpush1.bf16.msra.mxu0 %v441
  %445 = vmatprep.subr.bf16.mxu0 0
  %446 = vmatpush1.bf16.msra.mxu0 0
  %447 = vmatprep.subr.bf16.mxu0 0
  %448 = vmatpush1.bf16.msra.mxu0 0
  %449 = vmatprep.subr.bf16.mxu0 0
  %450 = vmatpush1.bf16.msra.mxu0 0
  %451 = vmatprep.subr.bf16.mxu0 0
  %452 = vmatpush1.bf16.msra.mxu0 0
  %453 = vmatprep.subr.bf16.mxu0 0
  %454 = vmatpush1.bf16.msra.mxu0 0
  %455 = vmatprep.subr.bf16.mxu0 0
  %456 = vmatpush1.bf16.msra.mxu0 0
  %457 = vmatprep.subr.bf16.mxu0 0
  %458 = vmatpush1.bf16.msra.mxu0 0
  %459 = vmatprep.subr.bf16.mxu0 0
  %460 = vmatpush1.bf16.msra.mxu0 0
  %461 = vmatprep.subr.bf16.mxu0 0
  %462 = vmatpush1.bf16.msra.mxu0 0
  %463 = vmatprep.subr.bf16.mxu0 0
  %464 = vmatpush1.bf16.msra.mxu0 0
  %465 = vmatprep.subr.bf16.mxu0 0
  %466 = vmatpush1.bf16.msra.mxu0 0
  %467 = vmatprep.subr.bf16.mxu0 0
  %468 = vmatpush1.bf16.msra.mxu0 0
  %469 = vmatprep.subr.bf16.mxu0 0
  %470 = vmatpush1.bf16.msra.mxu0 0
  %471 = vmatprep.subr.bf16.mxu0 0
  %472 = vmatpush1.bf16.msra.mxu0 0
  %473 = vmatprep.subr.bf16.mxu0 0
  %474 = vmatpush1.bf16.msra.mxu0 0
  %475 = vmatprep.mubr.bf16.mxu0 0
  %476 = vmatmul.mubr.bf16.gmra.mrb[0].mxu0 %v103
  %v477 = vpop.f32.mrb[0].mxu0
  %v478 = vadd.f32 0.0, %v477
  %v479 = vpop.f32.mrb[0].mxu0
  %v480 = vpop.f32.mrb[0].mxu0
  %v481 = vadd.f32 0.0, %v480
  %v482 = vpop.f32.mrb[0].mxu0
  %483 = vmatprep.mubr.bf16.mxu0 0
  %484 = vmatmul.mubr.bf16.gmra.mrb[0].mxu0 %v106
  %v485 = vpop.f32.mrb[0].mxu0
  %v486 = vadd.f32 0.0, %v485
  %v487 = vpop.f32.mrb[0].mxu0
  %v488 = vpop.f32.mrb[0].mxu0
  %v489 = vadd.f32 0.0, %v488
  %v490 = vpop.f32.mrb[0].mxu0
  %491 = vmatprep.mubr.bf16.mxu0 0
  %492 = vmatmul.mubr.bf16.gmra.mrb[0].mxu0 %v109
  %v493 = vpop.f32.mrb[0].mxu0
  %v494 = vadd.f32 0.0, %v493
  %v495 = vpop.f32.mrb[0].mxu0
  %v496 = vpop.f32.mrb[0].mxu0
  %v497 = vadd.f32 0.0, %v496
  %v498 = vpop.f32.mrb[0].mxu0
  %499 = vmatprep.mubr.bf16.mxu0 0
  %500 = vmatmul.mubr.bf16.gmra.mrb[0].mxu0 %v112
  %v501 = vpop.f32.mrb[0].mxu0
  %v502 = vadd.f32 0.0, %v501
  %v503 = vpop.f32.mrb[0].mxu0
  %v504 = vpop.f32.mrb[0].mxu0
  %v505 = vadd.f32 0.0, %v504
  %v506 = vpop.f32.mrb[0].mxu0
  %507 = vmatprep.mubr.bf16.mxu0 0
  %508 = vmatmul.mubr.bf16.gmra.mrb[0].mxu0 %v115
  %v509 = vpop.f32.mrb[0].mxu0
  %v510 = vadd.f32 0.0, %v509
  %v511 = vpop.f32.mrb[0].mxu0
  %v512 = vpop.f32.mrb[0].mxu0
  %v513 = vadd.f32 0.0, %v512
  %v514 = vpop.f32.mrb[0].mxu0
  %515 = vmatprep.mubr.bf16.mxu0 0
  %516 = vmatmul.mubr.bf16.gmra.mrb[0].mxu0 %v118
  %v517 = vpop.f32.mrb[0].mxu0
  %v518 = vadd.f32 0.0, %v517
  %v519 = vpop.f32.mrb[0].mxu0
  %v520 = vpop.f32.mrb[0].mxu0
  %v521 = vadd.f32 0.0, %v520
  %v522 = vpop.f32.mrb[0].mxu0
  %523 = vmatprep.mubr.bf16.mxu0 0
  %524 = vmatmul.mubr.bf16.gmra.mrb[0].mxu0 %v121
  %v525 = vpop.f32.mrb[0].mxu0
  %v526 = vadd.f32 0.0, %v525
  %v527 = vpop.f32.mrb[0].mxu0
  %v528 = vpop.f32.mrb[0].mxu0
  %v529 = vadd.f32 0.0, %v528
  %v530 = vpop.f32.mrb[0].mxu0
  %531 = vmatprep.mubr.bf16.mxu0 0
  %532 = vmatmul.mubr.bf16.gmra.mrb[0].mxu0 %v124
  %v533 = vpop.f32.mrb[0].mxu0
  %v534 = vadd.f32 0.0, %v533
  %v535 = vpop.f32.mrb[0].mxu0
  %v536 = vpop.f32.mrb[0].mxu0
  %v537 = vadd.f32 0.0, %v536
  %v538 = vpop.f32.mrb[0].mxu0
  %539 = vmatprep.mubr.bf16.mxu0 0
  %540 = vmatmul.mubr.bf16.gmra.mrb[0].mxu0 %v127
  %v541 = vpop.f32.mrb[0].mxu0
  %v542 = vadd.f32 0.0, %v541
  %v543 = vpop.f32.mrb[0].mxu0
  %v544 = vpop.f32.mrb[0].mxu0
  %v545 = vadd.f32 0.0, %v544
  %v546 = vpop.f32.mrb[0].mxu0
  %547 = vmatprep.mubr.bf16.mxu0 0
  %548 = vmatmul.mubr.bf16.gmra.mrb[0].mxu0 %v130
  %v549 = vpop.f32.mrb[0].mxu0
  %v550 = vadd.f32 0.0, %v549
  %v551 = vpop.f32.mrb[0].mxu0
  %v552 = vpop.f32.mrb[0].mxu0
  %v553 = vadd.f32 0.0, %v552
  %v554 = vpop.f32.mrb[0].mxu0
  %555 = vmatprep.mubr.bf16.mxu0 0
  %556 = vmatmul.mubr.bf16.gmra.mrb[0].mxu0 %v133
  %v557 = vpop.f32.mrb[0].mxu0
  %v558 = vadd.f32 0.0, %v557
  %v559 = vpop.f32.mrb[0].mxu0
  %v560 = vpop.f32.mrb[0].mxu0
  %v561 = vpop.f32.mrb[0].mxu0
  %562 = vdwg.mxu0
  %v563 = vrot.slane %v478, 1
  %v564 = vrot.slane %v481, 1
  %v565 = vrot.slane %v486, 1
  %v566 = vrot.slane %v489, 1
  %v567 = vrot.slane %v494, 1
  %v568 = vrot.slane %v497, 1
  %v569 = vrot.slane %v502, 1
  %v570 = vrot.slane %v505, 1
  %v571 = vrot.slane %v510, 1
  %v572 = vrot.slane %v513, 1
  %v573 = vrot.slane %v518, 1
  %v574 = vrot.slane %v521, 1
  %v575 = vrot.slane %v526, 1
  %v576 = vrot.slane %v529, 1
  %v577 = vrot.slane %v534, 1
  %v578 = vrot.slane %v537, 1
  %v579 = vrot.slane %v542, 1
  %v580 = vrot.slane %v545, 1
  %v581 = vrot.slane %v550, 1
  %v582 = vrot.slane %v553, 1
  %v583 = vrot.slane %v558, 1
  %v584 = vsel %vm282, %v582, %v583
  %v585 = vsel %vm282, %v581, %v582
  %v586 = vsel %vm282, %v580, %v581
  %v587 = vsel %vm282, %v579, %v580
  %v588 = vsel %vm282, %v578, %v579
  %v589 = vsel %vm282, %v577, %v578
  %v590 = vsel %vm282, %v576, %v577
  %v591 = vsel %vm282, %v575, %v576
  %v592 = vsel %vm282, %v574, %v575
  %v593 = vsel %vm282, %v573, %v574
  %v594 = vsel %vm282, %v572, %v573
  %v595 = vsel %vm282, %v571, %v572
  %v596 = vsel %vm282, %v570, %v571
  %v597 = vsel %vm282, %v569, %v570
  %v598 = vsel %vm282, %v568, %v569
  %v599 = vsel %vm282, %v567, %v568
  %v600 = vsel %vm282, %v566, %v567
  %v601 = vsel %vm282, %v565, %v566
  %v602 = vsel %vm282, %v564, %v565
  %v603 = vsel %vm282, %v563, %v564
  %v604 = vsel %vm282, %v583, %v563
  %v605 = vadd.f32 %v347, %v602
  %v606 = vadd.f32 %v350, %v601
  %v607 = vadd.f32 %v355, %v600
  %v608 = vadd.f32 %v358, %v599
  %v609 = vadd.f32 %v363, %v598
  %v610 = vadd.f32 %v366, %v597
  %v611 = vadd.f32 %v371, %v596
  %v612 = vadd.f32 %v374, %v595
  %v613 = vadd.f32 %v379, %v594
  %v614 = vadd.f32 %v382, %v593
  %v615 = vadd.f32 %v387, %v592
  %v616 = vadd.f32 %v390, %v591
  %v617 = vadd.f32 %v395, %v590
  %v618 = vadd.f32 %v398, %v589
  %v619 = vadd.f32 %v403, %v588
  %v620 = vadd.f32 %v406, %v587
  %v621 = vadd.f32 %v411, %v586
  %v622 = vadd.f32 %v414, %v585
  %v623 = vadd.f32 %v419, %v584
  %v624 = vadd.f32 %v422, %v604
  %v625 = vadd.f32 %v427, %v603
  %s626 = scalar_lea.vmem %s1, 24
  %v627 = vld [vmem:[%s626] sm:$0xf]
  %v628 = vld [vmem:[%s626 + $0x4] sm:$0x3]
  %v631 = vunpack.c.l.b16 %v627
  %v632 = vunpack.c.l.b16 %v628
  %v633 = vpack.c.b16 %v632, %v631
  %v635 = vsel %vm135, %v633, 0
  %637 = vmatprep.subr.bf16.mxu0 0
  %638 = vmatpush1.bf16.msra.mxu0 %v635
  %639 = vmatprep.subr.bf16.mxu0 0
  %640 = vmatpush1.bf16.msra.mxu0 0
  %641 = vmatprep.subr.bf16.mxu0 0
  %642 = vmatpush1.bf16.msra.mxu0 0
  %643 = vmatprep.subr.bf16.mxu0 0
  %644 = vmatpush1.bf16.msra.mxu0 0
  %645 = vmatprep.subr.bf16.mxu0 0
  %646 = vmatpush1.bf16.msra.mxu0 0
  %647 = vmatprep.subr.bf16.mxu0 0
  %648 = vmatpush1.bf16.msra.mxu0 0
  %649 = vmatprep.subr.bf16.mxu0 0
  %650 = vmatpush1.bf16.msra.mxu0 0
  %651 = vmatprep.subr.bf16.mxu0 0
  %652 = vmatpush1.bf16.msra.mxu0 0
  %653 = vmatprep.subr.bf16.mxu0 0
  %654 = vmatpush1.bf16.msra.mxu0 0
  %655 = vmatprep.subr.bf16.mxu0 0
  %656 = vmatpush1.bf16.msra.mxu0 0
  %657 = vmatprep.subr.bf16.mxu0 0
  %658 = vmatpush1.bf16.msra.mxu0 0
  %659 = vmatprep.subr.bf16.mxu0 0
  %660 = vmatpush1.bf16.msra.mxu0 0
  %661 = vmatprep.subr.bf16.mxu0 0
  %662 = vmatpush1.bf16.msra.mxu0 0
  %663 = vmatprep.subr.bf16.mxu0 0
  %664 = vmatpush1.bf16.msra.mxu0 0
  %665 = vmatprep.subr.bf16.mxu0 0
  %666 = vmatpush1.bf16.msra.mxu0 0
  %667 = vmatprep.subr.bf16.mxu0 0
  %668 = vmatpush1.bf16.msra.mxu0 0
  %669 = vmatprep.mubr.bf16.mxu0 0
  %670 = vmatmul.mubr.bf16.gmra.mrb[0].mxu0 %v103
  %v671 = vpop.f32.mrb[0].mxu0
  %v672 = vadd.f32 0.0, %v671
  %v673 = vpop.f32.mrb[0].mxu0
  %v674 = vpop.f32.mrb[0].mxu0
  %v675 = vadd.f32 0.0, %v674
  %v676 = vpop.f32.mrb[0].mxu0
  %677 = vmatprep.mubr.bf16.mxu0 0
  %678 = vmatmul.mubr.bf16.gmra.mrb[0].mxu0 %v106
  %v679 = vpop.f32.mrb[0].mxu0
  %v680 = vadd.f32 0.0, %v679
  %v681 = vpop.f32.mrb[0].mxu0
  %v682 = vpop.f32.mrb[0].mxu0
  %v683 = vadd.f32 0.0, %v682
  %v684 = vpop.f32.mrb[0].mxu0
  %685 = vmatprep.mubr.bf16.mxu0 0
  %686 = vmatmul.mubr.bf16.gmra.mrb[0].mxu0 %v109
  %v687 = vpop.f32.mrb[0].mxu0
  %v688 = vadd.f32 0.0, %v687
  %v689 = vpop.f32.mrb[0].mxu0
  %v690 = vpop.f32.mrb[0].mxu0
  %v691 = vadd.f32 0.0, %v690
  %v692 = vpop.f32.mrb[0].mxu0
  %693 = vmatprep.mubr.bf16.mxu0 0
  %694 = vmatmul.mubr.bf16.gmra.mrb[0].mxu0 %v112
  %v695 = vpop.f32.mrb[0].mxu0
  %v696 = vadd.f32 0.0, %v695
  %v697 = vpop.f32.mrb[0].mxu0
  %v698 = vpop.f32.mrb[0].mxu0
  %v699 = vadd.f32 0.0, %v698
  %v700 = vpop.f32.mrb[0].mxu0
  %701 = vmatprep.mubr.bf16.mxu0 0
  %702 = vmatmul.mubr.bf16.gmra.mrb[0].mxu0 %v115
  %v703 = vpop.f32.mrb[0].mxu0
  %v704 = vadd.f32 0.0, %v703
  %v705 = vpop.f32.mrb[0].mxu0
  %v706 = vpop.f32.mrb[0].mxu0
  %v707 = vadd.f32 0.0, %v706
  %v708 = vpop.f32.mrb[0].mxu0
  %709 = vmatprep.mubr.bf16.mxu0 0
  %710 = vmatmul.mubr.bf16.gmra.mrb[0].mxu0 %v118
  %v711 = vpop.f32.mrb[0].mxu0
  %v712 = vadd.f32 0.0, %v711
  %v713 = vpop.f32.mrb[0].mxu0
  %v714 = vpop.f32.mrb[0].mxu0
  %v715 = vadd.f32 0.0, %v714
  %v716 = vpop.f32.mrb[0].mxu0
  %717 = vmatprep.mubr.bf16.mxu0 0
  %718 = vmatmul.mubr.bf16.gmra.mrb[0].mxu0 %v121
  %v719 = vpop.f32.mrb[0].mxu0
  %v720 = vadd.f32 0.0, %v719
  %v721 = vpop.f32.mrb[0].mxu0
  %v722 = vpop.f32.mrb[0].mxu0
  %v723 = vadd.f32 0.0, %v722
  %v724 = vpop.f32.mrb[0].mxu0
  %725 = vmatprep.mubr.bf16.mxu0 0
  %726 = vmatmul.mubr.bf16.gmra.mrb[0].mxu0 %v124
  %v727 = vpop.f32.mrb[0].mxu0
  %v728 = vadd.f32 0.0, %v727
  %v729 = vpop.f32.mrb[0].mxu0
  %v730 = vpop.f32.mrb[0].mxu0
  %v731 = vadd.f32 0.0, %v730
  %v732 = vpop.f32.mrb[0].mxu0
  %733 = vmatprep.mubr.bf16.mxu0 0
  %734 = vmatmul.mubr.bf16.gmra.mrb[0].mxu0 %v127
  %v735 = vpop.f32.mrb[0].mxu0
  %v736 = vadd.f32 0.0, %v735
  %v737 = vpop.f32.mrb[0].mxu0
  %v738 = vpop.f32.mrb[0].mxu0
  %v739 = vadd.f32 0.0, %v738
  %v740 = vpop.f32.mrb[0].mxu0
  %741 = vmatprep.mubr.bf16.mxu0 0
  %742 = vmatmul.mubr.bf16.gmra.mrb[0].mxu0 %v130
  %v743 = vpop.f32.mrb[0].mxu0
  %v744 = vadd.f32 0.0, %v743
  %v745 = vpop.f32.mrb[0].mxu0
  %v746 = vpop.f32.mrb[0].mxu0
  %v747 = vadd.f32 0.0, %v746
  %v748 = vpop.f32.mrb[0].mxu0
  %749 = vmatprep.mubr.bf16.mxu0 0
  %750 = vmatmul.mubr.bf16.gmra.mrb[0].mxu0 %v133
  %v751 = vpop.f32.mrb[0].mxu0
  %v752 = vadd.f32 0.0, %v751
  %v753 = vpop.f32.mrb[0].mxu0
  %v754 = vpop.f32.mrb[0].mxu0
  %v755 = vpop.f32.mrb[0].mxu0
  %756 = vdwg.mxu0
  %v757 = vrot.slane %v672, 2
  %v758 = vrot.slane %v675, 2
  %v759 = vrot.slane %v680, 2
  %v760 = vrot.slane %v683, 2
  %v761 = vrot.slane %v688, 2
  %v762 = vrot.slane %v691, 2
  %v763 = vrot.slane %v696, 2
  %v764 = vrot.slane %v699, 2
  %v765 = vrot.slane %v704, 2
  %v766 = vrot.slane %v707, 2
  %v767 = vrot.slane %v712, 2
  %v768 = vrot.slane %v715, 2
  %v769 = vrot.slane %v720, 2
  %v770 = vrot.slane %v723, 2
  %v771 = vrot.slane %v728, 2
  %v772 = vrot.slane %v731, 2
  %v773 = vrot.slane %v736, 2
  %v774 = vrot.slane %v739, 2
  %v775 = vrot.slane %v744, 2
  %v776 = vrot.slane %v747, 2
  %v777 = vrot.slane %v752, 2
  %vm778 = vcmp.lt.s32.totalorder %v281, 6
  %v779 = vsel %vm778, %v776, %v777
  %v780 = vsel %vm778, %v775, %v776
  %v781 = vsel %vm778, %v774, %v775
  %v782 = vsel %vm778, %v773, %v774
  %v783 = vsel %vm778, %v772, %v773
  %v784 = vsel %vm778, %v771, %v772
  %v785 = vsel %vm778, %v770, %v771
  %v786 = vsel %vm778, %v769, %v770
  %v787 = vsel %vm778, %v768, %v769
  %v788 = vsel %vm778, %v767, %v768
  %v789 = vsel %vm778, %v766, %v767
  %v790 = vsel %vm778, %v765, %v766
  %v791 = vsel %vm778, %v764, %v765
  %v792 = vsel %vm778, %v763, %v764
  %v793 = vsel %vm778, %v762, %v763
  %v794 = vsel %vm778, %v761, %v762
  %v795 = vsel %vm778, %v760, %v761
  %v796 = vsel %vm778, %v759, %v760
  %v797 = vsel %vm778, %v758, %v759
  %v798 = vsel %vm778, %v757, %v758
  %v799 = vsel %vm778, %v777, %v757
  %v800 = vadd.f32 %v605, %v797
  %v801 = vadd.f32 %v606, %v796
  %v802 = vadd.f32 %v607, %v795
  %v803 = vadd.f32 %v608, %v794
  %v804 = vadd.f32 %v609, %v793
  %v805 = vadd.f32 %v610, %v792
  %v806 = vadd.f32 %v611, %v791
  %v807 = vadd.f32 %v612, %v790
  %v808 = vadd.f32 %v613, %v789
  %v809 = vadd.f32 %v614, %v788
  %v810 = vadd.f32 %v615, %v787
  %v811 = vadd.f32 %v616, %v786
  %v812 = vadd.f32 %v617, %v785
  %v813 = vadd.f32 %v618, %v784
  %v814 = vadd.f32 %v619, %v783
  %v815 = vadd.f32 %v620, %v782
  %v816 = vadd.f32 %v621, %v781
  %v817 = vadd.f32 %v622, %v780
  %v818 = vadd.f32 %v623, %v779
  %v819 = vadd.f32 %v624, %v799
  %v820 = vadd.f32 %v625, %v798
  %v821 = vld [vmem:[%s2] sm:$0xff]
  %v822 = vld [vmem:[%s2 + $0x8] sm:$0xff]
  %v823 = vld [vmem:[%s2 + $0x10] sm:$0xff]
  %v824 = vld [vmem:[%s2 + $0x18] sm:$0xff]
  %v825 = vld [vmem:[%s2 + $0x20] sm:$0xff]
  %v826 = vld [vmem:[%s2 + $0x28] sm:$0xff]
  %v827 = vld [vmem:[%s2 + $0x30] sm:$0xff]
  %v828 = vld [vmem:[%s2 + $0x38] sm:$0xff]
  %v829 = vld [vmem:[%s2 + $0x40] sm:$0xff]
  %v830 = vld [vmem:[%s2 + $0x48] sm:$0xff]
  %v831 = vld [vmem:[%s2 + $0x50] sm:$0xff]
  %v832 = vld [vmem:[%s2 + $0x58] sm:$0xff]
  %v833 = vld [vmem:[%s2 + $0x60] sm:$0xff]
  %v834 = vld [vmem:[%s2 + $0x68] sm:$0xff]
  %v835 = vld [vmem:[%s2 + $0x70] sm:$0xff]
  %v836 = vld [vmem:[%s2 + $0x78] sm:$0xff]
  %v837 = vld [vmem:[%s2 + $0x80] sm:$0xff]
  %v838 = vld [vmem:[%s2 + $0x88] sm:$0xff]
  %v839 = vld [vmem:[%s2 + $0x90] sm:$0xff]
  %v840 = vld [vmem:[%s2 + $0x98] sm:$0xff]
  %v841 = vld [vmem:[%s2 + $0xa0] sm:$0xff]
  %843 = vset.pattern.permute.xlu0 0
  %844 = vperm.xlu0 %843, %v821
  %v845 = vpop.permute.xlu0 %844
  %848 = vset.pattern.permute.xlu0 0
  %849 = vperm.xlu0 %848, %v822
  %v850 = vpop.permute.xlu0 %849
  %853 = vset.pattern.permute.xlu0 0
  %854 = vperm.xlu0 %853, %v823
  %v855 = vpop.permute.xlu0 %854
  %858 = vset.pattern.permute.xlu0 0
  %859 = vperm.xlu0 %858, %v824
  %v860 = vpop.permute.xlu0 %859
  %863 = vset.pattern.permute.xlu0 0
  %864 = vperm.xlu0 %863, %v825
  %v865 = vpop.permute.xlu0 %864
  %868 = vset.pattern.permute.xlu0 0
  %869 = vperm.xlu0 %868, %v826
  %v870 = vpop.permute.xlu0 %869
  %873 = vset.pattern.permute.xlu0 0
  %874 = vperm.xlu0 %873, %v827
  %v875 = vpop.permute.xlu0 %874
  %878 = vset.pattern.permute.xlu0 0
  %879 = vperm.xlu0 %878, %v828
  %v880 = vpop.permute.xlu0 %879
  %883 = vset.pattern.permute.xlu0 0
  %884 = vperm.xlu0 %883, %v829
  %v885 = vpop.permute.xlu0 %884
  %888 = vset.pattern.permute.xlu0 0
  %889 = vperm.xlu0 %888, %v830
  %v890 = vpop.permute.xlu0 %889
  %893 = vset.pattern.permute.xlu0 0
  %894 = vperm.xlu0 %893, %v831
  %v895 = vpop.permute.xlu0 %894
  %898 = vset.pattern.permute.xlu0 0
  %899 = vperm.xlu0 %898, %v832
  %v900 = vpop.permute.xlu0 %899
  %903 = vset.pattern.permute.xlu0 0
  %904 = vperm.xlu0 %903, %v833
  %v905 = vpop.permute.xlu0 %904
  %908 = vset.pattern.permute.xlu0 0
  %909 = vperm.xlu0 %908, %v834
  %v910 = vpop.permute.xlu0 %909
  %913 = vset.pattern.permute.xlu0 0
  %914 = vperm.xlu0 %913, %v835
  %v915 = vpop.permute.xlu0 %914
  %918 = vset.pattern.permute.xlu0 0
  %919 = vperm.xlu0 %918, %v836
  %v920 = vpop.permute.xlu0 %919
  %923 = vset.pattern.permute.xlu0 0
  %924 = vperm.xlu0 %923, %v837
  %v925 = vpop.permute.xlu0 %924
  %928 = vset.pattern.permute.xlu0 0
  %929 = vperm.xlu0 %928, %v838
  %v930 = vpop.permute.xlu0 %929
  %933 = vset.pattern.permute.xlu0 0
  %934 = vperm.xlu0 %933, %v839
  %v935 = vpop.permute.xlu0 %934
  %938 = vset.pattern.permute.xlu0 0
  %939 = vperm.xlu0 %938, %v840
  %v940 = vpop.permute.xlu0 %939
  %943 = vset.pattern.permute.xlu0 0
  %944 = vperm.xlu0 %943, %v841
  %v945 = vpop.permute.xlu0 %944
  %v947 = vmul.f32 %v800, %v845
  %v948 = vmul.f32 %v801, %v850
  %v949 = vmul.f32 %v802, %v855
  %v950 = vmul.f32 %v803, %v860
  %v951 = vmul.f32 %v804, %v865
  %v952 = vmul.f32 %v805, %v870
  %v953 = vmul.f32 %v806, %v875
  %v954 = vmul.f32 %v807, %v880
  %v955 = vmul.f32 %v808, %v885
  %v956 = vmul.f32 %v809, %v890
  %v957 = vmul.f32 %v810, %v895
  %v958 = vmul.f32 %v811, %v900
  %v959 = vmul.f32 %v812, %v905
  %v960 = vmul.f32 %v813, %v910
  %v961 = vmul.f32 %v814, %v915
  %v962 = vmul.f32 %v815, %v920
  %v963 = vmul.f32 %v816, %v925
  %v964 = vmul.f32 %v817, %v930
  %v965 = vmul.f32 %v818, %v935
  %v966 = vmul.f32 %v819, %v940
  %v967 = vmul.f32 %v820, %v945
  %vm968 = vcmask 130048
  %v969 = vsel %vm968, %v947, 0.0
  %v970 = vsel %vm968, %v948, 0.0
  %v971 = vadd.f32 %v969, %v970
  %v972 = vsel %vm968, %v949, 0.0
  %v973 = vadd.f32 %v971, %v972
  %v974 = vsel %vm968, %v950, 0.0
  %v975 = vadd.f32 %v973, %v974
  %v976 = vsel %vm968, %v951, 0.0
  %v977 = vadd.f32 %v975, %v976
  %v978 = vsel %vm968, %v952, 0.0
  %v979 = vadd.f32 %v977, %v978
  %v980 = vsel %vm968, %v953, 0.0
  %v981 = vadd.f32 %v979, %v980
  %v982 = vsel %vm968, %v954, 0.0
  %v983 = vadd.f32 %v981, %v982
  %v984 = vsel %vm968, %v955, 0.0
  %v985 = vadd.f32 %v983, %v984
  %v986 = vsel %vm968, %v956, 0.0
  %v987 = vadd.f32 %v985, %v986
  %v988 = vsel %vm968, %v957, 0.0
  %v989 = vadd.f32 %v987, %v988
  %v990 = vsel %vm968, %v958, 0.0
  %v991 = vadd.f32 %v989, %v990
  %v992 = vsel %vm968, %v959, 0.0
  %v993 = vadd.f32 %v991, %v992
  %v994 = vsel %vm968, %v960, 0.0
  %v995 = vadd.f32 %v993, %v994
  %v996 = vsel %vm968, %v961, 0.0
  %v997 = vadd.f32 %v995, %v996
  %v998 = vsel %vm968, %v962, 0.0
  %v999 = vadd.f32 %v997, %v998
  %v1000 = vsel %vm968, %v963, 0.0
  %v1001 = vadd.f32 %v999, %v1000
  %v1002 = vsel %vm968, %v964, 0.0
  %v1003 = vadd.f32 %v1001, %v1002
  %v1004 = vsel %vm968, %v965, 0.0
  %v1005 = vadd.f32 %v1003, %v1004
  %v1006 = vsel %vm968, %v966, 0.0
  %v1007 = vadd.f32 %v1005, %v1006
  %v1008 = vsel %vm968, %v967, 0.0
  %v1009 = vadd.f32 %v1007, %v1008
  %v1010 = vrot.slane %v1009, 4
  %v1011 = vadd.f32 %v1009, %v1010
  %v1012 = vrot.slane %v1011, 2
  %v1013 = vadd.f32 %v1011, %v1012
  %v1014 = vrot.slane %v1013, 1
  %v1015 = vadd.f32 %v1013, %v1014
  %v1016 = vmul.f32 %v947, %v800
  %v1017 = vmul.f32 %v948, %v801
  %v1018 = vmul.f32 %v949, %v802
  %v1019 = vmul.f32 %v950, %v803
  %v1020 = vmul.f32 %v951, %v804
  %v1021 = vmul.f32 %v952, %v805
  %v1022 = vmul.f32 %v953, %v806
  %v1023 = vmul.f32 %v954, %v807
  %v1024 = vmul.f32 %v955, %v808
  %v1025 = vmul.f32 %v956, %v809
  %v1026 = vmul.f32 %v957, %v810
  %v1027 = vmul.f32 %v958, %v811
  %v1028 = vmul.f32 %v959, %v812
  %v1029 = vmul.f32 %v960, %v813
  %v1030 = vmul.f32 %v961, %v814
  %v1031 = vmul.f32 %v962, %v815
  %v1032 = vmul.f32 %v963, %v816
  %v1033 = vmul.f32 %v964, %v817
  %v1034 = vmul.f32 %v965, %v818
  %v1035 = vmul.f32 %v966, %v819
  %v1036 = vmul.f32 %v967, %v820
  %v1037 = vsel %vm968, %v1016, 0.0
  %v1038 = vsel %vm968, %v1017, 0.0
  %v1039 = vadd.f32 %v1037, %v1038
  %v1040 = vsel %vm968, %v1018, 0.0
  %v1041 = vadd.f32 %v1039, %v1040
  %v1042 = vsel %vm968, %v1019, 0.0
  %v1043 = vadd.f32 %v1041, %v1042
  %v1044 = vsel %vm968, %v1020, 0.0
  %v1045 = vadd.f32 %v1043, %v1044
  %v1046 = vsel %vm968, %v1021, 0.0
  %v1047 = vadd.f32 %v1045, %v1046
  %v1048 = vsel %vm968, %v1022, 0.0
  %v1049 = vadd.f32 %v1047, %v1048
  %v1050 = vsel %vm968, %v1023, 0.0
  %v1051 = vadd.f32 %v1049, %v1050
  %v1052 = vsel %vm968, %v1024, 0.0
  %v1053 = vadd.f32 %v1051, %v1052
  %v1054 = vsel %vm968, %v1025, 0.0
  %v1055 = vadd.f32 %v1053, %v1054
  %v1056 = vsel %vm968, %v1026, 0.0
  %v1057 = vadd.f32 %v1055, %v1056
  %v1058 = vsel %vm968, %v1027, 0.0
  %v1059 = vadd.f32 %v1057, %v1058
  %v1060 = vsel %vm968, %v1028, 0.0
  %v1061 = vadd.f32 %v1059, %v1060
  %v1062 = vsel %vm968, %v1029, 0.0
  %v1063 = vadd.f32 %v1061, %v1062
  %v1064 = vsel %vm968, %v1030, 0.0
  %v1065 = vadd.f32 %v1063, %v1064
  %v1066 = vsel %vm968, %v1031, 0.0
  %v1067 = vadd.f32 %v1065, %v1066
  %v1068 = vsel %vm968, %v1032, 0.0
  %v1069 = vadd.f32 %v1067, %v1068
  %v1070 = vsel %vm968, %v1033, 0.0
  %v1071 = vadd.f32 %v1069, %v1070
  %v1072 = vsel %vm968, %v1034, 0.0
  %v1073 = vadd.f32 %v1071, %v1072
  %v1074 = vsel %vm968, %v1035, 0.0
  %v1075 = vadd.f32 %v1073, %v1074
  %v1076 = vsel %vm968, %v1036, 0.0
  %v1077 = vadd.f32 %v1075, %v1076
  %v1078 = vrot.slane %v1077, 4
  %v1079 = vadd.f32 %v1077, %v1078
  %v1080 = vrot.slane %v1079, 2
  %v1081 = vadd.f32 %v1079, %v1080
  %v1082 = vrot.slane %v1081, 1
  %v1083 = vadd.f32 %v1081, %v1082
  %vm1084 = vcmask 1040384
  %v1085 = vsel %vm1084, %v1015, 0.0
  %1086 = vst.msk [vmem:[%s3] sm:$0xff] %vm968, %v1085
  %v1087 = vsel %vm1084, %v1083, 0.0
  %1088 = vst.msk [vmem:[%s4] sm:$0xff] %vm968, %v1087
  // Predicated region
  $region14: #{patch_embed_forward.4} parent=0 // pred_check
    _
  $region15: #{patch_embed_forward.4} parent=0 // pred_check_branch
    %1090 = sbr.rel (0) target = $region17
  $region16: #{patch_embed_forward.4} parent=0 // pred_region
    _
  $region17: #{patch_embed_forward.4} parent=0 // pred_fallthru
    _
  // Predicated region
  $region18: #{patch_embed_forward.4} parent=0 // pred_check
    _
  $region19: #{patch_embed_forward.4} parent=0 // pred_check_branch
    %1092 = sbr.rel (0) target = $region21
  $region20: #{patch_embed_forward.4} parent=0 // pred_region
    _
  $region21: #{patch_embed_forward.4} parent=0 // pred_fallthru
    _
  // Predicated region
  $region22: #{patch_embed_forward.4} parent=0 // pred_check
    _
  $region23: #{patch_embed_forward.4} parent=0 // pred_check_branch
    %1094 = sbr.rel (0) target = $region25
  $region24: #{patch_embed_forward.4} parent=0 // pred_region
    _
  $region25: #{patch_embed_forward.4} parent=0 // pred_fallthru
    _
  // Predicated region
  $region26: #{patch_embed_forward.4} parent=0 // pred_check
    _
  $region27: #{patch_embed_forward.4} parent=0 // pred_check_branch
    %1096 = sbr.rel (0) target = $region29
  $region28: #{patch_embed_forward.4} parent=0 // pred_region
    _
  $region29: #{patch_embed_forward.4} parent=0 // pred_fallthru
    _

// kernel: patch_embed_forward.6
$region0: #{patch_embed_forward.6}
  #allocation0 [shape = 'u32[]', space=smem, size = 0x4, offset = 0x4, fixed_abs, tag = 'smem constant byte address 0x4 - core index']
  #allocation1 [shape = 'u32[144,128]{1,0:T(1,128)}', space=vmem, size = 0x12000, scoped, tag = 'internal scratch']
  %s0 = inlined_call_operand.vmem [shape: bf16[56,64], index: 0, kind: input, shape index: {}]
  %s1 = inlined_call_operand.vmem [shape: bf16[4,64,32], index: 1, kind: input, shape index: {}]
  %s2 = inlined_call_operand.vmem [shape: f32[56,1], index: 2, kind: input, shape index: {}]
  %s3 = inlined_call_operand.vmem [shape: f32[8,32], index: 3, kind: output, shape index: {0}]
  %s4 = inlined_call_operand.vmem [shape: f32[8,32], index: 4, kind: output, shape index: {1}]
  %5 = xla_tuple %s3, %s4
  %s6 = sld [smem:[#allocation0]]
  $region30: #{patch_embed_forward.6} parent=0
    _
  %s8 = ssub.s32 1, %s6
  %s9 = scalar_select 0, %s8, %s6
  // Predicated region
  $region2: #{patch_embed_forward.6} parent=0 // pred_check
    _
  $region3: #{patch_embed_forward.6} parent=0 // pred_check_branch
    %11 = sbr.rel (0) target = $region5
  $region4: #{patch_embed_forward.6} parent=0 // pred_region
    _
  $region5: #{patch_embed_forward.6} parent=0 // pred_fallthru
    _
  // Predicated region
  $region6: #{patch_embed_forward.6} parent=0 // pred_check
    _
  $region7: #{patch_embed_forward.6} parent=0 // pred_check_branch
    %13 = sbr.rel (0) target = $region9
  $region8: #{patch_embed_forward.6} parent=0 // pred_region
    _
  $region9: #{patch_embed_forward.6} parent=0 // pred_fallthru
    _
  // Predicated region
  $region10: #{patch_embed_forward.6} parent=0 // pred_check
    _
  $region11: #{patch_embed_forward.6} parent=0 // pred_check_branch
    %15 = sbr.rel (0) target = $region13
  $region12: #{patch_embed_forward.6} parent=0 // pred_region
    _
  $region13: #{patch_embed_forward.6} parent=0 // pred_fallthru
    _
  %v17 = vld [vmem:[%s0] sm:$0xf]
  %v18 = vld [vmem:[%s0 + $0x4] sm:$0xf]
  %v19 = vld [vmem:[%s0 + $0x8] sm:$0xf]
  %v20 = vld [vmem:[%s0 + $0xc] sm:$0xf]
  %v21 = vld [vmem:[%s0 + $0x10] sm:$0xf]
  %v22 = vld [vmem:[%s0 + $0x14] sm:$0xf]
  %v23 = vld [vmem:[%s0 + $0x18] sm:$0xf]
  %v24 = vld [vmem:[%s1] sm:$0xf]
  %v25 = vld [vmem:[%s1 + $0x4] sm:$0xf]
  %v26 = vld [vmem:[%s1 + $0x8] sm:$0xf]
  %v27 = vld [vmem:[%s1 + $0xc] sm:$0xf]
  %v28 = vld [vmem:[%s1 + $0x10] sm:$0xf]
  %v29 = vld [vmem:[%s1 + $0x14] sm:$0xf]
  %v30 = vld [vmem:[%s1 + $0x18] sm:$0xf]
  %v31 = vld [vmem:[%s1 + $0x1c] sm:$0xf]
  %s32 = scalar_lea.vmem %s1, 32
  %v33 = vld [vmem:[%s32] sm:$0xf]
  %v34 = vld [vmem:[%s32 + $0x4] sm:$0xf]
  %v35 = vld [vmem:[%s32 + $0x8] sm:$0xf]
  %v36 = vld [vmem:[%s32 + $0xc] sm:$0xf]
  %v37 = vld [vmem:[%s32 + $0x10] sm:$0xf]
  %v38 = vld [vmem:[%s32 + $0x14] sm:$0xf]
  %v39 = vld [vmem:[%s32 + $0x18] sm:$0xf]
  %v40 = vld [vmem:[%s32 + $0x1c] sm:$0xf]
  %v48 = vunpack.c.l.b16 %v17
  %v49 = vunpack.c.l.b16 %v18
  %v50 = vunpack.c.l.b16 %v19
  %v51 = vunpack.c.l.b16 %v20
  %v52 = vunpack.c.l.b16 %v21
  %v53 = vunpack.c.l.b16 %v22
  %v54 = vunpack.c.l.b16 %v23
  %v55 = vpack.c.b16 %v49, %v48
  %v56 = vpack.c.b16 %v51, %v50
  %v57 = vpack.c.b16 %v53, %v52
  %v58 = vpack.c.b16 %v54, %v54
  %v67 = vunpack.c.l.b16 %v33
  %v68 = vunpack.c.l.b16 %v34
  %v69 = vunpack.c.l.b16 %v35
  %v70 = vunpack.c.l.b16 %v36
  %v71 = vunpack.c.l.b16 %v37
  %v72 = vunpack.c.l.b16 %v38
  %v73 = vunpack.c.l.b16 %v39
  %v74 = vunpack.c.l.b16 %v40
  %v75 = vpack.c.b16 %v68, %v67
  %v76 = vpack.c.b16 %v70, %v69
  %v77 = vpack.c.b16 %v72, %v71
  %v78 = vpack.c.b16 %v74, %v73
  %vm83 = vcmask 523264
  %v85 = vsel %vm83, %v55, 0
  %v88 = vsel %vm83, %v56, 0
  %v91 = vsel %vm83, %v57, 0
  %v94 = vsel %vm83, %v58, 0
  %96 = vmatprep.subr.bf16.mxu0 0
  %97 = vmatpush1.bf16.msra.mxu0 %v75
  %98 = vmatprep.subr.bf16.mxu0 0
  %99 = vmatpush1.bf16.msra.mxu0 %v76
  %100 = vmatprep.subr.bf16.mxu0 0
  %101 = vmatpush1.bf16.msra.mxu0 %v77
  %102 = vmatprep.subr.bf16.mxu0 0
  %103 = vmatpush1.bf16.msra.mxu0 %v78
  %104 = vmatprep.subr.bf16.mxu0 0
  %105 = vmatpush1.bf16.msra.mxu0 0
  %106 = vmatprep.subr.bf16.mxu0 0
  %107 = vmatpush1.bf16.msra.mxu0 0
  %108 = vmatprep.subr.bf16.mxu0 0
  %109 = vmatpush1.bf16.msra.mxu0 0
  %110 = vmatprep.subr.bf16.mxu0 0
  %111 = vmatpush1.bf16.msra.mxu0 0
  %112 = vmatprep.subr.bf16.mxu0 0
  %113 = vmatpush1.bf16.msra.mxu0 0
  %114 = vmatprep.subr.bf16.mxu0 0
  %115 = vmatpush1.bf16.msra.mxu0 0
  %116 = vmatprep.subr.bf16.mxu0 0
  %117 = vmatpush1.bf16.msra.mxu0 0
  %118 = vmatprep.subr.bf16.mxu0 0
  %119 = vmatpush1.bf16.msra.mxu0 0
  %120 = vmatprep.subr.bf16.mxu0 0
  %121 = vmatpush1.bf16.msra.mxu0 0
  %122 = vmatprep.subr.bf16.mxu0 0
  %123 = vmatpush1.bf16.msra.mxu0 0
  %124 = vmatprep.subr.bf16.mxu0 0
  %125 = vmatpush1.bf16.msra.mxu0 0
  %126 = vmatprep.subr.bf16.mxu0 0
  %127 = vmatpush1.bf16.msra.mxu0 0
  %128 = vmatprep.mubr.bf16.mxu0 0
  %129 = vmatmul.mubr.bf16.gmra.mrb[0].mxu0 %v85
  %v130 = vpop.f32.mrb[0].mxu0
  %v131 = vadd.f32 0.0, %v130
  %v132 = vpop.f32.mrb[0].mxu0
  %v133 = vpop.f32.mrb[0].mxu0
  %v134 = vadd.f32 0.0, %v133
  %v135 = vpop.f32.mrb[0].mxu0
  %136 = vmatprep.mubr.bf16.mxu0 0
  %137 = vmatmul.mubr.bf16.gmra.mrb[0].mxu0 %v88
  %v138 = vpop.f32.mrb[0].mxu0
  %v139 = vadd.f32 0.0, %v138
  %v140 = vpop.f32.mrb[0].mxu0
  %v141 = vpop.f32.mrb[0].mxu0
  %v142 = vadd.f32 0.0, %v141
  %v143 = vpop.f32.mrb[0].mxu0
  %144 = vmatprep.mubr.bf16.mxu0 0
  %145 = vmatmul.mubr.bf16.gmra.mrb[0].mxu0 %v91
  %v146 = vpop.f32.mrb[0].mxu0
  %v147 = vadd.f32 0.0, %v146
  %v148 = vpop.f32.mrb[0].mxu0
  %v149 = vpop.f32.mrb[0].mxu0
  %v150 = vadd.f32 0.0, %v149
  %v151 = vpop.f32.mrb[0].mxu0
  %152 = vmatprep.mubr.bf16.mxu0 0
  %153 = vmatmul.mubr.bf16.gmra.mrb[0].mxu0 %v94
  %v154 = vpop.f32.mrb[0].mxu0
  %v155 = vadd.f32 0.0, %v154
  %v156 = vpop.f32.mrb[0].mxu0
  %v157 = vpop.f32.mrb[0].mxu0
  %v158 = vpop.f32.mrb[0].mxu0
  %159 = vdwg.mxu0
  %v160 = vrot.slane %v131, 1
  %v161 = vrot.slane %v134, 1
  %v162 = vrot.slane %v139, 1
  %v163 = vrot.slane %v142, 1
  %v164 = vrot.slane %v147, 1
  %v165 = vrot.slane %v150, 1
  %v166 = vrot.slane %v155, 1
  %v167 = vlaneseq
  %v168 = vshrl.u32 %v167, 7
  %vm169 = vcmp.lt.s32.totalorder %v168, 7
  %v170 = vsel %vm169, %v165, %v166
  %v171 = vsel %vm169, %v164, %v165
  %v172 = vsel %vm169, %v163, %v164
  %v173 = vsel %vm169, %v162, %v163
  %v174 = vsel %vm169, %v161, %v162
  %v175 = vsel %vm169, %v160, %v161
  %v176 = vsel %vm169, %v166, %v160
  %v185 = vunpack.c.l.b16 %v24
  %v186 = vunpack.c.l.b16 %v25
  %v187 = vunpack.c.l.b16 %v26
  %v188 = vunpack.c.l.b16 %v27
  %v189 = vunpack.c.l.b16 %v28
  %v190 = vunpack.c.l.b16 %v29
  %v191 = vunpack.c.l.b16 %v30
  %v192 = vunpack.c.l.b16 %v31
  %v193 = vpack.c.b16 %v186, %v185
  %v194 = vpack.c.b16 %v188, %v187
  %v195 = vpack.c.b16 %v190, %v189
  %v196 = vpack.c.b16 %v192, %v191
  %201 = vmatprep.subr.bf16.mxu0 0
  %202 = vmatpush1.bf16.msra.mxu0 %v193
  %203 = vmatprep.subr.bf16.mxu0 0
  %204 = vmatpush1.bf16.msra.mxu0 %v194
  %205 = vmatprep.subr.bf16.mxu0 0
  %206 = vmatpush1.bf16.msra.mxu0 %v195
  %207 = vmatprep.subr.bf16.mxu0 0
  %208 = vmatpush1.bf16.msra.mxu0 %v196
  %209 = vmatprep.subr.bf16.mxu0 0
  %210 = vmatpush1.bf16.msra.mxu0 0
  %211 = vmatprep.subr.bf16.mxu0 0
  %212 = vmatpush1.bf16.msra.mxu0 0
  %213 = vmatprep.subr.bf16.mxu0 0
  %214 = vmatpush1.bf16.msra.mxu0 0
  %215 = vmatprep.subr.bf16.mxu0 0
  %216 = vmatpush1.bf16.msra.mxu0 0
  %217 = vmatprep.subr.bf16.mxu0 0
  %218 = vmatpush1.bf16.msra.mxu0 0
  %219 = vmatprep.subr.bf16.mxu0 0
  %220 = vmatpush1.bf16.msra.mxu0 0
  %221 = vmatprep.subr.bf16.mxu0 0
  %222 = vmatpush1.bf16.msra.mxu0 0
  %223 = vmatprep.subr.bf16.mxu0 0
  %224 = vmatpush1.bf16.msra.mxu0 0
  %225 = vmatprep.subr.bf16.mxu0 0
  %226 = vmatpush1.bf16.msra.mxu0 0
  %227 = vmatprep.subr.bf16.mxu0 0
  %228 = vmatpush1.bf16.msra.mxu0 0
  %229 = vmatprep.subr.bf16.mxu0 0
  %230 = vmatpush1.bf16.msra.mxu0 0
  %231 = vmatprep.subr.bf16.mxu0 0
  %232 = vmatpush1.bf16.msra.mxu0 0
  %233 = vmatprep.mubr.bf16.mxu0 0
  %234 = vmatmul.mubr.bf16.gmra.mrb[0].mxu0 %v85
  %v235 = vpop.f32.mrb[0].mxu0
  %v236 = vadd.f32 %v175, %v235
  %v237 = vpop.f32.mrb[0].mxu0
  %v238 = vpop.f32.mrb[0].mxu0
  %v239 = vadd.f32 %v174, %v238
  %v240 = vpop.f32.mrb[0].mxu0
  %241 = vmatprep.mubr.bf16.mxu0 0
  %242 = vmatmul.mubr.bf16.gmra.mrb[0].mxu0 %v88
  %v243 = vpop.f32.mrb[0].mxu0
  %v244 = vadd.f32 %v173, %v243
  %v245 = vpop.f32.mrb[0].mxu0
  %v246 = vpop.f32.mrb[0].mxu0
  %v247 = vadd.f32 %v172, %v246
  %v248 = vpop.f32.mrb[0].mxu0
  %249 = vmatprep.mubr.bf16.mxu0 0
  %250 = vmatmul.mubr.bf16.gmra.mrb[0].mxu0 %v91
  %v251 = vpop.f32.mrb[0].mxu0
  %v252 = vadd.f32 %v171, %v251
  %v253 = vpop.f32.mrb[0].mxu0
  %v254 = vpop.f32.mrb[0].mxu0
  %v255 = vadd.f32 %v170, %v254
  %v256 = vpop.f32.mrb[0].mxu0
  %257 = vmatprep.mubr.bf16.mxu0 0
  %258 = vmatmul.mubr.bf16.gmra.mrb[0].mxu0 %v94
  %v259 = vpop.f32.mrb[0].mxu0
  %v260 = vadd.f32 %v176, %v259
  %v261 = vpop.f32.mrb[0].mxu0
  %v262 = vpop.f32.mrb[0].mxu0
  %v263 = vpop.f32.mrb[0].mxu0
  %264 = vdwg.mxu0
  %s265 = scalar_lea.vmem %s1, 64
  %v266 = vld [vmem:[%s265] sm:$0xf]
  %v267 = vld [vmem:[%s265 + $0x4] sm:$0xf]
  %v268 = vld [vmem:[%s265 + $0x8] sm:$0xf]
  %v269 = vld [vmem:[%s265 + $0xc] sm:$0xf]
  %v270 = vld [vmem:[%s265 + $0x10] sm:$0xf]
  %v271 = vld [vmem:[%s265 + $0x14] sm:$0xf]
  %v272 = vld [vmem:[%s265 + $0x18] sm:$0xf]
  %v273 = vld [vmem:[%s265 + $0x1c] sm:$0xf]
  %v282 = vunpack.c.l.b16 %v266
  %v283 = vunpack.c.l.b16 %v267
  %v284 = vunpack.c.l.b16 %v268
  %v285 = vunpack.c.l.b16 %v269
  %v286 = vunpack.c.l.b16 %v270
  %v287 = vunpack.c.l.b16 %v271
  %v288 = vunpack.c.l.b16 %v272
  %v289 = vunpack.c.l.b16 %v273
  %v290 = vpack.c.b16 %v283, %v282
  %v291 = vpack.c.b16 %v285, %v284
  %v292 = vpack.c.b16 %v287, %v286
  %v293 = vpack.c.b16 %v289, %v288
  %298 = vmatprep.subr.bf16.mxu0 0
  %299 = vmatpush1.bf16.msra.mxu0 %v290
  %300 = vmatprep.subr.bf16.mxu0 0
  %301 = vmatpush1.bf16.msra.mxu0 %v291
  %302 = vmatprep.subr.bf16.mxu0 0
  %303 = vmatpush1.bf16.msra.mxu0 %v292
  %304 = vmatprep.subr.bf16.mxu0 0
  %305 = vmatpush1.bf16.msra.mxu0 %v293
  %306 = vmatprep.subr.bf16.mxu0 0
  %307 = vmatpush1.bf16.msra.mxu0 0
  %308 = vmatprep.subr.bf16.mxu0 0
  %309 = vmatpush1.bf16.msra.mxu0 0
  %310 = vmatprep.subr.bf16.mxu0 0
  %311 = vmatpush1.bf16.msra.mxu0 0
  %312 = vmatprep.subr.bf16.mxu0 0
  %313 = vmatpush1.bf16.msra.mxu0 0
  %314 = vmatprep.subr.bf16.mxu0 0
  %315 = vmatpush1.bf16.msra.mxu0 0
  %316 = vmatprep.subr.bf16.mxu0 0
  %317 = vmatpush1.bf16.msra.mxu0 0
  %318 = vmatprep.subr.bf16.mxu0 0
  %319 = vmatpush1.bf16.msra.mxu0 0
  %320 = vmatprep.subr.bf16.mxu0 0
  %321 = vmatpush1.bf16.msra.mxu0 0
  %322 = vmatprep.subr.bf16.mxu0 0
  %323 = vmatpush1.bf16.msra.mxu0 0
  %324 = vmatprep.subr.bf16.mxu0 0
  %325 = vmatpush1.bf16.msra.mxu0 0
  %326 = vmatprep.subr.bf16.mxu0 0
  %327 = vmatpush1.bf16.msra.mxu0 0
  %328 = vmatprep.subr.bf16.mxu0 0
  %329 = vmatpush1.bf16.msra.mxu0 0
  %330 = vmatprep.mubr.bf16.mxu0 0
  %331 = vmatmul.mubr.bf16.gmra.mrb[0].mxu0 %v85
  %v332 = vpop.f32.mrb[0].mxu0
  %v333 = vadd.f32 0.0, %v332
  %v334 = vpop.f32.mrb[0].mxu0
  %v335 = vpop.f32.mrb[0].mxu0
  %v336 = vadd.f32 0.0, %v335
  %v337 = vpop.f32.mrb[0].mxu0
  %338 = vmatprep.mubr.bf16.mxu0 0
  %339 = vmatmul.mubr.bf16.gmra.mrb[0].mxu0 %v88
  %v340 = vpop.f32.mrb[0].mxu0
  %v341 = vadd.f32 0.0, %v340
  %v342 = vpop.f32.mrb[0].mxu0
  %v343 = vpop.f32.mrb[0].mxu0
  %v344 = vadd.f32 0.0, %v343
  %v345 = vpop.f32.mrb[0].mxu0
  %346 = vmatprep.mubr.bf16.mxu0 0
  %347 = vmatmul.mubr.bf16.gmra.mrb[0].mxu0 %v91
  %v348 = vpop.f32.mrb[0].mxu0
  %v349 = vadd.f32 0.0, %v348
  %v350 = vpop.f32.mrb[0].mxu0
  %v351 = vpop.f32.mrb[0].mxu0
  %v352 = vadd.f32 0.0, %v351
  %v353 = vpop.f32.mrb[0].mxu0
  %354 = vmatprep.mubr.bf16.mxu0 0
  %355 = vmatmul.mubr.bf16.gmra.mrb[0].mxu0 %v94
  %v356 = vpop.f32.mrb[0].mxu0
  %v357 = vadd.f32 0.0, %v356
  %v358 = vpop.f32.mrb[0].mxu0
  %v359 = vpop.f32.mrb[0].mxu0
  %v360 = vpop.f32.mrb[0].mxu0
  %361 = vdwg.mxu0
  %v362 = vrot.slane %v333, 5
  %v363 = vrot.slane %v336, 5
  %v364 = vrot.slane %v341, 5
  %v365 = vrot.slane %v344, 5
  %v366 = vrot.slane %v349, 5
  %v367 = vrot.slane %v352, 5
  %v368 = vrot.slane %v357, 5
  %vm369 = vcmp.lt.s32.totalorder %v168, 3
  %v370 = vsel %vm369, %v367, %v368
  %v371 = vsel %vm369, %v366, %v367
  %v372 = vsel %vm369, %v365, %v366
  %v373 = vsel %vm369, %v364, %v365
  %v374 = vsel %vm369, %v363, %v364
  %v375 = vsel %vm369, %v362, %v363
  %v376 = vsel %vm369, %v368, %v362
  %v377 = vadd.f32 %v236, %v375
  %v378 = vadd.f32 %v239, %v374
  %v379 = vadd.f32 %v244, %v373
  %v380 = vadd.f32 %v247, %v372
  %v381 = vadd.f32 %v252, %v371
  %v382 = vadd.f32 %v255, %v370
  %v383 = vadd.f32 %v260, %v376
  %s384 = scalar_lea.vmem %s1, 96
  %v385 = vld [vmem:[%s384] sm:$0xf]
  %v386 = vld [vmem:[%s384 + $0x4] sm:$0xf]
  %v387 = vld [vmem:[%s384 + $0x8] sm:$0xf]
  %v388 = vld [vmem:[%s384 + $0xc] sm:$0xf]
  %v389 = vld [vmem:[%s384 + $0x10] sm:$0xf]
  %v390 = vld [vmem:[%s384 + $0x14] sm:$0xf]
  %v391 = vld [vmem:[%s384 + $0x18] sm:$0xf]
  %v392 = vld [vmem:[%s384 + $0x1c] sm:$0xf]
  %v401 = vunpack.c.l.b16 %v385
  %v402 = vunpack.c.l.b16 %v386
  %v403 = vunpack.c.l.b16 %v387
  %v404 = vunpack.c.l.b16 %v388
  %v405 = vunpack.c.l.b16 %v389
  %v406 = vunpack.c.l.b16 %v390
  %v407 = vunpack.c.l.b16 %v391
  %v408 = vunpack.c.l.b16 %v392
  %v409 = vpack.c.b16 %v402, %v401
  %v410 = vpack.c.b16 %v404, %v403
  %v411 = vpack.c.b16 %v406, %v405
  %v412 = vpack.c.b16 %v408, %v407
  %417 = vmatprep.subr.bf16.mxu0 0
  %418 = vmatpush1.bf16.msra.mxu0 %v409
  %419 = vmatprep.subr.bf16.mxu0 0
  %420 = vmatpush1.bf16.msra.mxu0 %v410
  %421 = vmatprep.subr.bf16.mxu0 0
  %422 = vmatpush1.bf16.msra.mxu0 %v411
  %423 = vmatprep.subr.bf16.mxu0 0
  %424 = vmatpush1.bf16.msra.mxu0 %v412
  %425 = vmatprep.subr.bf16.mxu0 0
  %426 = vmatpush1.bf16.msra.mxu0 0
  %427 = vmatprep.subr.bf16.mxu0 0
  %428 = vmatpush1.bf16.msra.mxu0 0
  %429 = vmatprep.subr.bf16.mxu0 0
  %430 = vmatpush1.bf16.msra.mxu0 0
  %431 = vmatprep.subr.bf16.mxu0 0
  %432 = vmatpush1.bf16.msra.mxu0 0
  %433 = vmatprep.subr.bf16.mxu0 0
  %434 = vmatpush1.bf16.msra.mxu0 0
  %435 = vmatprep.subr.bf16.mxu0 0
  %436 = vmatpush1.bf16.msra.mxu0 0
  %437 = vmatprep.subr.bf16.mxu0 0
  %438 = vmatpush1.bf16.msra.mxu0 0
  %439 = vmatprep.subr.bf16.mxu0 0
  %440 = vmatpush1.bf16.msra.mxu0 0
  %441 = vmatprep.subr.bf16.mxu0 0
  %442 = vmatpush1.bf16.msra.mxu0 0
  %443 = vmatprep.subr.bf16.mxu0 0
  %444 = vmatpush1.bf16.msra.mxu0 0
  %445 = vmatprep.subr.bf16.mxu0 0
  %446 = vmatpush1.bf16.msra.mxu0 0
  %447 = vmatprep.subr.bf16.mxu0 0
  %448 = vmatpush1.bf16.msra.mxu0 0
  %449 = vmatprep.mubr.bf16.mxu0 0
  %450 = vmatmul.mubr.bf16.gmra.mrb[0].mxu0 %v85
  %v451 = vpop.f32.mrb[0].mxu0
  %v452 = vadd.f32 0.0, %v451
  %v453 = vpop.f32.mrb[0].mxu0
  %v454 = vpop.f32.mrb[0].mxu0
  %v455 = vadd.f32 0.0, %v454
  %v456 = vpop.f32.mrb[0].mxu0
  %457 = vmatprep.mubr.bf16.mxu0 0
  %458 = vmatmul.mubr.bf16.gmra.mrb[0].mxu0 %v88
  %v459 = vpop.f32.mrb[0].mxu0
  %v460 = vadd.f32 0.0, %v459
  %v461 = vpop.f32.mrb[0].mxu0
  %v462 = vpop.f32.mrb[0].mxu0
  %v463 = vadd.f32 0.0, %v462
  %v464 = vpop.f32.mrb[0].mxu0
  %465 = vmatprep.mubr.bf16.mxu0 0
  %466 = vmatmul.mubr.bf16.gmra.mrb[0].mxu0 %v91
  %v467 = vpop.f32.mrb[0].mxu0
  %v468 = vadd.f32 0.0, %v467
  %v469 = vpop.f32.mrb[0].mxu0
  %v470 = vpop.f32.mrb[0].mxu0
  %v471 = vadd.f32 0.0, %v470
  %v472 = vpop.f32.mrb[0].mxu0
  %473 = vmatprep.mubr.bf16.mxu0 0
  %474 = vmatmul.mubr.bf16.gmra.mrb[0].mxu0 %v94
  %v475 = vpop.f32.mrb[0].mxu0
  %v476 = vadd.f32 0.0, %v475
  %v477 = vpop.f32.mrb[0].mxu0
  %v478 = vpop.f32.mrb[0].mxu0
  %v479 = vpop.f32.mrb[0].mxu0
  %480 = vdwg.mxu0
  %v481 = vrot.slane %v452, 6
  %v482 = vrot.slane %v455, 6
  %v483 = vrot.slane %v460, 6
  %v484 = vrot.slane %v463, 6
  %v485 = vrot.slane %v468, 6
  %v486 = vrot.slane %v471, 6
  %v487 = vrot.slane %v476, 6
  %vm488 = vcmp.lt.s32.totalorder %v168, 2
  %v489 = vsel %vm488, %v486, %v487
  %v490 = vsel %vm488, %v485, %v486
  %v491 = vsel %vm488, %v484, %v485
  %v492 = vsel %vm488, %v483, %v484
  %v493 = vsel %vm488, %v482, %v483
  %v494 = vsel %vm488, %v481, %v482
  %v495 = vsel %vm488, %v487, %v481
  %v496 = vadd.f32 %v377, %v494
  %v497 = vadd.f32 %v378, %v493
  %v498 = vadd.f32 %v379, %v492
  %v499 = vadd.f32 %v380, %v491
  %v500 = vadd.f32 %v381, %v490
  %v501 = vadd.f32 %v382, %v489
  %v502 = vadd.f32 %v383, %v495
  %v503 = vld [vmem:[%s2] sm:$0xff]
  %v504 = vld [vmem:[%s2 + $0x8] sm:$0xff]
  %v505 = vld [vmem:[%s2 + $0x10] sm:$0xff]
  %v506 = vld [vmem:[%s2 + $0x18] sm:$0xff]
  %v507 = vld [vmem:[%s2 + $0x20] sm:$0xff]
  %v508 = vld [vmem:[%s2 + $0x28] sm:$0xff]
  %v509 = vld [vmem:[%s2 + $0x30] sm:$0xff]
  %511 = vset.pattern.permute.xlu0 0
  %512 = vperm.xlu0 %511, %v503
  %v513 = vpop.permute.xlu0 %512
  %516 = vset.pattern.permute.xlu0 0
  %517 = vperm.xlu0 %516, %v504
  %v518 = vpop.permute.xlu0 %517
  %521 = vset.pattern.permute.xlu0 0
  %522 = vperm.xlu0 %521, %v505
  %v523 = vpop.permute.xlu0 %522
  %526 = vset.pattern.permute.xlu0 0
  %527 = vperm.xlu0 %526, %v506
  %v528 = vpop.permute.xlu0 %527
  %531 = vset.pattern.permute.xlu0 0
  %532 = vperm.xlu0 %531, %v507
  %v533 = vpop.permute.xlu0 %532
  %536 = vset.pattern.permute.xlu0 0
  %537 = vperm.xlu0 %536, %v508
  %v538 = vpop.permute.xlu0 %537
  %541 = vset.pattern.permute.xlu0 0
  %542 = vperm.xlu0 %541, %v509
  %v543 = vpop.permute.xlu0 %542
  %v545 = vmul.f32 %v496, %v513
  %v546 = vmul.f32 %v497, %v518
  %v547 = vmul.f32 %v498, %v523
  %v548 = vmul.f32 %v499, %v528
  %v549 = vmul.f32 %v500, %v533
  %v550 = vmul.f32 %v501, %v538
  %v551 = vmul.f32 %v502, %v543
  %vm552 = vcmask 261120
  %v553 = vsel %vm552, %v545, 0.0
  %v554 = vsel %vm552, %v546, 0.0
  %v555 = vadd.f32 %v553, %v554
  %v556 = vsel %vm552, %v547, 0.0
  %v557 = vadd.f32 %v555, %v556
  %v558 = vsel %vm552, %v548, 0.0
  %v559 = vadd.f32 %v557, %v558
  %v560 = vsel %vm552, %v549, 0.0
  %v561 = vadd.f32 %v559, %v560
  %v562 = vsel %vm552, %v550, 0.0
  %v563 = vadd.f32 %v561, %v562
  %v564 = vsel %vm552, %v551, 0.0
  %v565 = vadd.f32 %v563, %v564
  %v566 = vrot.slane %v565, 4
  %v567 = vadd.f32 %v565, %v566
  %v568 = vrot.slane %v567, 2
  %v569 = vadd.f32 %v567, %v568
  %v570 = vrot.slane %v569, 1
  %v571 = vadd.f32 %v569, %v570
  %v572 = vmul.f32 %v545, %v496
  %v573 = vmul.f32 %v546, %v497
  %v574 = vmul.f32 %v547, %v498
  %v575 = vmul.f32 %v548, %v499
  %v576 = vmul.f32 %v549, %v500
  %v577 = vmul.f32 %v550, %v501
  %v578 = vmul.f32 %v551, %v502
  %v579 = vsel %vm552, %v572, 0.0
  %v580 = vsel %vm552, %v573, 0.0
  %v581 = vadd.f32 %v579, %v580
  %v582 = vsel %vm552, %v574, 0.0
  %v583 = vadd.f32 %v581, %v582
  %v584 = vsel %vm552, %v575, 0.0
  %v585 = vadd.f32 %v583, %v584
  %v586 = vsel %vm552, %v576, 0.0
  %v587 = vadd.f32 %v585, %v586
  %v588 = vsel %vm552, %v577, 0.0
  %v589 = vadd.f32 %v587, %v588
  %v590 = vsel %vm552, %v578, 0.0
  %v591 = vadd.f32 %v589, %v590
  %v592 = vrot.slane %v591, 4
  %v593 = vadd.f32 %v591, %v592
  %v594 = vrot.slane %v593, 2
  %v595 = vadd.f32 %v593, %v594
  %v596 = vrot.slane %v595, 1
  %v597 = vadd.f32 %v595, %v596
  %vm598 = vcmask 1040384
  %v599 = vsel %vm598, %v571, 0.0
  %600 = vst.msk [vmem:[%s3] sm:$0xff] %vm552, %v599
  %v601 = vsel %vm598, %v597, 0.0
  %602 = vst.msk [vmem:[%s4] sm:$0xff] %vm552, %v601
  // Predicated region
  $region14: #{patch_embed_forward.6} parent=0 // pred_check
    _
  $region15: #{patch_embed_forward.6} parent=0 // pred_check_branch
    %604 = sbr.rel (0) target = $region17
  $region16: #{patch_embed_forward.6} parent=0 // pred_region
    _
  $region17: #{patch_embed_forward.6} parent=0 // pred_fallthru
    _
  // Predicated region
  $region18: #{patch_embed_forward.6} parent=0 // pred_check
    _
  $region19: #{patch_embed_forward.6} parent=0 // pred_check_branch
    %606 = sbr.rel (0) target = $region21
  $region20: #{patch_embed_forward.6} parent=0 // pred_region
    _
  $region21: #{patch_embed_forward.6} parent=0 // pred_fallthru
    _
  // Predicated region
  $region22: #{patch_embed_forward.6} parent=0 // pred_check
    _
  $region23: #{patch_embed_forward.6} parent=0 // pred_check_branch
    %608 = sbr.rel (0) target = $region25
  $region24: #{patch_embed_forward.6} parent=0 // pred_region
    _
  $region25: #{patch_embed_forward.6} parent=0 // pred_fallthru
    _
  // Predicated region
  $region26: #{patch_embed_forward.6} parent=0 // pred_check
    _
  $region27: #{patch_embed_forward.6} parent=0 // pred_check_branch
    %610 = sbr.rel (0) target = $region29
  $region28: #{patch_embed_forward.6} parent=0 // pred_region
    _
  $region29: #{patch_embed_forward.6} parent=0 // pred_fallthru
    _

// kernel: patch_embed_forward.7
$region0: #{patch_embed_forward.7}
  #allocation0 [shape = 'u32[]', space=smem, size = 0x4, offset = 0x4, fixed_abs, tag = 'smem constant byte address 0x4 - core index']
  #allocation1 [shape = 'u32[144,128]{1,0:T(1,128)}', space=vmem, size = 0x12000, scoped, tag = 'internal scratch']
  %s0 = inlined_call_operand.vmem [shape: bf16[56,64], index: 0, kind: input, shape index: {}]
  %s1 = inlined_call_operand.vmem [shape: bf16[4,64,32], index: 1, kind: input, shape index: {}]
  %s2 = inlined_call_operand.vmem [shape: f32[1,32], index: 2, kind: input, shape index: {}]
  %s3 = inlined_call_operand.vmem [shape: f32[1,32], index: 3, kind: input, shape index: {}]
  %s4 = inlined_call_operand.vmem [shape: f32[56,32], index: 4, kind: output, shape index: {}]
  %s5 = sld [smem:[#allocation0]]
  $region26: #{patch_embed_forward.7} parent=0
    _
  %s7 = ssub.s32 1, %s5
  %s8 = scalar_select 0, %s7, %s5
  // Predicated region
  $region2: #{patch_embed_forward.7} parent=0 // pred_check
    _
  $region3: #{patch_embed_forward.7} parent=0 // pred_check_branch
    %10 = sbr.rel (0) target = $region5
  $region4: #{patch_embed_forward.7} parent=0 // pred_region
    _
  $region5: #{patch_embed_forward.7} parent=0 // pred_fallthru
    _
  // Predicated region
  $region6: #{patch_embed_forward.7} parent=0 // pred_check
    _
  $region7: #{patch_embed_forward.7} parent=0 // pred_check_branch
    %12 = sbr.rel (0) target = $region9
  $region8: #{patch_embed_forward.7} parent=0 // pred_region
    _
  $region9: #{patch_embed_forward.7} parent=0 // pred_fallthru
    _
  // Predicated region
  $region10: #{patch_embed_forward.7} parent=0 // pred_check
    _
  $region11: #{patch_embed_forward.7} parent=0 // pred_check_branch
    %14 = sbr.rel (0) target = $region13
  $region12: #{patch_embed_forward.7} parent=0 // pred_region
    _
  $region13: #{patch_embed_forward.7} parent=0 // pred_fallthru
    _
  // Predicated region
  $region14: #{patch_embed_forward.7} parent=0 // pred_check
    _
  $region15: #{patch_embed_forward.7} parent=0 // pred_check_branch
    %16 = sbr.rel (0) target = $region17
  $region16: #{patch_embed_forward.7} parent=0 // pred_region
    _
  $region17: #{patch_embed_forward.7} parent=0 // pred_fallthru
    _
  %v18 = vld [vmem:[%s0] sm:$0xf]
  %v19 = vld [vmem:[%s0 + $0x4] sm:$0xf]
  %v20 = vld [vmem:[%s0 + $0x8] sm:$0xf]
  %v21 = vld [vmem:[%s0 + $0xc] sm:$0xf]
  %v22 = vld [vmem:[%s0 + $0x10] sm:$0xf]
  %v23 = vld [vmem:[%s0 + $0x14] sm:$0xf]
  %v24 = vld [vmem:[%s0 + $0x18] sm:$0xf]
  %v25 = vld [vmem:[%s1] sm:$0xf]
  %v26 = vld [vmem:[%s1 + $0x4] sm:$0xf]
  %v27 = vld [vmem:[%s1 + $0x8] sm:$0xf]
  %v28 = vld [vmem:[%s1 + $0xc] sm:$0xf]
  %v29 = vld [vmem:[%s1 + $0x10] sm:$0xf]
  %v30 = vld [vmem:[%s1 + $0x14] sm:$0xf]
  %v31 = vld [vmem:[%s1 + $0x18] sm:$0xf]
  %v32 = vld [vmem:[%s1 + $0x1c] sm:$0xf]
  %s33 = scalar_lea.vmem %s1, 32
  %v34 = vld [vmem:[%s33] sm:$0xf]
  %v35 = vld [vmem:[%s33 + $0x4] sm:$0xf]
  %v36 = vld [vmem:[%s33 + $0x8] sm:$0xf]
  %v37 = vld [vmem:[%s33 + $0xc] sm:$0xf]
  %v38 = vld [vmem:[%s33 + $0x10] sm:$0xf]
  %v39 = vld [vmem:[%s33 + $0x14] sm:$0xf]
  %v40 = vld [vmem:[%s33 + $0x18] sm:$0xf]
  %v41 = vld [vmem:[%s33 + $0x1c] sm:$0xf]
  %v49 = vunpack.c.l.b16 %v18
  %v50 = vunpack.c.l.b16 %v19
  %v51 = vunpack.c.l.b16 %v20
  %v52 = vunpack.c.l.b16 %v21
  %v53 = vunpack.c.l.b16 %v22
  %v54 = vunpack.c.l.b16 %v23
  %v55 = vunpack.c.l.b16 %v24
  %v56 = vpack.c.b16 %v50, %v49
  %v57 = vpack.c.b16 %v52, %v51
  %v58 = vpack.c.b16 %v54, %v53
  %v59 = vpack.c.b16 %v55, %v55
  %v68 = vunpack.c.l.b16 %v34
  %v69 = vunpack.c.l.b16 %v35
  %v70 = vunpack.c.l.b16 %v36
  %v71 = vunpack.c.l.b16 %v37
  %v72 = vunpack.c.l.b16 %v38
  %v73 = vunpack.c.l.b16 %v39
  %v74 = vunpack.c.l.b16 %v40
  %v75 = vunpack.c.l.b16 %v41
  %v76 = vpack.c.b16 %v69, %v68
  %v77 = vpack.c.b16 %v71, %v70
  %v78 = vpack.c.b16 %v73, %v72
  %v79 = vpack.c.b16 %v75, %v74
  %vm84 = vcmask 523264
  %v86 = vsel %vm84, %v56, 0
  %v89 = vsel %vm84, %v57, 0
  %v92 = vsel %vm84, %v58, 0
  %v95 = vsel %vm84, %v59, 0
  %97 = vmatprep.subr.bf16.mxu0 0
  %98 = vmatpush1.bf16.msra.mxu0 %v76
  %99 = vmatprep.subr.bf16.mxu0 0
  %100 = vmatpush1.bf16.msra.mxu0 %v77
  %101 = vmatprep.subr.bf16.mxu0 0
  %102 = vmatpush1.bf16.msra.mxu0 %v78
  %103 = vmatprep.subr.bf16.mxu0 0
  %104 = vmatpush1.bf16.msra.mxu0 %v79
  %105 = vmatprep.subr.bf16.mxu0 0
  %106 = vmatpush1.bf16.msra.mxu0 0
  %107 = vmatprep.subr.bf16.mxu0 0
  %108 = vmatpush1.bf16.msra.mxu0 0
  %109 = vmatprep.subr.bf16.mxu0 0
  %110 = vmatpush1.bf16.msra.mxu0 0
  %111 = vmatprep.subr.bf16.mxu0 0
  %112 = vmatpush1.bf16.msra.mxu0 0
  %113 = vmatprep.subr.bf16.mxu0 0
  %114 = vmatpush1.bf16.msra.mxu0 0
  %115 = vmatprep.subr.bf16.mxu0 0
  %116 = vmatpush1.bf16.msra.mxu0 0
  %117 = vmatprep.subr.bf16.mxu0 0
  %118 = vmatpush1.bf16.msra.mxu0 0
  %119 = vmatprep.subr.bf16.mxu0 0
  %120 = vmatpush1.bf16.msra.mxu0 0
  %121 = vmatprep.subr.bf16.mxu0 0
  %122 = vmatpush1.bf16.msra.mxu0 0
  %123 = vmatprep.subr.bf16.mxu0 0
  %124 = vmatpush1.bf16.msra.mxu0 0
  %125 = vmatprep.subr.bf16.mxu0 0
  %126 = vmatpush1.bf16.msra.mxu0 0
  %127 = vmatprep.subr.bf16.mxu0 0
  %128 = vmatpush1.bf16.msra.mxu0 0
  %129 = vmatprep.mubr.bf16.mxu0 0
  %130 = vmatmul.mubr.bf16.gmra.mrb[0].mxu0 %v86
  %v131 = vpop.f32.mrb[0].mxu0
  %v132 = vadd.f32 0.0, %v131
  %v133 = vpop.f32.mrb[0].mxu0
  %v134 = vpop.f32.mrb[0].mxu0
  %v135 = vadd.f32 0.0, %v134
  %v136 = vpop.f32.mrb[0].mxu0
  %137 = vmatprep.mubr.bf16.mxu0 0
  %138 = vmatmul.mubr.bf16.gmra.mrb[0].mxu0 %v89
  %v139 = vpop.f32.mrb[0].mxu0
  %v140 = vadd.f32 0.0, %v139
  %v141 = vpop.f32.mrb[0].mxu0
  %v142 = vpop.f32.mrb[0].mxu0
  %v143 = vadd.f32 0.0, %v142
  %v144 = vpop.f32.mrb[0].mxu0
  %145 = vmatprep.mubr.bf16.mxu0 0
  %146 = vmatmul.mubr.bf16.gmra.mrb[0].mxu0 %v92
  %v147 = vpop.f32.mrb[0].mxu0
  %v148 = vadd.f32 0.0, %v147
  %v149 = vpop.f32.mrb[0].mxu0
  %v150 = vpop.f32.mrb[0].mxu0
  %v151 = vadd.f32 0.0, %v150
  %v152 = vpop.f32.mrb[0].mxu0
  %153 = vmatprep.mubr.bf16.mxu0 0
  %154 = vmatmul.mubr.bf16.gmra.mrb[0].mxu0 %v95
  %v155 = vpop.f32.mrb[0].mxu0
  %v156 = vadd.f32 0.0, %v155
  %v157 = vpop.f32.mrb[0].mxu0
  %v158 = vpop.f32.mrb[0].mxu0
  %v159 = vpop.f32.mrb[0].mxu0
  %160 = vdwg.mxu0
  %v161 = vrot.slane %v132, 1
  %v162 = vrot.slane %v135, 1
  %v163 = vrot.slane %v140, 1
  %v164 = vrot.slane %v143, 1
  %v165 = vrot.slane %v148, 1
  %v166 = vrot.slane %v151, 1
  %v167 = vrot.slane %v156, 1
  %v168 = vlaneseq
  %v169 = vshrl.u32 %v168, 7
  %vm170 = vcmp.lt.s32.totalorder %v169, 7
  %v171 = vsel %vm170, %v166, %v167
  %v172 = vsel %vm170, %v165, %v166
  %v173 = vsel %vm170, %v164, %v165
  %v174 = vsel %vm170, %v163, %v164
  %v175 = vsel %vm170, %v162, %v163
  %v176 = vsel %vm170, %v161, %v162
  %v177 = vsel %vm170, %v167, %v161
  %v186 = vunpack.c.l.b16 %v25
  %v187 = vunpack.c.l.b16 %v26
  %v188 = vunpack.c.l.b16 %v27
  %v189 = vunpack.c.l.b16 %v28
  %v190 = vunpack.c.l.b16 %v29
  %v191 = vunpack.c.l.b16 %v30
  %v192 = vunpack.c.l.b16 %v31
  %v193 = vunpack.c.l.b16 %v32
  %v194 = vpack.c.b16 %v187, %v186
  %v195 = vpack.c.b16 %v189, %v188
  %v196 = vpack.c.b16 %v191, %v190
  %v197 = vpack.c.b16 %v193, %v192
  %202 = vmatprep.subr.bf16.mxu0 0
  %203 = vmatpush1.bf16.msra.mxu0 %v194
  %204 = vmatprep.subr.bf16.mxu0 0
  %205 = vmatpush1.bf16.msra.mxu0 %v195
  %206 = vmatprep.subr.bf16.mxu0 0
  %207 = vmatpush1.bf16.msra.mxu0 %v196
  %208 = vmatprep.subr.bf16.mxu0 0
  %209 = vmatpush1.bf16.msra.mxu0 %v197
  %210 = vmatprep.subr.bf16.mxu0 0
  %211 = vmatpush1.bf16.msra.mxu0 0
  %212 = vmatprep.subr.bf16.mxu0 0
  %213 = vmatpush1.bf16.msra.mxu0 0
  %214 = vmatprep.subr.bf16.mxu0 0
  %215 = vmatpush1.bf16.msra.mxu0 0
  %216 = vmatprep.subr.bf16.mxu0 0
  %217 = vmatpush1.bf16.msra.mxu0 0
  %218 = vmatprep.subr.bf16.mxu0 0
  %219 = vmatpush1.bf16.msra.mxu0 0
  %220 = vmatprep.subr.bf16.mxu0 0
  %221 = vmatpush1.bf16.msra.mxu0 0
  %222 = vmatprep.subr.bf16.mxu0 0
  %223 = vmatpush1.bf16.msra.mxu0 0
  %224 = vmatprep.subr.bf16.mxu0 0
  %225 = vmatpush1.bf16.msra.mxu0 0
  %226 = vmatprep.subr.bf16.mxu0 0
  %227 = vmatpush1.bf16.msra.mxu0 0
  %228 = vmatprep.subr.bf16.mxu0 0
  %229 = vmatpush1.bf16.msra.mxu0 0
  %230 = vmatprep.subr.bf16.mxu0 0
  %231 = vmatpush1.bf16.msra.mxu0 0
  %232 = vmatprep.subr.bf16.mxu0 0
  %233 = vmatpush1.bf16.msra.mxu0 0
  %234 = vmatprep.mubr.bf16.mxu0 0
  %235 = vmatmul.mubr.bf16.gmra.mrb[0].mxu0 %v86
  %v236 = vpop.f32.mrb[0].mxu0
  %v237 = vadd.f32 %v176, %v236
  %v238 = vpop.f32.mrb[0].mxu0
  %v239 = vpop.f32.mrb[0].mxu0
  %v240 = vadd.f32 %v175, %v239
  %v241 = vpop.f32.mrb[0].mxu0
  %242 = vmatprep.mubr.bf16.mxu0 0
  %243 = vmatmul.mubr.bf16.gmra.mrb[0].mxu0 %v89
  %v244 = vpop.f32.mrb[0].mxu0
  %v245 = vadd.f32 %v174, %v244
  %v246 = vpop.f32.mrb[0].mxu0
  %v247 = vpop.f32.mrb[0].mxu0
  %v248 = vadd.f32 %v173, %v247
  %v249 = vpop.f32.mrb[0].mxu0
  %250 = vmatprep.mubr.bf16.mxu0 0
  %251 = vmatmul.mubr.bf16.gmra.mrb[0].mxu0 %v92
  %v252 = vpop.f32.mrb[0].mxu0
  %v253 = vadd.f32 %v172, %v252
  %v254 = vpop.f32.mrb[0].mxu0
  %v255 = vpop.f32.mrb[0].mxu0
  %v256 = vadd.f32 %v171, %v255
  %v257 = vpop.f32.mrb[0].mxu0
  %258 = vmatprep.mubr.bf16.mxu0 0
  %259 = vmatmul.mubr.bf16.gmra.mrb[0].mxu0 %v95
  %v260 = vpop.f32.mrb[0].mxu0
  %v261 = vadd.f32 %v177, %v260
  %v262 = vpop.f32.mrb[0].mxu0
  %v263 = vpop.f32.mrb[0].mxu0
  %v264 = vpop.f32.mrb[0].mxu0
  %265 = vdwg.mxu0
  %s266 = scalar_lea.vmem %s1, 64
  %v267 = vld [vmem:[%s266] sm:$0xf]
  %v268 = vld [vmem:[%s266 + $0x4] sm:$0xf]
  %v269 = vld [vmem:[%s266 + $0x8] sm:$0xf]
  %v270 = vld [vmem:[%s266 + $0xc] sm:$0xf]
  %v271 = vld [vmem:[%s266 + $0x10] sm:$0xf]
  %v272 = vld [vmem:[%s266 + $0x14] sm:$0xf]
  %v273 = vld [vmem:[%s266 + $0x18] sm:$0xf]
  %v274 = vld [vmem:[%s266 + $0x1c] sm:$0xf]
  %v283 = vunpack.c.l.b16 %v267
  %v284 = vunpack.c.l.b16 %v268
  %v285 = vunpack.c.l.b16 %v269
  %v286 = vunpack.c.l.b16 %v270
  %v287 = vunpack.c.l.b16 %v271
  %v288 = vunpack.c.l.b16 %v272
  %v289 = vunpack.c.l.b16 %v273
  %v290 = vunpack.c.l.b16 %v274
  %v291 = vpack.c.b16 %v284, %v283
  %v292 = vpack.c.b16 %v286, %v285
  %v293 = vpack.c.b16 %v288, %v287
  %v294 = vpack.c.b16 %v290, %v289
  %299 = vmatprep.subr.bf16.mxu0 0
  %300 = vmatpush1.bf16.msra.mxu0 %v291
  %301 = vmatprep.subr.bf16.mxu0 0
  %302 = vmatpush1.bf16.msra.mxu0 %v292
  %303 = vmatprep.subr.bf16.mxu0 0
  %304 = vmatpush1.bf16.msra.mxu0 %v293
  %305 = vmatprep.subr.bf16.mxu0 0
  %306 = vmatpush1.bf16.msra.mxu0 %v294
  %307 = vmatprep.subr.bf16.mxu0 0
  %308 = vmatpush1.bf16.msra.mxu0 0
  %309 = vmatprep.subr.bf16.mxu0 0
  %310 = vmatpush1.bf16.msra.mxu0 0
  %311 = vmatprep.subr.bf16.mxu0 0
  %312 = vmatpush1.bf16.msra.mxu0 0
  %313 = vmatprep.subr.bf16.mxu0 0
  %314 = vmatpush1.bf16.msra.mxu0 0
  %315 = vmatprep.subr.bf16.mxu0 0
  %316 = vmatpush1.bf16.msra.mxu0 0
  %317 = vmatprep.subr.bf16.mxu0 0
  %318 = vmatpush1.bf16.msra.mxu0 0
  %319 = vmatprep.subr.bf16.mxu0 0
  %320 = vmatpush1.bf16.msra.mxu0 0
  %321 = vmatprep.subr.bf16.mxu0 0
  %322 = vmatpush1.bf16.msra.mxu0 0
  %323 = vmatprep.subr.bf16.mxu0 0
  %324 = vmatpush1.bf16.msra.mxu0 0
  %325 = vmatprep.subr.bf16.mxu0 0
  %326 = vmatpush1.bf16.msra.mxu0 0
  %327 = vmatprep.subr.bf16.mxu0 0
  %328 = vmatpush1.bf16.msra.mxu0 0
  %329 = vmatprep.subr.bf16.mxu0 0
  %330 = vmatpush1.bf16.msra.mxu0 0
  %331 = vmatprep.mubr.bf16.mxu0 0
  %332 = vmatmul.mubr.bf16.gmra.mrb[0].mxu0 %v86
  %v333 = vpop.f32.mrb[0].mxu0
  %v334 = vadd.f32 0.0, %v333
  %v335 = vpop.f32.mrb[0].mxu0
  %v336 = vpop.f32.mrb[0].mxu0
  %v337 = vadd.f32 0.0, %v336
  %v338 = vpop.f32.mrb[0].mxu0
  %339 = vmatprep.mubr.bf16.mxu0 0
  %340 = vmatmul.mubr.bf16.gmra.mrb[0].mxu0 %v89
  %v341 = vpop.f32.mrb[0].mxu0
  %v342 = vadd.f32 0.0, %v341
  %v343 = vpop.f32.mrb[0].mxu0
  %v344 = vpop.f32.mrb[0].mxu0
  %v345 = vadd.f32 0.0, %v344
  %v346 = vpop.f32.mrb[0].mxu0
  %347 = vmatprep.mubr.bf16.mxu0 0
  %348 = vmatmul.mubr.bf16.gmra.mrb[0].mxu0 %v92
  %v349 = vpop.f32.mrb[0].mxu0
  %v350 = vadd.f32 0.0, %v349
  %v351 = vpop.f32.mrb[0].mxu0
  %v352 = vpop.f32.mrb[0].mxu0
  %v353 = vadd.f32 0.0, %v352
  %v354 = vpop.f32.mrb[0].mxu0
  %355 = vmatprep.mubr.bf16.mxu0 0
  %356 = vmatmul.mubr.bf16.gmra.mrb[0].mxu0 %v95
  %v357 = vpop.f32.mrb[0].mxu0
  %v358 = vadd.f32 0.0, %v357
  %v359 = vpop.f32.mrb[0].mxu0
  %v360 = vpop.f32.mrb[0].mxu0
  %v361 = vpop.f32.mrb[0].mxu0
  %362 = vdwg.mxu0
  %v363 = vrot.slane %v334, 5
  %v364 = vrot.slane %v337, 5
  %v365 = vrot.slane %v342, 5
  %v366 = vrot.slane %v345, 5
  %v367 = vrot.slane %v350, 5
  %v368 = vrot.slane %v353, 5
  %v369 = vrot.slane %v358, 5
  %vm370 = vcmp.lt.s32.totalorder %v169, 3
  %v371 = vsel %vm370, %v368, %v369
  %v372 = vsel %vm370, %v367, %v368
  %v373 = vsel %vm370, %v366, %v367
  %v374 = vsel %vm370, %v365, %v366
  %v375 = vsel %vm370, %v364, %v365
  %v376 = vsel %vm370, %v363, %v364
  %v377 = vsel %vm370, %v369, %v363
  %v378 = vadd.f32 %v237, %v376
  %v379 = vadd.f32 %v240, %v375
  %v380 = vadd.f32 %v245, %v374
  %v381 = vadd.f32 %v248, %v373
  %v382 = vadd.f32 %v253, %v372
  %v383 = vadd.f32 %v256, %v371
  %v384 = vadd.f32 %v261, %v377
  %s385 = scalar_lea.vmem %s1, 96
  %v386 = vld [vmem:[%s385] sm:$0xf]
  %v387 = vld [vmem:[%s385 + $0x4] sm:$0xf]
  %v388 = vld [vmem:[%s385 + $0x8] sm:$0xf]
  %v389 = vld [vmem:[%s385 + $0xc] sm:$0xf]
  %v390 = vld [vmem:[%s385 + $0x10] sm:$0xf]
  %v391 = vld [vmem:[%s385 + $0x14] sm:$0xf]
  %v392 = vld [vmem:[%s385 + $0x18] sm:$0xf]
  %v393 = vld [vmem:[%s385 + $0x1c] sm:$0xf]
  %v402 = vunpack.c.l.b16 %v386
  %v403 = vunpack.c.l.b16 %v387
  %v404 = vunpack.c.l.b16 %v388
  %v405 = vunpack.c.l.b16 %v389
  %v406 = vunpack.c.l.b16 %v390
  %v407 = vunpack.c.l.b16 %v391
  %v408 = vunpack.c.l.b16 %v392
  %v409 = vunpack.c.l.b16 %v393
  %v410 = vpack.c.b16 %v403, %v402
  %v411 = vpack.c.b16 %v405, %v404
  %v412 = vpack.c.b16 %v407, %v406
  %v413 = vpack.c.b16 %v409, %v408
  %418 = vmatprep.subr.bf16.mxu0 0
  %419 = vmatpush1.bf16.msra.mxu0 %v410
  %420 = vmatprep.subr.bf16.mxu0 0
  %421 = vmatpush1.bf16.msra.mxu0 %v411
  %422 = vmatprep.subr.bf16.mxu0 0
  %423 = vmatpush1.bf16.msra.mxu0 %v412
  %424 = vmatprep.subr.bf16.mxu0 0
  %425 = vmatpush1.bf16.msra.mxu0 %v413
  %426 = vmatprep.subr.bf16.mxu0 0
  %427 = vmatpush1.bf16.msra.mxu0 0
  %428 = vmatprep.subr.bf16.mxu0 0
  %429 = vmatpush1.bf16.msra.mxu0 0
  %430 = vmatprep.subr.bf16.mxu0 0
  %431 = vmatpush1.bf16.msra.mxu0 0
  %432 = vmatprep.subr.bf16.mxu0 0
  %433 = vmatpush1.bf16.msra.mxu0 0
  %434 = vmatprep.subr.bf16.mxu0 0
  %435 = vmatpush1.bf16.msra.mxu0 0
  %436 = vmatprep.subr.bf16.mxu0 0
  %437 = vmatpush1.bf16.msra.mxu0 0
  %438 = vmatprep.subr.bf16.mxu0 0
  %439 = vmatpush1.bf16.msra.mxu0 0
  %440 = vmatprep.subr.bf16.mxu0 0
  %441 = vmatpush1.bf16.msra.mxu0 0
  %442 = vmatprep.subr.bf16.mxu0 0
  %443 = vmatpush1.bf16.msra.mxu0 0
  %444 = vmatprep.subr.bf16.mxu0 0
  %445 = vmatpush1.bf16.msra.mxu0 0
  %446 = vmatprep.subr.bf16.mxu0 0
  %447 = vmatpush1.bf16.msra.mxu0 0
  %448 = vmatprep.subr.bf16.mxu0 0
  %449 = vmatpush1.bf16.msra.mxu0 0
  %450 = vmatprep.mubr.bf16.mxu0 0
  %451 = vmatmul.mubr.bf16.gmra.mrb[0].mxu0 %v86
  %v452 = vpop.f32.mrb[0].mxu0
  %v453 = vadd.f32 0.0, %v452
  %v454 = vpop.f32.mrb[0].mxu0
  %v455 = vpop.f32.mrb[0].mxu0
  %v456 = vadd.f32 0.0, %v455
  %v457 = vpop.f32.mrb[0].mxu0
  %458 = vmatprep.mubr.bf16.mxu0 0
  %459 = vmatmul.mubr.bf16.gmra.mrb[0].mxu0 %v89
  %v460 = vpop.f32.mrb[0].mxu0
  %v461 = vadd.f32 0.0, %v460
  %v462 = vpop.f32.mrb[0].mxu0
  %v463 = vpop.f32.mrb[0].mxu0
  %v464 = vadd.f32 0.0, %v463
  %v465 = vpop.f32.mrb[0].mxu0
  %466 = vmatprep.mubr.bf16.mxu0 0
  %467 = vmatmul.mubr.bf16.gmra.mrb[0].mxu0 %v92
  %v468 = vpop.f32.mrb[0].mxu0
  %v469 = vadd.f32 0.0, %v468
  %v470 = vpop.f32.mrb[0].mxu0
  %v471 = vpop.f32.mrb[0].mxu0
  %v472 = vadd.f32 0.0, %v471
  %v473 = vpop.f32.mrb[0].mxu0
  %474 = vmatprep.mubr.bf16.mxu0 0
  %475 = vmatmul.mubr.bf16.gmra.mrb[0].mxu0 %v95
  %v476 = vpop.f32.mrb[0].mxu0
  %v477 = vadd.f32 0.0, %v476
  %v478 = vpop.f32.mrb[0].mxu0
  %v479 = vpop.f32.mrb[0].mxu0
  %v480 = vpop.f32.mrb[0].mxu0
  %481 = vdwg.mxu0
  %v482 = vrot.slane %v453, 6
  %v483 = vrot.slane %v456, 6
  %v484 = vrot.slane %v461, 6
  %v485 = vrot.slane %v464, 6
  %v486 = vrot.slane %v469, 6
  %v487 = vrot.slane %v472, 6
  %v488 = vrot.slane %v477, 6
  %vm489 = vcmp.lt.s32.totalorder %v169, 2
  %v490 = vsel %vm489, %v487, %v488
  %v491 = vsel %vm489, %v486, %v487
  %v492 = vsel %vm489, %v485, %v486
  %v493 = vsel %vm489, %v484, %v485
  %v494 = vsel %vm489, %v483, %v484
  %v495 = vsel %vm489, %v482, %v483
  %v496 = vsel %vm489, %v488, %v482
  %v497 = vadd.f32 %v378, %v495
  %v498 = vadd.f32 %v379, %v494
  %v499 = vadd.f32 %v380, %v493
  %v500 = vadd.f32 %v381, %v492
  %v501 = vadd.f32 %v382, %v491
  %v502 = vadd.f32 %v383, %v490
  %v503 = vadd.f32 %v384, %v496
  %v504 = vld [vmem:[%s2] sm:$0x1]
  %v506 = vlaneseq
  %v507 = vshrl.u32 %v506, 7
  %v508 = vsub.s32 0, %v507
  %v509 = vrot.slane %v504, %v508
  %v511 = vmul.f32 %v497, %v509
  %v512 = vmul.f32 %v498, %v509
  %v513 = vmul.f32 %v499, %v509
  %v514 = vmul.f32 %v500, %v509
  %v515 = vmul.f32 %v501, %v509
  %v516 = vmul.f32 %v502, %v509
  %v517 = vmul.f32 %v503, %v509
  %v518 = vld [vmem:[%s3] sm:$0x1]
  %v520 = vlaneseq
  %v521 = vshrl.u32 %v520, 7
  %v522 = vsub.s32 0, %v521
  %v523 = vrot.slane %v518, %v522
  %v525 = vadd.f32 %v511, %v523
  %v526 = vadd.f32 %v512, %v523
  %v527 = vadd.f32 %v513, %v523
  %v528 = vadd.f32 %v514, %v523
  %v529 = vadd.f32 %v515, %v523
  %v530 = vadd.f32 %v516, %v523
  %v531 = vadd.f32 %v517, %v523
  %v532 = vmul.f32 %v525, 0.5
  %v533 = vmul.f32 %v526, 0.5
  %v534 = vmul.f32 %v527, 0.5
  %v535 = vmul.f32 %v528, 0.5
  %v536 = vmul.f32 %v529, 0.5
  %v537 = vmul.f32 %v530, 0.5
  %v538 = vmul.f32 %v531, 0.5
  %v539 = vmul.f32 %v525, 0.70710677
  %v540 = vmul.f32 %v526, 0.70710677
  %v541 = vmul.f32 %v527, 0.70710677
  %v542 = vmul.f32 %v528, 0.70710677
  %v543 = vmul.f32 %v529, 0.70710677
  %v544 = vmul.f32 %v530, 0.70710677
  %v545 = vmul.f32 %v531, 0.70710677
  %v546 = verf.f32.pop %v539
  %v547 = verf.f32.pop %v540
  %v548 = verf.f32.pop %v541
  %v549 = verf.f32.pop %v542
  %v550 = verf.f32.pop %v543
  %v551 = verf.f32.pop %v544
  %v552 = verf.f32.pop %v545
  %v553 = vadd.f32 %v546, 1.0
  %v554 = vadd.f32 %v547, 1.0
  %v555 = vadd.f32 %v548, 1.0
  %v556 = vadd.f32 %v549, 1.0
  %v557 = vadd.f32 %v550, 1.0
  %v558 = vadd.f32 %v551, 1.0
  %v559 = vadd.f32 %v552, 1.0
  %v560 = vmul.f32 %v532, %v553
  %v561 = vmul.f32 %v533, %v554
  %v562 = vmul.f32 %v534, %v555
  %v563 = vmul.f32 %v535, %v556
  %v564 = vmul.f32 %v536, %v557
  %v565 = vmul.f32 %v537, %v558
  %v566 = vmul.f32 %v538, %v559
  %vm567 = vcmask 261120
  %568 = vst.msk [vmem:[%s4] sm:$0xff] %vm567, %v560
  %569 = vst.msk [vmem:[%s4 + $0x8] sm:$0xff] %vm567, %v561
  %570 = vst.msk [vmem:[%s4 + $0x10] sm:$0xff] %vm567, %v562
  %571 = vst.msk [vmem:[%s4 + $0x18] sm:$0xff] %vm567, %v563
  %572 = vst.msk [vmem:[%s4 + $0x20] sm:$0xff] %vm567, %v564
  %573 = vst.msk [vmem:[%s4 + $0x28] sm:$0xff] %vm567, %v565
  %574 = vst.msk [vmem:[%s4 + $0x30] sm:$0xff] %vm567, %v566
  // Predicated region
  $region18: #{patch_embed_forward.7} parent=0 // pred_check
    _
  $region19: #{patch_embed_forward.7} parent=0 // pred_check_branch
    %576 = sbr.rel (0) target = $region21
  $region20: #{patch_embed_forward.7} parent=0 // pred_region
    _
  $region21: #{patch_embed_forward.7} parent=0 // pred_fallthru
    _
  // Predicated region
  $region22: #{patch_embed_forward.7} parent=0 // pred_check
    _
  $region23: #{patch_embed_forward.7} parent=0 // pred_check_branch
    %578 = sbr.rel (0) target = $region25
  $region24: #{patch_embed_forward.7} parent=0 // pred_region
    _
  $region25: #{patch_embed_forward.7} parent=0 // pred_fallthru
    _

</llo_original>
